<compile_context>
chip_gen: v6e
topology: v6e:2x2x1
jax: 0.10.0
libtpu: 0.0.40
codegen_flags: <defaults>
</compile_context>

<pallas_src>
import functools
import math

import numpy as np
import jax
import jax.numpy as jnp
from jax.experimental import pallas as pl
from jax.experimental.pallas import tpu as pltpu

LN_EPS = 1e-5        # nn.LayerNorm default (norm1 / norm2)
CPE_LN_EPS = 1e-6    # Conv2d_LN LayerNorm eps


# ----------------------------- in-kernel helpers -----------------------------

def _layernorm(z, g, b, eps):
    mu = jnp.mean(z, axis=-1, keepdims=True)
    var = jnp.mean(jnp.square(z - mu), axis=-1, keepdims=True)
    return (z - mu) * jax.lax.rsqrt(var + eps) * g + b


def _erf(x):
    # Abramowitz & Stegun 7.1.26 rational approximation (max abs err ~1.5e-7), so the exact
    # (erf-based) torch.nn.functional.gelu lowers with plain VPU/EUP ops.
    a1, a2, a3, a4, a5 = 0.254829592, -0.284496736, 1.421413741, -1.453152027, 1.061405429
    pc = 0.3275911
    sgn = jnp.where(x >= 0.0, 1.0, -1.0)
    ax = jnp.abs(x)
    t = 1.0 / (1.0 + pc * ax)
    poly = ((((a5 * t + a4) * t + a3) * t + a2) * t + a1) * t
    return sgn * (1.0 - poly * jnp.exp(-ax * ax))


def _gelu_exact(x):
    return 0.5 * x * (1.0 + _erf(x * (1.0 / math.sqrt(2.0))))


# --------------------------------- fused kernel -------------------------------

def fused_block_kernel(x_ref, mask_ref, cpe_w_ref, cpe_g_ref, cpe_b_ref,
                       ln1_g_ref, ln1_b_ref, wqkv_ref, bqkv_ref, wp_ref, bp_ref,
                       ln2_g_ref, ln2_b_ref, w1_ref, b1_ref, dww_ref, dwb_ref,
                       w2_ref, b2_ref, o_ref, *, H, W, head, scale):
    N, C = x_ref.shape
    hd = C // head
    Cm = w1_ref.shape[-1]
    f32 = jnp.float32
    bf16 = jnp.bfloat16

    def dwconv3x3(tok, w_ref, bias):
        # 3x3 depthwise conv directly on the (N, Ch) token array (token n = y*W + x):
        # XLU sublane rolls by the 8 neighbour offsets + precomputed f32 boundary masks.
        acc = jnp.zeros(tok.shape, f32) if bias is None else jnp.zeros(tok.shape, f32) + bias
        for dy in (-1, 0, 1):
            for dx in (-1, 0, 1):
                k = (dy + 1) * 3 + (dx + 1)
                d = dy * W + dx
                src = tok if d == 0 else pltpu.roll(tok, shift=(-d) % N, axis=0)
                tap = w_ref[k:k + 1, :]          # (1, Ch)
                m = mask_ref[k]                  # (N, 1) f32 {0,1} boundary validity
                acc = acc + (src * tap) * m
        return acc

    # ---- Stage 1: CPE  x = x + LN_c(dwconv3x3(x))  (conv has no bias, LN eps=1e-6) ----
    x = x_ref[...]                                            # (N, C) f32, token layout
    conv = dwconv3x3(x, cpe_w_ref, None)
    x = x + _layernorm(conv, cpe_g_ref[...], cpe_b_ref[...], CPE_LN_EPS)

    # ---- Stage 2: x = x + Attention(LayerNorm(x)), sr_ratio == 1 ----
    xn = _layernorm(x, ln1_g_ref[...], ln1_b_ref[...], LN_EPS)
    qkv = jnp.dot(xn.astype(bf16), wqkv_ref[...],
                  preferred_element_type=f32) + bqkv_ref[...]  # fused q|k|v: (N, 3C)
    q = (qkv[:, :C] * scale).astype(bf16)     # fold softmax scale into q once
    k = qkv[:, C:2 * C].astype(bf16)
    v = qkv[:, 2 * C:].astype(bf16)

    lane = jax.lax.broadcasted_iota(jnp.int32, (1, C), 1)
    ctx = jnp.zeros((N, C), f32)
    for h in range(head):                     # static unroll, full-width masked heads
        hmask = (lane >= h * hd) & (lane < (h + 1) * hd)       # (1, C) lane mask
        q_h = jnp.where(hmask, q, 0.0)
        v_h = jnp.where(hmask, v, 0.0)
        s = jax.lax.dot_general(q_h, k, (((1,), (1,)), ((), ())),
                                preferred_element_type=f32)     # (N, N), contraction C
        s = s - jnp.max(s, axis=-1, keepdims=True)
        e = jnp.exp(s)
        r = pl.reciprocal(jnp.sum(e, axis=-1, keepdims=True), approx=True)
        # disjoint lane ranges across heads -> accumulation == concat along channels
        ctx = ctx + jnp.dot(e.astype(bf16), v_h, preferred_element_type=f32) * r
    x = x + jnp.dot(ctx.astype(bf16), wp_ref[...], preferred_element_type=f32) + bp_ref[...]

    # ---- Stage 3: x = x + MLP(LayerNorm(x));  fc1 -> dwconv3x3 -> GELU -> fc2 ----
    xn2 = _layernorm(x, ln2_g_ref[...], ln2_b_ref[...], LN_EPS)
    h1 = jnp.dot(xn2.astype(bf16), w1_ref[...],
                 preferred_element_type=f32) + b1_ref[...]      # (N, Cm)
    dconv = dwconv3x3(h1, dww_ref, dwb_ref[...])
    g = _gelu_exact(dconv)
    h2 = jnp.dot(g.astype(bf16), w2_ref[...],
                 preferred_element_type=f32) + b2_ref[...]
    o_ref[...] = x + h2


# --------------------------------- wrapper ------------------------------------

def _conv_boundary_masks(H, W):
    # (9, N, 1) f32 validity masks for the 3x3 taps (row-major token order n = y*W + x).
    ys, xs = np.meshgrid(np.arange(H), np.arange(W), indexing="ij")
    ys = ys.reshape(-1)
    xs = xs.reshape(-1)
    masks = []
    for dy in (-1, 0, 1):
        for dx in (-1, 0, 1):
            ok = ((ys + dy >= 0) & (ys + dy < H) & (xs + dx >= 0) & (xs + dx < W))
            masks.append(ok.astype(np.float32).reshape(H * W, 1))
    return jnp.asarray(np.stack(masks, axis=0))


def attn_block_forward(x_nchw, p, head):
    B, C, H, W = x_nchw.shape
    N = H * W
    Cm = p['w1'].shape[-1]
    scale = (C // head) ** -0.5
    bf = lambda a: a.astype(jnp.bfloat16)

    # NCHW -> token-major (B, N, C) (free reshape of contiguous NHWC).
    # TODO(synk): keep activations NHWC/token-major across stacked blocks so this transpose
    #             happens once at the network boundary instead of per block.
    x = jnp.transpose(x_nchw, (0, 2, 3, 1)).reshape(B, N, C).astype(jnp.float32)

    # Fused QKV projection weights (single MXU pass) + bf16 MXU operands (f32 accumulation).
    wqkv = bf(jnp.concatenate([p['wq'], p['wkv']], axis=1))      # (C, 3C)
    bqkv = jnp.concatenate([p['bq'], p['bkv']], axis=1)          # (1, 3C)
    conv_mask = _conv_boundary_masks(H, W)                       # (9, N, 1)

    operands = [
        x, conv_mask,
        p['cpe_w'], p['cpe_g'], p['cpe_b'],
        p['ln1_g'], p['ln1_b'], wqkv, bqkv, bf(p['wproj']), p['bproj'],
        p['ln2_g'], p['ln2_b'],
        bf(p['w1']), p['b1'], p['dw_w'], p['dw_b'], bf(p['w2']), p['b2'],
    ]

    def full(a):
        return pl.BlockSpec(a.shape, lambda b, _nd=a.ndim: (0,) * _nd)

    in_specs = [pl.BlockSpec((None, N, C), lambda b: (b, 0, 0))]
    in_specs += [full(a) for a in operands[1:]]

    # Advisory cost estimate so XLA schedules overlap around the custom call correctly.
    flops = B * (18 * N * C + 18 * N * Cm            # depthwise convs
                 + 2 * N * C * (3 * C)               # fused qkv projection
                 + head * 4 * N * N * C              # qk^T + pv (full-width masked heads)
                 + 2 * N * C * C                     # output projection
                 + 4 * N * C * Cm)                   # fc1 + fc2
    transcendentals = B * (head * N * N + 2 * N * Cm + 8 * N)
    bytes_accessed = int(sum(a.size * a.dtype.itemsize for a in operands)) + B * N * C * 4

    out = pl.pallas_call(
        functools.partial(fused_block_kernel, H=H, W=W, head=head, scale=scale),
        out_shape=jax.ShapeDtypeStruct((B, N, C), jnp.float32),
        grid=(B,),
        in_specs=in_specs,
        out_specs=pl.BlockSpec((None, N, C), lambda b: (b, 0, 0)),
        compiler_params=pltpu.CompilerParams(
            dimension_semantics=("parallel",),
            vmem_limit_bytes=32 * 1024 * 1024),
        cost_estimate=pl.CostEstimate(flops=int(flops),
                                      transcendentals=int(transcendentals),
                                      bytes_accessed=bytes_accessed),
    )(*operands)

    return out.reshape(B, H, W, C).transpose(0, 3, 1, 2)         # back to NCHW


# --------------------------- params & pure-JAX reference ----------------------

def init_params(key, C):
    Cm = 4 * C
    ks = jax.random.split(key, 19)
    nrm = lambda k, shp, s=0.1: (s * jax.random.normal(k, shp)).astype(jnp.float32)
    p = {}
    # RepCPE: depthwise 3x3 conv, no bias (torch weight (C,1,3,3) -> stored (9, C)),
    # followed by LayerNorm over channels (eps=1e-6).
    p['cpe_w'] = nrm(ks[0], (9, C))
    p['cpe_g'] = 1.0 + nrm(ks[1], (1, C)); p['cpe_b'] = nrm(ks[2], (1, C))
    # norm1 + attention (weights stored (in, out): y = x @ W + b)
    p['ln1_g'] = 1.0 + nrm(ks[3], (1, C)); p['ln1_b'] = nrm(ks[4], (1, C))
    p['wq'] = nrm(ks[5], (C, C));          p['bq'] = nrm(ks[6], (1, C))
    p['wkv'] = nrm(ks[7], (C, 2 * C));     p['bkv'] = nrm(ks[8], (1, 2 * C))
    p['wproj'] = nrm(ks[9], (C, C));       p['bproj'] = nrm(ks[10], (1, C))
    # norm2 + MLP (hidden = 4*C) with depthwise 3x3 conv (+bias)
    p['ln2_g'] = 1.0 + nrm(ks[11], (1, C)); p['ln2_b'] = nrm(ks[12], (1, C))
    p['w1'] = nrm(ks[13], (C, Cm));         p['b1'] = nrm(ks[14], (1, Cm))
    p['dw_w'] = nrm(ks[15], (9, Cm));       p['dw_b'] = nrm(ks[16], (1, Cm))
    p['w2'] = nrm(ks[17], (Cm, C));         p['b2'] = nrm(ks[18], (1, C))
    return p


def reference_forward(x_nchw, p, head):
    B, C, H, W = x_nchw.shape
    N = H * W
    hd = C // head
    scale = hd ** -0.5
    HIGH = jax.lax.Precision.HIGHEST

    def layernorm(z, g, b, eps):
        mu = jnp.mean(z, axis=-1, keepdims=True)
        var = jnp.mean(jnp.square(z - mu), axis=-1, keepdims=True)
        return (z - mu) * jax.lax.rsqrt(var + eps) * g + b

    x = jnp.transpose(x_nchw, (0, 2, 3, 1)).astype(jnp.float32)
    xp = jnp.pad(x, ((0, 0), (1, 1), (1, 1), (0, 0)))
    y = jnp.zeros_like(x)
    for ky in range(3):
        for kx in range(3):
            y = y + xp[:, ky:ky + H, kx:kx + W, :] * p['cpe_w'][ky * 3 + kx]
    x = x + layernorm(y, p['cpe_g'][0], p['cpe_b'][0], CPE_LN_EPS)
    t = x.reshape(B, N, C)

    tn = layernorm(t, p['ln1_g'][0], p['ln1_b'][0], LN_EPS)
    q = jnp.einsum('bnc,cd->bnd', tn, p['wq'], precision=HIGH) + p['bq'][0]
    kv = jnp.einsum('bnc,cd->bnd', tn, p['wkv'], precision=HIGH) + p['bkv'][0]
    k, v = kv[..., :C], kv[..., C:]
    split = lambda z: z.reshape(B, N, head, hd).transpose(0, 2, 1, 3)
    qh, kh, vh = split(q), split(k), split(v)
    s = jnp.einsum('bhqd,bhkd->bhqk', qh, kh, precision=HIGH) * scale
    s = s - jnp.max(s, axis=-1, keepdims=True)
    e = jnp.exp(s)
    a = e / jnp.sum(e, axis=-1, keepdims=True)
    o = jnp.einsum('bhqk,bhkd->bhqd', a, vh, precision=HIGH)
    o = o.transpose(0, 2, 1, 3).reshape(B, N, C)
    t = t + (jnp.einsum('bnc,cd->bnd', o, p['wproj'], precision=HIGH) + p['bproj'][0])

    tn = layernorm(t, p['ln2_g'][0], p['ln2_b'][0], LN_EPS)
    h1 = jnp.einsum('bnc,cm->bnm', tn, p['w1'], precision=HIGH) + p['b1'][0]
    hh = h1.reshape(B, H, W, -1)
    hp = jnp.pad(hh, ((0, 0), (1, 1), (1, 1), (0, 0)))
    dw = jnp.zeros_like(hh) + p['dw_b'][0]
    for ky in range(3):
        for kx in range(3):
            dw = dw + hp[:, ky:ky + H, kx:kx + W, :] * p['dw_w'][ky * 3 + kx]
    g = 0.5 * dw * (1.0 + jax.lax.erf(dw / math.sqrt(2.0)))           # exact GELU
    t = t + (jnp.einsum('bnm,mc->bnc', g.reshape(B, N, -1), p['w2'], precision=HIGH)
             + p['b2'][0])
    return t.reshape(B, H, W, C).transpose(0, 3, 1, 2)


# ----------------------------------- main --------------------------------------

if __name__ == "__main__":
    B, C, H, W = 2, 32, 8, 8
    head = 4

    key = jax.random.PRNGKey(0)
    kx, kp = jax.random.split(key)
    x = jax.random.normal(kx, (B, C, H, W), jnp.float32)   # NCHW, like the torch module
    params = init_params(kp, C)

    fwd = jax.jit(lambda xx, pp: attn_block_forward(xx, pp, head))
    out = jax.block_until_ready(fwd(x, params))

    ref = reference_forward(x, params, head)
    err = float(jnp.max(jnp.abs(out - ref)))

    assert out.shape == (B, C, H, W), out.shape
    # Tolerance accounts for bf16 MXU operands (f32 accumulation) + approx softmax
    # reciprocal vs the f32-HIGHEST reference.
    assert err < 3e-2, f"max abs err {err}"
    print("KERNEL_OK")
</pallas_src>

<mosaic_0001>
module attributes {stable_mosaic.version = 11 : i64} {
  func.func @fused_block_kernel(%arg0: i32, %arg1: memref<1x64x32xf32, #tpu.memory_space<vmem>>, %arg2: memref<9x64x1xf32, #tpu.memory_space<vmem>>, %arg3: memref<9x32xf32, #tpu.memory_space<vmem>>, %arg4: memref<1x32xf32, #tpu.memory_space<vmem>>, %arg5: memref<1x32xf32, #tpu.memory_space<vmem>>, %arg6: memref<1x32xf32, #tpu.memory_space<vmem>>, %arg7: memref<1x32xf32, #tpu.memory_space<vmem>>, %arg8: memref<32x96xbf16, #tpu.memory_space<vmem>>, %arg9: memref<1x96xf32, #tpu.memory_space<vmem>>, %arg10: memref<32x32xbf16, #tpu.memory_space<vmem>>, %arg11: memref<1x32xf32, #tpu.memory_space<vmem>>, %arg12: memref<1x32xf32, #tpu.memory_space<vmem>>, %arg13: memref<1x32xf32, #tpu.memory_space<vmem>>, %arg14: memref<32x128xbf16, #tpu.memory_space<vmem>>, %arg15: memref<1x128xf32, #tpu.memory_space<vmem>>, %arg16: memref<9x128xf32, #tpu.memory_space<vmem>>, %arg17: memref<1x128xf32, #tpu.memory_space<vmem>>, %arg18: memref<128x32xbf16, #tpu.memory_space<vmem>>, %arg19: memref<1x32xf32, #tpu.memory_space<vmem>>, %arg20: memref<1x64x32xf32, #tpu.memory_space<vmem>>) attributes {dimension_semantics = [#tpu.dimension_semantics<parallel>], iteration_bounds = array<i64: 2>, scalar_prefetch = 0 : i64, scratch_operands = 0 : i64, tpu.core_type = #tpu.core_type<tc>, window_params = [{transform_indices = @transform_0, window_bounds = array<i64: 1, 64, 32>}, {pipeline_mode = #tpu.pipeline_mode<synchronous>, transform_indices = @transform_1, window_bounds = array<i64: 9, 64, 1>}, {pipeline_mode = #tpu.pipeline_mode<synchronous>, transform_indices = @transform_2, window_bounds = array<i64: 9, 32>}, {pipeline_mode = #tpu.pipeline_mode<synchronous>, transform_indices = @transform_3, window_bounds = array<i64: 1, 32>}, {pipeline_mode = #tpu.pipeline_mode<synchronous>, transform_indices = @transform_4, window_bounds = array<i64: 1, 32>}, {pipeline_mode = #tpu.pipeline_mode<synchronous>, transform_indices = @transform_5, window_bounds = array<i64: 1, 32>}, {pipeline_mode = #tpu.pipeline_mode<synchronous>, transform_indices = @transform_6, window_bounds = array<i64: 1, 32>}, {pipeline_mode = #tpu.pipeline_mode<synchronous>, transform_indices = @transform_7, window_bounds = array<i64: 32, 96>}, {pipeline_mode = #tpu.pipeline_mode<synchronous>, transform_indices = @transform_8, window_bounds = array<i64: 1, 96>}, {pipeline_mode = #tpu.pipeline_mode<synchronous>, transform_indices = @transform_9, window_bounds = array<i64: 32, 32>}, {pipeline_mode = #tpu.pipeline_mode<synchronous>, transform_indices = @transform_10, window_bounds = array<i64: 1, 32>}, {pipeline_mode = #tpu.pipeline_mode<synchronous>, transform_indices = @transform_11, window_bounds = array<i64: 1, 32>}, {pipeline_mode = #tpu.pipeline_mode<synchronous>, transform_indices = @transform_12, window_bounds = array<i64: 1, 32>}, {pipeline_mode = #tpu.pipeline_mode<synchronous>, transform_indices = @transform_13, window_bounds = array<i64: 32, 128>}, {pipeline_mode = #tpu.pipeline_mode<synchronous>, transform_indices = @transform_14, window_bounds = array<i64: 1, 128>}, {pipeline_mode = #tpu.pipeline_mode<synchronous>, transform_indices = @transform_15, window_bounds = array<i64: 9, 128>}, {pipeline_mode = #tpu.pipeline_mode<synchronous>, transform_indices = @transform_16, window_bounds = array<i64: 1, 128>}, {pipeline_mode = #tpu.pipeline_mode<synchronous>, transform_indices = @transform_17, window_bounds = array<i64: 128, 32>}, {pipeline_mode = #tpu.pipeline_mode<synchronous>, transform_indices = @transform_18, window_bounds = array<i64: 1, 32>}, {transform_indices = @transform_19, window_bounds = array<i64: 1, 64, 32>}]} {
    %c0 = arith.constant 0 : index
    %c0_0 = arith.constant 0 : index
    %c0_1 = arith.constant 0 : index
    %0 = vector.load %arg1[%c0, %c0_0, %c0_1] : memref<1x64x32xf32, #tpu.memory_space<vmem>>, vector<1x64x32xf32>
    %1 = vector.shape_cast %0 : vector<1x64x32xf32> to vector<64x32xf32>
    %cst = arith.constant 0.000000e+00 : f32
    %2 = vector.broadcast %cst : f32 to vector<64x32xf32>
    %c9_i32 = arith.constant 9 : i32
    %3 = tpu.dynamic_rotate %1 by %c9_i32 dim 0 : vector<64x32xf32>, i32 -> vector<64x32xf32>
    %c0_2 = arith.constant 0 : index
    %c0_3 = arith.constant 0 : index
    %4 = vector.load %arg3[%c0_2, %c0_3] : memref<9x32xf32, #tpu.memory_space<vmem>>, vector<1x32xf32>
    %c0_4 = arith.constant 0 : index
    %c0_5 = arith.constant 0 : index
    %c0_6 = arith.constant 0 : index
    %5 = vector.load %arg2[%c0_4, %c0_5, %c0_6] : memref<9x64x1xf32, #tpu.memory_space<vmem>>, vector<1x64x1xf32>
    %6 = vector.shape_cast %5 : vector<1x64x1xf32> to vector<64x1xf32>
    %7 = vector.broadcast %4 : vector<1x32xf32> to vector<64x32xf32>
    %8 = arith.mulf %3, %7 : vector<64x32xf32>
    %9 = vector.broadcast %6 : vector<64x1xf32> to vector<64x32xf32>
    %10 = arith.mulf %8, %9 : vector<64x32xf32>
    %11 = arith.addf %2, %10 : vector<64x32xf32>
    %c8_i32 = arith.constant 8 : i32
    %12 = tpu.dynamic_rotate %1 by %c8_i32 dim 0 : vector<64x32xf32>, i32 -> vector<64x32xf32>
    %c1 = arith.constant 1 : index
    %c0_7 = arith.constant 0 : index
    %13 = vector.load %arg3[%c1, %c0_7] : memref<9x32xf32, #tpu.memory_space<vmem>>, vector<1x32xf32>
    %c1_8 = arith.constant 1 : index
    %c0_9 = arith.constant 0 : index
    %c0_10 = arith.constant 0 : index
    %14 = vector.load %arg2[%c1_8, %c0_9, %c0_10] : memref<9x64x1xf32, #tpu.memory_space<vmem>>, vector<1x64x1xf32>
    %15 = vector.shape_cast %14 : vector<1x64x1xf32> to vector<64x1xf32>
    %16 = vector.broadcast %13 : vector<1x32xf32> to vector<64x32xf32>
    %17 = arith.mulf %12, %16 : vector<64x32xf32>
    %18 = vector.broadcast %15 : vector<64x1xf32> to vector<64x32xf32>
    %19 = arith.mulf %17, %18 : vector<64x32xf32>
    %20 = arith.addf %11, %19 : vector<64x32xf32>
    %c7_i32 = arith.constant 7 : i32
    %21 = tpu.dynamic_rotate %1 by %c7_i32 dim 0 : vector<64x32xf32>, i32 -> vector<64x32xf32>
    %c2 = arith.constant 2 : index
    %c0_11 = arith.constant 0 : index
    %22 = vector.load %arg3[%c2, %c0_11] : memref<9x32xf32, #tpu.memory_space<vmem>>, vector<1x32xf32>
    %c2_12 = arith.constant 2 : index
    %c0_13 = arith.constant 0 : index
    %c0_14 = arith.constant 0 : index
    %23 = vector.load %arg2[%c2_12, %c0_13, %c0_14] : memref<9x64x1xf32, #tpu.memory_space<vmem>>, vector<1x64x1xf32>
    %24 = vector.shape_cast %23 : vector<1x64x1xf32> to vector<64x1xf32>
    %25 = vector.broadcast %22 : vector<1x32xf32> to vector<64x32xf32>
    %26 = arith.mulf %21, %25 : vector<64x32xf32>
    %27 = vector.broadcast %24 : vector<64x1xf32> to vector<64x32xf32>
    %28 = arith.mulf %26, %27 : vector<64x32xf32>
    %29 = arith.addf %20, %28 : vector<64x32xf32>
    %c1_i32 = arith.constant 1 : i32
    %30 = tpu.dynamic_rotate %1 by %c1_i32 dim 0 : vector<64x32xf32>, i32 -> vector<64x32xf32>
    %c3 = arith.constant 3 : index
    %c0_15 = arith.constant 0 : index
    %31 = vector.load %arg3[%c3, %c0_15] : memref<9x32xf32, #tpu.memory_space<vmem>>, vector<1x32xf32>
    %c3_16 = arith.constant 3 : index
    %c0_17 = arith.constant 0 : index
    %c0_18 = arith.constant 0 : index
    %32 = vector.load %arg2[%c3_16, %c0_17, %c0_18] : memref<9x64x1xf32, #tpu.memory_space<vmem>>, vector<1x64x1xf32>
    %33 = vector.shape_cast %32 : vector<1x64x1xf32> to vector<64x1xf32>
    %34 = vector.broadcast %31 : vector<1x32xf32> to vector<64x32xf32>
    %35 = arith.mulf %30, %34 : vector<64x32xf32>
    %36 = vector.broadcast %33 : vector<64x1xf32> to vector<64x32xf32>
    %37 = arith.mulf %35, %36 : vector<64x32xf32>
    %38 = arith.addf %29, %37 : vector<64x32xf32>
    %c4 = arith.constant 4 : index
    %c0_19 = arith.constant 0 : index
    %39 = vector.load %arg3[%c4, %c0_19] : memref<9x32xf32, #tpu.memory_space<vmem>>, vector<1x32xf32>
    %c4_20 = arith.constant 4 : index
    %c0_21 = arith.constant 0 : index
    %c0_22 = arith.constant 0 : index
    %40 = vector.load %arg2[%c4_20, %c0_21, %c0_22] : memref<9x64x1xf32, #tpu.memory_space<vmem>>, vector<1x64x1xf32>
    %41 = vector.shape_cast %40 : vector<1x64x1xf32> to vector<64x1xf32>
    %42 = vector.broadcast %39 : vector<1x32xf32> to vector<64x32xf32>
    %43 = arith.mulf %1, %42 : vector<64x32xf32>
    %44 = vector.broadcast %41 : vector<64x1xf32> to vector<64x32xf32>
    %45 = arith.mulf %43, %44 : vector<64x32xf32>
    %46 = arith.addf %38, %45 : vector<64x32xf32>
    %c63_i32 = arith.constant 63 : i32
    %47 = tpu.dynamic_rotate %1 by %c63_i32 dim 0 : vector<64x32xf32>, i32 -> vector<64x32xf32>
    %c5 = arith.constant 5 : index
    %c0_23 = arith.constant 0 : index
    %48 = vector.load %arg3[%c5, %c0_23] : memref<9x32xf32, #tpu.memory_space<vmem>>, vector<1x32xf32>
    %c5_24 = arith.constant 5 : index
    %c0_25 = arith.constant 0 : index
    %c0_26 = arith.constant 0 : index
    %49 = vector.load %arg2[%c5_24, %c0_25, %c0_26] : memref<9x64x1xf32, #tpu.memory_space<vmem>>, vector<1x64x1xf32>
    %50 = vector.shape_cast %49 : vector<1x64x1xf32> to vector<64x1xf32>
    %51 = vector.broadcast %48 : vector<1x32xf32> to vector<64x32xf32>
    %52 = arith.mulf %47, %51 : vector<64x32xf32>
    %53 = vector.broadcast %50 : vector<64x1xf32> to vector<64x32xf32>
    %54 = arith.mulf %52, %53 : vector<64x32xf32>
    %55 = arith.addf %46, %54 : vector<64x32xf32>
    %c57_i32 = arith.constant 57 : i32
    %56 = tpu.dynamic_rotate %1 by %c57_i32 dim 0 : vector<64x32xf32>, i32 -> vector<64x32xf32>
    %c6 = arith.constant 6 : index
    %c0_27 = arith.constant 0 : index
    %57 = vector.load %arg3[%c6, %c0_27] : memref<9x32xf32, #tpu.memory_space<vmem>>, vector<1x32xf32>
    %c6_28 = arith.constant 6 : index
    %c0_29 = arith.constant 0 : index
    %c0_30 = arith.constant 0 : index
    %58 = vector.load %arg2[%c6_28, %c0_29, %c0_30] : memref<9x64x1xf32, #tpu.memory_space<vmem>>, vector<1x64x1xf32>
    %59 = vector.shape_cast %58 : vector<1x64x1xf32> to vector<64x1xf32>
    %60 = vector.broadcast %57 : vector<1x32xf32> to vector<64x32xf32>
    %61 = arith.mulf %56, %60 : vector<64x32xf32>
    %62 = vector.broadcast %59 : vector<64x1xf32> to vector<64x32xf32>
    %63 = arith.mulf %61, %62 : vector<64x32xf32>
    %64 = arith.addf %55, %63 : vector<64x32xf32>
    %c56_i32 = arith.constant 56 : i32
    %65 = tpu.dynamic_rotate %1 by %c56_i32 dim 0 : vector<64x32xf32>, i32 -> vector<64x32xf32>
    %c7 = arith.constant 7 : index
    %c0_31 = arith.constant 0 : index
    %66 = vector.load %arg3[%c7, %c0_31] : memref<9x32xf32, #tpu.memory_space<vmem>>, vector<1x32xf32>
    %c7_32 = arith.constant 7 : index
    %c0_33 = arith.constant 0 : index
    %c0_34 = arith.constant 0 : index
    %67 = vector.load %arg2[%c7_32, %c0_33, %c0_34] : memref<9x64x1xf32, #tpu.memory_space<vmem>>, vector<1x64x1xf32>
    %68 = vector.shape_cast %67 : vector<1x64x1xf32> to vector<64x1xf32>
    %69 = vector.broadcast %66 : vector<1x32xf32> to vector<64x32xf32>
    %70 = arith.mulf %65, %69 : vector<64x32xf32>
    %71 = vector.broadcast %68 : vector<64x1xf32> to vector<64x32xf32>
    %72 = arith.mulf %70, %71 : vector<64x32xf32>
    %73 = arith.addf %64, %72 : vector<64x32xf32>
    %c55_i32 = arith.constant 55 : i32
    %74 = tpu.dynamic_rotate %1 by %c55_i32 dim 0 : vector<64x32xf32>, i32 -> vector<64x32xf32>
    %c8 = arith.constant 8 : index
    %c0_35 = arith.constant 0 : index
    %75 = vector.load %arg3[%c8, %c0_35] : memref<9x32xf32, #tpu.memory_space<vmem>>, vector<1x32xf32>
    %c8_36 = arith.constant 8 : index
    %c0_37 = arith.constant 0 : index
    %c0_38 = arith.constant 0 : index
    %76 = vector.load %arg2[%c8_36, %c0_37, %c0_38] : memref<9x64x1xf32, #tpu.memory_space<vmem>>, vector<1x64x1xf32>
    %77 = vector.shape_cast %76 : vector<1x64x1xf32> to vector<64x1xf32>
    %78 = vector.broadcast %75 : vector<1x32xf32> to vector<64x32xf32>
    %79 = arith.mulf %74, %78 : vector<64x32xf32>
    %80 = vector.broadcast %77 : vector<64x1xf32> to vector<64x32xf32>
    %81 = arith.mulf %79, %80 : vector<64x32xf32>
    %82 = arith.addf %73, %81 : vector<64x32xf32>
    %c0_39 = arith.constant 0 : index
    %c0_40 = arith.constant 0 : index
    %83 = vector.load %arg4[%c0_39, %c0_40] : memref<1x32xf32, #tpu.memory_space<vmem>>, vector<1x32xf32>
    %c0_41 = arith.constant 0 : index
    %c0_42 = arith.constant 0 : index
    %84 = vector.load %arg5[%c0_41, %c0_42] : memref<1x32xf32, #tpu.memory_space<vmem>>, vector<1x32xf32>
    %cst_43 = arith.constant dense<0.000000e+00> : vector<64xf32>
    %85 = vector.multi_reduction <add>, %82, %cst_43 [1] : vector<64x32xf32> to vector<64xf32>
    %86 = vector.shape_cast %85 : vector<64xf32> to vector<64x1xf32>
    %cst_44 = arith.constant 3.200000e+01 : f32
    %87 = vector.broadcast %cst_44 : f32 to vector<64x1xf32>
    %88 = arith.divf %86, %87 : vector<64x1xf32>
    %89 = vector.broadcast %88 : vector<64x1xf32> to vector<64x32xf32>
    %90 = arith.subf %82, %89 : vector<64x32xf32>
    %91 = arith.mulf %90, %90 : vector<64x32xf32>
    %cst_45 = arith.constant dense<0.000000e+00> : vector<64xf32>
    %92 = vector.multi_reduction <add>, %91, %cst_45 [1] : vector<64x32xf32> to vector<64xf32>
    %93 = vector.shape_cast %92 : vector<64xf32> to vector<64x1xf32>
    %cst_46 = arith.constant 3.200000e+01 : f32
    %94 = vector.broadcast %cst_46 : f32 to vector<64x1xf32>
    %95 = arith.divf %93, %94 : vector<64x1xf32>
    %96 = vector.broadcast %88 : vector<64x1xf32> to vector<64x32xf32>
    %97 = arith.subf %82, %96 : vector<64x32xf32>
    %cst_47 = arith.constant 9.99999997E-7 : f32
    %98 = vector.broadcast %cst_47 : f32 to vector<64x1xf32>
    %99 = arith.addf %95, %98 : vector<64x1xf32>
    %100 = math.rsqrt %99 : vector<64x1xf32>
    %101 = vector.broadcast %100 : vector<64x1xf32> to vector<64x32xf32>
    %102 = arith.mulf %97, %101 : vector<64x32xf32>
    %103 = vector.broadcast %83 : vector<1x32xf32> to vector<64x32xf32>
    %104 = arith.mulf %102, %103 : vector<64x32xf32>
    %105 = vector.broadcast %84 : vector<1x32xf32> to vector<64x32xf32>
    %106 = arith.addf %104, %105 : vector<64x32xf32>
    %107 = arith.addf %1, %106 : vector<64x32xf32>
    %c0_48 = arith.constant 0 : index
    %c0_49 = arith.constant 0 : index
    %108 = vector.load %arg6[%c0_48, %c0_49] : memref<1x32xf32, #tpu.memory_space<vmem>>, vector<1x32xf32>
    %c0_50 = arith.constant 0 : index
    %c0_51 = arith.constant 0 : index
    %109 = vector.load %arg7[%c0_50, %c0_51] : memref<1x32xf32, #tpu.memory_space<vmem>>, vector<1x32xf32>
    %cst_52 = arith.constant dense<0.000000e+00> : vector<64xf32>
    %110 = vector.multi_reduction <add>, %107, %cst_52 [1] : vector<64x32xf32> to vector<64xf32>
    %111 = vector.shape_cast %110 : vector<64xf32> to vector<64x1xf32>
    %cst_53 = arith.constant 3.200000e+01 : f32
    %112 = vector.broadcast %cst_53 : f32 to vector<64x1xf32>
    %113 = arith.divf %111, %112 : vector<64x1xf32>
    %114 = vector.broadcast %113 : vector<64x1xf32> to vector<64x32xf32>
    %115 = arith.subf %107, %114 : vector<64x32xf32>
    %116 = arith.mulf %115, %115 : vector<64x32xf32>
    %cst_54 = arith.constant dense<0.000000e+00> : vector<64xf32>
    %117 = vector.multi_reduction <add>, %116, %cst_54 [1] : vector<64x32xf32> to vector<64xf32>
    %118 = vector.shape_cast %117 : vector<64xf32> to vector<64x1xf32>
    %cst_55 = arith.constant 3.200000e+01 : f32
    %119 = vector.broadcast %cst_55 : f32 to vector<64x1xf32>
    %120 = arith.divf %118, %119 : vector<64x1xf32>
    %121 = vector.broadcast %113 : vector<64x1xf32> to vector<64x32xf32>
    %122 = arith.subf %107, %121 : vector<64x32xf32>
    %cst_56 = arith.constant 9.99999974E-6 : f32
    %123 = vector.broadcast %cst_56 : f32 to vector<64x1xf32>
    %124 = arith.addf %120, %123 : vector<64x1xf32>
    %125 = math.rsqrt %124 : vector<64x1xf32>
    %126 = vector.broadcast %125 : vector<64x1xf32> to vector<64x32xf32>
    %127 = arith.mulf %122, %126 : vector<64x32xf32>
    %128 = vector.broadcast %108 : vector<1x32xf32> to vector<64x32xf32>
    %129 = arith.mulf %127, %128 : vector<64x32xf32>
    %130 = vector.broadcast %109 : vector<1x32xf32> to vector<64x32xf32>
    %131 = arith.addf %129, %130 : vector<64x32xf32>
    %132 = arith.truncf %131 : vector<64x32xf32> to vector<64x32xbf16>
    %c0_57 = arith.constant 0 : index
    %c0_58 = arith.constant 0 : index
    %133 = vector.load %arg8[%c0_57, %c0_58] : memref<32x96xbf16, #tpu.memory_space<vmem>>, vector<32x96xbf16>
    %cst_59 = arith.constant dense<0.000000e+00> : vector<64x96xf32>
    %134 = tpu.matmul %132, %133, %cst_59 {dimension_numbers = #tpu.dot_dimension_numbers<[1], [0], [0], [1], [0, 0, 1, 1], [], []>} : vector<64x32xbf16>, vector<32x96xbf16>, vector<64x96xf32> -> vector<64x96xf32>
    %c0_60 = arith.constant 0 : index
    %c0_61 = arith.constant 0 : index
    %135 = vector.load %arg9[%c0_60, %c0_61] : memref<1x96xf32, #tpu.memory_space<vmem>>, vector<1x96xf32>
    %136 = vector.broadcast %135 : vector<1x96xf32> to vector<64x96xf32>
    %137 = arith.addf %134, %136 : vector<64x96xf32>
    %138 = vector.extract_strided_slice %137 {offsets = [0, 0], sizes = [64, 32], strides = [1, 1]} : vector<64x96xf32> to vector<64x32xf32>
    %cst_62 = arith.constant 0.353553385 : f32
    %139 = vector.broadcast %cst_62 : f32 to vector<64x32xf32>
    %140 = arith.mulf %138, %139 : vector<64x32xf32>
    %141 = arith.truncf %140 : vector<64x32xf32> to vector<64x32xbf16>
    %142 = vector.extract_strided_slice %137 {offsets = [0, 32], sizes = [64, 32], strides = [1, 1]} : vector<64x96xf32> to vector<64x32xf32>
    %143 = arith.truncf %142 : vector<64x32xf32> to vector<64x32xbf16>
    %144 = vector.extract_strided_slice %137 {offsets = [0, 64], sizes = [64, 32], strides = [1, 1]} : vector<64x96xf32> to vector<64x32xf32>
    %145 = arith.truncf %144 : vector<64x32xf32> to vector<64x32xbf16>
    %146 = tpu.iota {dimensions = array<i32: 1>} : vector<1x32xi32>
    %cst_63 = arith.constant 0.000000e+00 : f32
    %147 = vector.broadcast %cst_63 : f32 to vector<64x32xf32>
    %c0_i32 = arith.constant 0 : i32
    %148 = vector.broadcast %c0_i32 : i32 to vector<1x32xi32>
    %149 = arith.cmpi sge, %146, %148 : vector<1x32xi32>
    %c8_i32_64 = arith.constant 8 : i32
    %150 = vector.broadcast %c8_i32_64 : i32 to vector<1x32xi32>
    %151 = arith.cmpi slt, %146, %150 : vector<1x32xi32>
    %152 = arith.andi %149, %151 : vector<1x32xi1>
    %cst_65 = arith.constant 0.000000e+00 : f32
    %153 = arith.truncf %cst_65 : f32 to bf16
    %154 = vector.shape_cast %152 : vector<1x32xi1> to vector<1x32xi1>
    %155 = vector.broadcast %154 : vector<1x32xi1> to vector<64x32xi1>
    %156 = vector.broadcast %153 : bf16 to vector<64x32xbf16>
    %157 = arith.select %155, %141, %156 : vector<64x32xi1>, vector<64x32xbf16>
    %cst_66 = arith.constant 0.000000e+00 : f32
    %158 = arith.truncf %cst_66 : f32 to bf16
    %159 = vector.shape_cast %152 : vector<1x32xi1> to vector<1x32xi1>
    %160 = vector.broadcast %159 : vector<1x32xi1> to vector<64x32xi1>
    %161 = vector.broadcast %158 : bf16 to vector<64x32xbf16>
    %162 = arith.select %160, %145, %161 : vector<64x32xi1>, vector<64x32xbf16>
    %cst_67 = arith.constant dense<0.000000e+00> : vector<64x64xf32>
    %163 = tpu.matmul %157, %143, %cst_67 {dimension_numbers = #tpu.dot_dimension_numbers<[1], [1], [0], [0], [0, 0, 1, 0], [], []>} : vector<64x32xbf16>, vector<64x32xbf16>, vector<64x64xf32> -> vector<64x64xf32>
    %cst_68 = arith.constant dense<0xFF800000> : vector<64xf32>
    %164 = vector.multi_reduction <maximumf>, %163, %cst_68 [1] : vector<64x64xf32> to vector<64xf32>
    %165 = vector.shape_cast %164 : vector<64xf32> to vector<64x1xf32>
    %166 = vector.broadcast %165 : vector<64x1xf32> to vector<64x64xf32>
    %167 = arith.subf %163, %166 : vector<64x64xf32>
    %168 = math.exp %167 : vector<64x64xf32>
    %cst_69 = arith.constant dense<0.000000e+00> : vector<64xf32>
    %169 = vector.multi_reduction <add>, %168, %cst_69 [1] : vector<64x64xf32> to vector<64xf32>
    %170 = vector.shape_cast %169 : vector<64xf32> to vector<64x1xf32>
    %171 = tpu.reciprocal %170 {approx = true} : vector<64x1xf32> -> vector<64x1xf32>
    %172 = arith.truncf %168 : vector<64x64xf32> to vector<64x64xbf16>
    %cst_70 = arith.constant dense<0.000000e+00> : vector<64x32xf32>
    %173 = tpu.matmul %172, %162, %cst_70 {dimension_numbers = #tpu.dot_dimension_numbers<[1], [0], [0], [1], [0, 0, 1, 1], [], []>} : vector<64x64xbf16>, vector<64x32xbf16>, vector<64x32xf32> -> vector<64x32xf32>
    %174 = vector.broadcast %171 : vector<64x1xf32> to vector<64x32xf32>
    %175 = arith.mulf %173, %174 : vector<64x32xf32>
    %176 = arith.addf %147, %175 : vector<64x32xf32>
    %c8_i32_71 = arith.constant 8 : i32
    %177 = vector.broadcast %c8_i32_71 : i32 to vector<1x32xi32>
    %178 = arith.cmpi sge, %146, %177 : vector<1x32xi32>
    %c16_i32 = arith.constant 16 : i32
    %179 = vector.broadcast %c16_i32 : i32 to vector<1x32xi32>
    %180 = arith.cmpi slt, %146, %179 : vector<1x32xi32>
    %181 = arith.andi %178, %180 : vector<1x32xi1>
    %cst_72 = arith.constant 0.000000e+00 : f32
    %182 = arith.truncf %cst_72 : f32 to bf16
    %183 = vector.shape_cast %181 : vector<1x32xi1> to vector<1x32xi1>
    %184 = vector.broadcast %183 : vector<1x32xi1> to vector<64x32xi1>
    %185 = vector.broadcast %182 : bf16 to vector<64x32xbf16>
    %186 = arith.select %184, %141, %185 : vector<64x32xi1>, vector<64x32xbf16>
    %cst_73 = arith.constant 0.000000e+00 : f32
    %187 = arith.truncf %cst_73 : f32 to bf16
    %188 = vector.shape_cast %181 : vector<1x32xi1> to vector<1x32xi1>
    %189 = vector.broadcast %188 : vector<1x32xi1> to vector<64x32xi1>
    %190 = vector.broadcast %187 : bf16 to vector<64x32xbf16>
    %191 = arith.select %189, %145, %190 : vector<64x32xi1>, vector<64x32xbf16>
    %cst_74 = arith.constant dense<0.000000e+00> : vector<64x64xf32>
    %192 = tpu.matmul %186, %143, %cst_74 {dimension_numbers = #tpu.dot_dimension_numbers<[1], [1], [0], [0], [0, 0, 1, 0], [], []>} : vector<64x32xbf16>, vector<64x32xbf16>, vector<64x64xf32> -> vector<64x64xf32>
    %cst_75 = arith.constant dense<0xFF800000> : vector<64xf32>
    %193 = vector.multi_reduction <maximumf>, %192, %cst_75 [1] : vector<64x64xf32> to vector<64xf32>
    %194 = vector.shape_cast %193 : vector<64xf32> to vector<64x1xf32>
    %195 = vector.broadcast %194 : vector<64x1xf32> to vector<64x64xf32>
    %196 = arith.subf %192, %195 : vector<64x64xf32>
    %197 = math.exp %196 : vector<64x64xf32>
    %cst_76 = arith.constant dense<0.000000e+00> : vector<64xf32>
    %198 = vector.multi_reduction <add>, %197, %cst_76 [1] : vector<64x64xf32> to vector<64xf32>
    %199 = vector.shape_cast %198 : vector<64xf32> to vector<64x1xf32>
    %200 = tpu.reciprocal %199 {approx = true} : vector<64x1xf32> -> vector<64x1xf32>
    %201 = arith.truncf %197 : vector<64x64xf32> to vector<64x64xbf16>
    %cst_77 = arith.constant dense<0.000000e+00> : vector<64x32xf32>
    %202 = tpu.matmul %201, %191, %cst_77 {dimension_numbers = #tpu.dot_dimension_numbers<[1], [0], [0], [1], [0, 0, 1, 1], [], []>} : vector<64x64xbf16>, vector<64x32xbf16>, vector<64x32xf32> -> vector<64x32xf32>
    %203 = vector.broadcast %200 : vector<64x1xf32> to vector<64x32xf32>
    %204 = arith.mulf %202, %203 : vector<64x32xf32>
    %205 = arith.addf %176, %204 : vector<64x32xf32>
    %c16_i32_78 = arith.constant 16 : i32
    %206 = vector.broadcast %c16_i32_78 : i32 to vector<1x32xi32>
    %207 = arith.cmpi sge, %146, %206 : vector<1x32xi32>
    %c24_i32 = arith.constant 24 : i32
    %208 = vector.broadcast %c24_i32 : i32 to vector<1x32xi32>
    %209 = arith.cmpi slt, %146, %208 : vector<1x32xi32>
    %210 = arith.andi %207, %209 : vector<1x32xi1>
    %cst_79 = arith.constant 0.000000e+00 : f32
    %211 = arith.truncf %cst_79 : f32 to bf16
    %212 = vector.shape_cast %210 : vector<1x32xi1> to vector<1x32xi1>
    %213 = vector.broadcast %212 : vector<1x32xi1> to vector<64x32xi1>
    %214 = vector.broadcast %211 : bf16 to vector<64x32xbf16>
    %215 = arith.select %213, %141, %214 : vector<64x32xi1>, vector<64x32xbf16>
    %cst_80 = arith.constant 0.000000e+00 : f32
    %216 = arith.truncf %cst_80 : f32 to bf16
    %217 = vector.shape_cast %210 : vector<1x32xi1> to vector<1x32xi1>
    %218 = vector.broadcast %217 : vector<1x32xi1> to vector<64x32xi1>
    %219 = vector.broadcast %216 : bf16 to vector<64x32xbf16>
    %220 = arith.select %218, %145, %219 : vector<64x32xi1>, vector<64x32xbf16>
    %cst_81 = arith.constant dense<0.000000e+00> : vector<64x64xf32>
    %221 = tpu.matmul %215, %143, %cst_81 {dimension_numbers = #tpu.dot_dimension_numbers<[1], [1], [0], [0], [0, 0, 1, 0], [], []>} : vector<64x32xbf16>, vector<64x32xbf16>, vector<64x64xf32> -> vector<64x64xf32>
    %cst_82 = arith.constant dense<0xFF800000> : vector<64xf32>
    %222 = vector.multi_reduction <maximumf>, %221, %cst_82 [1] : vector<64x64xf32> to vector<64xf32>
    %223 = vector.shape_cast %222 : vector<64xf32> to vector<64x1xf32>
    %224 = vector.broadcast %223 : vector<64x1xf32> to vector<64x64xf32>
    %225 = arith.subf %221, %224 : vector<64x64xf32>
    %226 = math.exp %225 : vector<64x64xf32>
    %cst_83 = arith.constant dense<0.000000e+00> : vector<64xf32>
    %227 = vector.multi_reduction <add>, %226, %cst_83 [1] : vector<64x64xf32> to vector<64xf32>
    %228 = vector.shape_cast %227 : vector<64xf32> to vector<64x1xf32>
    %229 = tpu.reciprocal %228 {approx = true} : vector<64x1xf32> -> vector<64x1xf32>
    %230 = arith.truncf %226 : vector<64x64xf32> to vector<64x64xbf16>
    %cst_84 = arith.constant dense<0.000000e+00> : vector<64x32xf32>
    %231 = tpu.matmul %230, %220, %cst_84 {dimension_numbers = #tpu.dot_dimension_numbers<[1], [0], [0], [1], [0, 0, 1, 1], [], []>} : vector<64x64xbf16>, vector<64x32xbf16>, vector<64x32xf32> -> vector<64x32xf32>
    %232 = vector.broadcast %229 : vector<64x1xf32> to vector<64x32xf32>
    %233 = arith.mulf %231, %232 : vector<64x32xf32>
    %234 = arith.addf %205, %233 : vector<64x32xf32>
    %c24_i32_85 = arith.constant 24 : i32
    %235 = vector.broadcast %c24_i32_85 : i32 to vector<1x32xi32>
    %236 = arith.cmpi sge, %146, %235 : vector<1x32xi32>
    %c32_i32 = arith.constant 32 : i32
    %237 = vector.broadcast %c32_i32 : i32 to vector<1x32xi32>
    %238 = arith.cmpi slt, %146, %237 : vector<1x32xi32>
    %239 = arith.andi %236, %238 : vector<1x32xi1>
    %cst_86 = arith.constant 0.000000e+00 : f32
    %240 = arith.truncf %cst_86 : f32 to bf16
    %241 = vector.shape_cast %239 : vector<1x32xi1> to vector<1x32xi1>
    %242 = vector.broadcast %241 : vector<1x32xi1> to vector<64x32xi1>
    %243 = vector.broadcast %240 : bf16 to vector<64x32xbf16>
    %244 = arith.select %242, %141, %243 : vector<64x32xi1>, vector<64x32xbf16>
    %cst_87 = arith.constant 0.000000e+00 : f32
    %245 = arith.truncf %cst_87 : f32 to bf16
    %246 = vector.shape_cast %239 : vector<1x32xi1> to vector<1x32xi1>
    %247 = vector.broadcast %246 : vector<1x32xi1> to vector<64x32xi1>
    %248 = vector.broadcast %245 : bf16 to vector<64x32xbf16>
    %249 = arith.select %247, %145, %248 : vector<64x32xi1>, vector<64x32xbf16>
    %cst_88 = arith.constant dense<0.000000e+00> : vector<64x64xf32>
    %250 = tpu.matmul %244, %143, %cst_88 {dimension_numbers = #tpu.dot_dimension_numbers<[1], [1], [0], [0], [0, 0, 1, 0], [], []>} : vector<64x32xbf16>, vector<64x32xbf16>, vector<64x64xf32> -> vector<64x64xf32>
    %cst_89 = arith.constant dense<0xFF800000> : vector<64xf32>
    %251 = vector.multi_reduction <maximumf>, %250, %cst_89 [1] : vector<64x64xf32> to vector<64xf32>
    %252 = vector.shape_cast %251 : vector<64xf32> to vector<64x1xf32>
    %253 = vector.broadcast %252 : vector<64x1xf32> to vector<64x64xf32>
    %254 = arith.subf %250, %253 : vector<64x64xf32>
    %255 = math.exp %254 : vector<64x64xf32>
    %cst_90 = arith.constant dense<0.000000e+00> : vector<64xf32>
    %256 = vector.multi_reduction <add>, %255, %cst_90 [1] : vector<64x64xf32> to vector<64xf32>
    %257 = vector.shape_cast %256 : vector<64xf32> to vector<64x1xf32>
    %258 = tpu.reciprocal %257 {approx = true} : vector<64x1xf32> -> vector<64x1xf32>
    %259 = arith.truncf %255 : vector<64x64xf32> to vector<64x64xbf16>
    %cst_91 = arith.constant dense<0.000000e+00> : vector<64x32xf32>
    %260 = tpu.matmul %259, %249, %cst_91 {dimension_numbers = #tpu.dot_dimension_numbers<[1], [0], [0], [1], [0, 0, 1, 1], [], []>} : vector<64x64xbf16>, vector<64x32xbf16>, vector<64x32xf32> -> vector<64x32xf32>
    %261 = vector.broadcast %258 : vector<64x1xf32> to vector<64x32xf32>
    %262 = arith.mulf %260, %261 : vector<64x32xf32>
    %263 = arith.addf %234, %262 : vector<64x32xf32>
    %264 = arith.truncf %263 : vector<64x32xf32> to vector<64x32xbf16>
    %c0_92 = arith.constant 0 : index
    %c0_93 = arith.constant 0 : index
    %265 = vector.load %arg10[%c0_92, %c0_93] : memref<32x32xbf16, #tpu.memory_space<vmem>>, vector<32x32xbf16>
    %cst_94 = arith.constant dense<0.000000e+00> : vector<64x32xf32>
    %266 = tpu.matmul %264, %265, %cst_94 {dimension_numbers = #tpu.dot_dimension_numbers<[1], [0], [0], [1], [0, 0, 1, 1], [], []>} : vector<64x32xbf16>, vector<32x32xbf16>, vector<64x32xf32> -> vector<64x32xf32>
    %267 = arith.addf %107, %266 : vector<64x32xf32>
    %c0_95 = arith.constant 0 : index
    %c0_96 = arith.constant 0 : index
    %268 = vector.load %arg11[%c0_95, %c0_96] : memref<1x32xf32, #tpu.memory_space<vmem>>, vector<1x32xf32>
    %269 = vector.broadcast %268 : vector<1x32xf32> to vector<64x32xf32>
    %270 = arith.addf %267, %269 : vector<64x32xf32>
    %c0_97 = arith.constant 0 : index
    %c0_98 = arith.constant 0 : index
    %271 = vector.load %arg12[%c0_97, %c0_98] : memref<1x32xf32, #tpu.memory_space<vmem>>, vector<1x32xf32>
    %c0_99 = arith.constant 0 : index
    %c0_100 = arith.constant 0 : index
    %272 = vector.load %arg13[%c0_99, %c0_100] : memref<1x32xf32, #tpu.memory_space<vmem>>, vector<1x32xf32>
    %cst_101 = arith.constant dense<0.000000e+00> : vector<64xf32>
    %273 = vector.multi_reduction <add>, %270, %cst_101 [1] : vector<64x32xf32> to vector<64xf32>
    %274 = vector.shape_cast %273 : vector<64xf32> to vector<64x1xf32>
    %cst_102 = arith.constant 3.200000e+01 : f32
    %275 = vector.broadcast %cst_102 : f32 to vector<64x1xf32>
    %276 = arith.divf %274, %275 : vector<64x1xf32>
    %277 = vector.broadcast %276 : vector<64x1xf32> to vector<64x32xf32>
    %278 = arith.subf %270, %277 : vector<64x32xf32>
    %279 = arith.mulf %278, %278 : vector<64x32xf32>
    %cst_103 = arith.constant dense<0.000000e+00> : vector<64xf32>
    %280 = vector.multi_reduction <add>, %279, %cst_103 [1] : vector<64x32xf32> to vector<64xf32>
    %281 = vector.shape_cast %280 : vector<64xf32> to vector<64x1xf32>
    %cst_104 = arith.constant 3.200000e+01 : f32
    %282 = vector.broadcast %cst_104 : f32 to vector<64x1xf32>
    %283 = arith.divf %281, %282 : vector<64x1xf32>
    %284 = vector.broadcast %276 : vector<64x1xf32> to vector<64x32xf32>
    %285 = arith.subf %270, %284 : vector<64x32xf32>
    %cst_105 = arith.constant 9.99999974E-6 : f32
    %286 = vector.broadcast %cst_105 : f32 to vector<64x1xf32>
    %287 = arith.addf %283, %286 : vector<64x1xf32>
    %288 = math.rsqrt %287 : vector<64x1xf32>
    %289 = vector.broadcast %288 : vector<64x1xf32> to vector<64x32xf32>
    %290 = arith.mulf %285, %289 : vector<64x32xf32>
    %291 = vector.broadcast %271 : vector<1x32xf32> to vector<64x32xf32>
    %292 = arith.mulf %290, %291 : vector<64x32xf32>
    %293 = vector.broadcast %272 : vector<1x32xf32> to vector<64x32xf32>
    %294 = arith.addf %292, %293 : vector<64x32xf32>
    %295 = arith.truncf %294 : vector<64x32xf32> to vector<64x32xbf16>
    %c0_106 = arith.constant 0 : index
    %c0_107 = arith.constant 0 : index
    %296 = vector.load %arg14[%c0_106, %c0_107] : memref<32x128xbf16, #tpu.memory_space<vmem>>, vector<32x128xbf16>
    %cst_108 = arith.constant dense<0.000000e+00> : vector<64x128xf32>
    %297 = tpu.matmul %295, %296, %cst_108 {dimension_numbers = #tpu.dot_dimension_numbers<[1], [0], [0], [1], [0, 0, 1, 1], [], []>} : vector<64x32xbf16>, vector<32x128xbf16>, vector<64x128xf32> -> vector<64x128xf32>
    %c0_109 = arith.constant 0 : index
    %c0_110 = arith.constant 0 : index
    %298 = vector.load %arg15[%c0_109, %c0_110] : memref<1x128xf32, #tpu.memory_space<vmem>>, vector<1x128xf32>
    %299 = vector.broadcast %298 : vector<1x128xf32> to vector<64x128xf32>
    %300 = arith.addf %297, %299 : vector<64x128xf32>
    %c0_111 = arith.constant 0 : index
    %c0_112 = arith.constant 0 : index
    %301 = vector.load %arg17[%c0_111, %c0_112] : memref<1x128xf32, #tpu.memory_space<vmem>>, vector<1x128xf32>
    %cst_113 = arith.constant 0.000000e+00 : f32
    %302 = vector.broadcast %cst_113 : f32 to vector<64x128xf32>
    %303 = vector.broadcast %301 : vector<1x128xf32> to vector<64x128xf32>
    %304 = arith.addf %302, %303 : vector<64x128xf32>
    %c9_i32_114 = arith.constant 9 : i32
    %305 = tpu.dynamic_rotate %300 by %c9_i32_114 dim 0 : vector<64x128xf32>, i32 -> vector<64x128xf32>
    %c0_115 = arith.constant 0 : index
    %c0_116 = arith.constant 0 : index
    %306 = vector.load %arg16[%c0_115, %c0_116] : memref<9x128xf32, #tpu.memory_space<vmem>>, vector<1x128xf32>
    %c0_117 = arith.constant 0 : index
    %c0_118 = arith.constant 0 : index
    %c0_119 = arith.constant 0 : index
    %307 = vector.load %arg2[%c0_117, %c0_118, %c0_119] : memref<9x64x1xf32, #tpu.memory_space<vmem>>, vector<1x64x1xf32>
    %308 = vector.shape_cast %307 : vector<1x64x1xf32> to vector<64x1xf32>
    %309 = vector.broadcast %306 : vector<1x128xf32> to vector<64x128xf32>
    %310 = arith.mulf %305, %309 : vector<64x128xf32>
    %311 = vector.broadcast %308 : vector<64x1xf32> to vector<64x128xf32>
    %312 = arith.mulf %310, %311 : vector<64x128xf32>
    %313 = arith.addf %304, %312 : vector<64x128xf32>
    %c8_i32_120 = arith.constant 8 : i32
    %314 = tpu.dynamic_rotate %300 by %c8_i32_120 dim 0 : vector<64x128xf32>, i32 -> vector<64x128xf32>
    %c1_121 = arith.constant 1 : index
    %c0_122 = arith.constant 0 : index
    %315 = vector.load %arg16[%c1_121, %c0_122] : memref<9x128xf32, #tpu.memory_space<vmem>>, vector<1x128xf32>
    %c1_123 = arith.constant 1 : index
    %c0_124 = arith.constant 0 : index
    %c0_125 = arith.constant 0 : index
    %316 = vector.load %arg2[%c1_123, %c0_124, %c0_125] : memref<9x64x1xf32, #tpu.memory_space<vmem>>, vector<1x64x1xf32>
    %317 = vector.shape_cast %316 : vector<1x64x1xf32> to vector<64x1xf32>
    %318 = vector.broadcast %315 : vector<1x128xf32> to vector<64x128xf32>
    %319 = arith.mulf %314, %318 : vector<64x128xf32>
    %320 = vector.broadcast %317 : vector<64x1xf32> to vector<64x128xf32>
    %321 = arith.mulf %319, %320 : vector<64x128xf32>
    %322 = arith.addf %313, %321 : vector<64x128xf32>
    %c7_i32_126 = arith.constant 7 : i32
    %323 = tpu.dynamic_rotate %300 by %c7_i32_126 dim 0 : vector<64x128xf32>, i32 -> vector<64x128xf32>
    %c2_127 = arith.constant 2 : index
    %c0_128 = arith.constant 0 : index
    %324 = vector.load %arg16[%c2_127, %c0_128] : memref<9x128xf32, #tpu.memory_space<vmem>>, vector<1x128xf32>
    %c2_129 = arith.constant 2 : index
    %c0_130 = arith.constant 0 : index
    %c0_131 = arith.constant 0 : index
    %325 = vector.load %arg2[%c2_129, %c0_130, %c0_131] : memref<9x64x1xf32, #tpu.memory_space<vmem>>, vector<1x64x1xf32>
    %326 = vector.shape_cast %325 : vector<1x64x1xf32> to vector<64x1xf32>
    %327 = vector.broadcast %324 : vector<1x128xf32> to vector<64x128xf32>
    %328 = arith.mulf %323, %327 : vector<64x128xf32>
    %329 = vector.broadcast %326 : vector<64x1xf32> to vector<64x128xf32>
    %330 = arith.mulf %328, %329 : vector<64x128xf32>
    %331 = arith.addf %322, %330 : vector<64x128xf32>
    %c1_i32_132 = arith.constant 1 : i32
    %332 = tpu.dynamic_rotate %300 by %c1_i32_132 dim 0 : vector<64x128xf32>, i32 -> vector<64x128xf32>
    %c3_133 = arith.constant 3 : index
    %c0_134 = arith.constant 0 : index
    %333 = vector.load %arg16[%c3_133, %c0_134] : memref<9x128xf32, #tpu.memory_space<vmem>>, vector<1x128xf32>
    %c3_135 = arith.constant 3 : index
    %c0_136 = arith.constant 0 : index
    %c0_137 = arith.constant 0 : index
    %334 = vector.load %arg2[%c3_135, %c0_136, %c0_137] : memref<9x64x1xf32, #tpu.memory_space<vmem>>, vector<1x64x1xf32>
    %335 = vector.shape_cast %334 : vector<1x64x1xf32> to vector<64x1xf32>
    %336 = vector.broadcast %333 : vector<1x128xf32> to vector<64x128xf32>
    %337 = arith.mulf %332, %336 : vector<64x128xf32>
    %338 = vector.broadcast %335 : vector<64x1xf32> to vector<64x128xf32>
    %339 = arith.mulf %337, %338 : vector<64x128xf32>
    %340 = arith.addf %331, %339 : vector<64x128xf32>
    %c4_138 = arith.constant 4 : index
    %c0_139 = arith.constant 0 : index
    %341 = vector.load %arg16[%c4_138, %c0_139] : memref<9x128xf32, #tpu.memory_space<vmem>>, vector<1x128xf32>
    %c4_140 = arith.constant 4 : index
    %c0_141 = arith.constant 0 : index
    %c0_142 = arith.constant 0 : index
    %342 = vector.load %arg2[%c4_140, %c0_141, %c0_142] : memref<9x64x1xf32, #tpu.memory_space<vmem>>, vector<1x64x1xf32>
    %343 = vector.shape_cast %342 : vector<1x64x1xf32> to vector<64x1xf32>
    %344 = vector.broadcast %341 : vector<1x128xf32> to vector<64x128xf32>
    %345 = arith.mulf %300, %344 : vector<64x128xf32>
    %346 = vector.broadcast %343 : vector<64x1xf32> to vector<64x128xf32>
    %347 = arith.mulf %345, %346 : vector<64x128xf32>
    %348 = arith.addf %340, %347 : vector<64x128xf32>
    %c63_i32_143 = arith.constant 63 : i32
    %349 = tpu.dynamic_rotate %300 by %c63_i32_143 dim 0 : vector<64x128xf32>, i32 -> vector<64x128xf32>
    %c5_144 = arith.constant 5 : index
    %c0_145 = arith.constant 0 : index
    %350 = vector.load %arg16[%c5_144, %c0_145] : memref<9x128xf32, #tpu.memory_space<vmem>>, vector<1x128xf32>
    %c5_146 = arith.constant 5 : index
    %c0_147 = arith.constant 0 : index
    %c0_148 = arith.constant 0 : index
    %351 = vector.load %arg2[%c5_146, %c0_147, %c0_148] : memref<9x64x1xf32, #tpu.memory_space<vmem>>, vector<1x64x1xf32>
    %352 = vector.shape_cast %351 : vector<1x64x1xf32> to vector<64x1xf32>
    %353 = vector.broadcast %350 : vector<1x128xf32> to vector<64x128xf32>
    %354 = arith.mulf %349, %353 : vector<64x128xf32>
    %355 = vector.broadcast %352 : vector<64x1xf32> to vector<64x128xf32>
    %356 = arith.mulf %354, %355 : vector<64x128xf32>
    %357 = arith.addf %348, %356 : vector<64x128xf32>
    %c57_i32_149 = arith.constant 57 : i32
    %358 = tpu.dynamic_rotate %300 by %c57_i32_149 dim 0 : vector<64x128xf32>, i32 -> vector<64x128xf32>
    %c6_150 = arith.constant 6 : index
    %c0_151 = arith.constant 0 : index
    %359 = vector.load %arg16[%c6_150, %c0_151] : memref<9x128xf32, #tpu.memory_space<vmem>>, vector<1x128xf32>
    %c6_152 = arith.constant 6 : index
    %c0_153 = arith.constant 0 : index
    %c0_154 = arith.constant 0 : index
    %360 = vector.load %arg2[%c6_152, %c0_153, %c0_154] : memref<9x64x1xf32, #tpu.memory_space<vmem>>, vector<1x64x1xf32>
    %361 = vector.shape_cast %360 : vector<1x64x1xf32> to vector<64x1xf32>
    %362 = vector.broadcast %359 : vector<1x128xf32> to vector<64x128xf32>
    %363 = arith.mulf %358, %362 : vector<64x128xf32>
    %364 = vector.broadcast %361 : vector<64x1xf32> to vector<64x128xf32>
    %365 = arith.mulf %363, %364 : vector<64x128xf32>
    %366 = arith.addf %357, %365 : vector<64x128xf32>
    %c56_i32_155 = arith.constant 56 : i32
    %367 = tpu.dynamic_rotate %300 by %c56_i32_155 dim 0 : vector<64x128xf32>, i32 -> vector<64x128xf32>
    %c7_156 = arith.constant 7 : index
    %c0_157 = arith.constant 0 : index
    %368 = vector.load %arg16[%c7_156, %c0_157] : memref<9x128xf32, #tpu.memory_space<vmem>>, vector<1x128xf32>
    %c7_158 = arith.constant 7 : index
    %c0_159 = arith.constant 0 : index
    %c0_160 = arith.constant 0 : index
    %369 = vector.load %arg2[%c7_158, %c0_159, %c0_160] : memref<9x64x1xf32, #tpu.memory_space<vmem>>, vector<1x64x1xf32>
    %370 = vector.shape_cast %369 : vector<1x64x1xf32> to vector<64x1xf32>
    %371 = vector.broadcast %368 : vector<1x128xf32> to vector<64x128xf32>
    %372 = arith.mulf %367, %371 : vector<64x128xf32>
    %373 = vector.broadcast %370 : vector<64x1xf32> to vector<64x128xf32>
    %374 = arith.mulf %372, %373 : vector<64x128xf32>
    %375 = arith.addf %366, %374 : vector<64x128xf32>
    %c55_i32_161 = arith.constant 55 : i32
    %376 = tpu.dynamic_rotate %300 by %c55_i32_161 dim 0 : vector<64x128xf32>, i32 -> vector<64x128xf32>
    %c8_162 = arith.constant 8 : index
    %c0_163 = arith.constant 0 : index
    %377 = vector.load %arg16[%c8_162, %c0_163] : memref<9x128xf32, #tpu.memory_space<vmem>>, vector<1x128xf32>
    %c8_164 = arith.constant 8 : index
    %c0_165 = arith.constant 0 : index
    %c0_166 = arith.constant 0 : index
    %378 = vector.load %arg2[%c8_164, %c0_165, %c0_166] : memref<9x64x1xf32, #tpu.memory_space<vmem>>, vector<1x64x1xf32>
    %379 = vector.shape_cast %378 : vector<1x64x1xf32> to vector<64x1xf32>
    %380 = vector.broadcast %377 : vector<1x128xf32> to vector<64x128xf32>
    %381 = arith.mulf %376, %380 : vector<64x128xf32>
    %382 = vector.broadcast %379 : vector<64x1xf32> to vector<64x128xf32>
    %383 = arith.mulf %381, %382 : vector<64x128xf32>
    %384 = arith.addf %375, %383 : vector<64x128xf32>
    %cst_167 = arith.constant 5.000000e-01 : f32
    %385 = vector.broadcast %cst_167 : f32 to vector<64x128xf32>
    %386 = arith.mulf %385, %384 : vector<64x128xf32>
    %cst_168 = arith.constant 0.707106769 : f32
    %387 = vector.broadcast %cst_168 : f32 to vector<64x128xf32>
    %388 = arith.mulf %384, %387 : vector<64x128xf32>
    %cst_169 = arith.constant 0.000000e+00 : f32
    %389 = vector.broadcast %cst_169 : f32 to vector<64x128xf32>
    %390 = arith.cmpf oge, %388, %389 : vector<64x128xf32>
    %cst_170 = arith.constant 1.000000e+00 : f32
    %cst_171 = arith.constant -1.000000e+00 : f32
    %391 = vector.broadcast %cst_170 : f32 to vector<64x128xf32>
    %392 = vector.broadcast %cst_171 : f32 to vector<64x128xf32>
    %393 = arith.select %390, %391, %392 : vector<64x128xi1>, vector<64x128xf32>
    %394 = math.absf %388 : vector<64x128xf32>
    %cst_172 = arith.constant 0.327591091 : f32
    %395 = vector.broadcast %cst_172 : f32 to vector<64x128xf32>
    %396 = arith.mulf %395, %394 : vector<64x128xf32>
    %cst_173 = arith.constant 1.000000e+00 : f32
    %397 = vector.broadcast %cst_173 : f32 to vector<64x128xf32>
    %398 = arith.addf %397, %396 : vector<64x128xf32>
    %cst_174 = arith.constant 1.000000e+00 : f32
    %399 = vector.broadcast %cst_174 : f32 to vector<64x128xf32>
    %400 = arith.divf %399, %398 : vector<64x128xf32>
    %cst_175 = arith.constant 1.06140542 : f32
    %401 = vector.broadcast %cst_175 : f32 to vector<64x128xf32>
    %402 = arith.mulf %401, %400 : vector<64x128xf32>
    %cst_176 = arith.constant -1.45315206 : f32
    %403 = vector.broadcast %cst_176 : f32 to vector<64x128xf32>
    %404 = arith.addf %402, %403 : vector<64x128xf32>
    %405 = arith.mulf %404, %400 : vector<64x128xf32>
    %cst_177 = arith.constant 1.42141378 : f32
    %406 = vector.broadcast %cst_177 : f32 to vector<64x128xf32>
    %407 = arith.addf %405, %406 : vector<64x128xf32>
    %408 = arith.mulf %407, %400 : vector<64x128xf32>
    %cst_178 = arith.constant -0.284496725 : f32
    %409 = vector.broadcast %cst_178 : f32 to vector<64x128xf32>
    %410 = arith.addf %408, %409 : vector<64x128xf32>
    %411 = arith.mulf %410, %400 : vector<64x128xf32>
    %cst_179 = arith.constant 0.254829586 : f32
    %412 = vector.broadcast %cst_179 : f32 to vector<64x128xf32>
    %413 = arith.addf %411, %412 : vector<64x128xf32>
    %414 = arith.mulf %413, %400 : vector<64x128xf32>
    %cst_180 = arith.constant 0.000000e+00 : f32
    %415 = vector.broadcast %cst_180 : f32 to vector<64x128xf32>
    %416 = arith.subf %415, %394 : vector<64x128xf32>
    %417 = arith.mulf %416, %394 : vector<64x128xf32>
    %418 = math.exp %417 : vector<64x128xf32>
    %419 = arith.mulf %414, %418 : vector<64x128xf32>
    %cst_181 = arith.constant 1.000000e+00 : f32
    %420 = vector.broadcast %cst_181 : f32 to vector<64x128xf32>
    %421 = arith.subf %420, %419 : vector<64x128xf32>
    %422 = arith.mulf %393, %421 : vector<64x128xf32>
    %cst_182 = arith.constant 1.000000e+00 : f32
    %423 = vector.broadcast %cst_182 : f32 to vector<64x128xf32>
    %424 = arith.addf %423, %422 : vector<64x128xf32>
    %425 = arith.mulf %386, %424 : vector<64x128xf32>
    %426 = arith.truncf %425 : vector<64x128xf32> to vector<64x128xbf16>
    %c0_183 = arith.constant 0 : index
    %c0_184 = arith.constant 0 : index
    %427 = vector.load %arg18[%c0_183, %c0_184] : memref<128x32xbf16, #tpu.memory_space<vmem>>, vector<128x32xbf16>
    %cst_185 = arith.constant dense<0.000000e+00> : vector<64x32xf32>
    %428 = tpu.matmul %426, %427, %cst_185 {dimension_numbers = #tpu.dot_dimension_numbers<[1], [0], [0], [1], [0, 0, 1, 1], [], []>} : vector<64x128xbf16>, vector<128x32xbf16>, vector<64x32xf32> -> vector<64x32xf32>
    %c0_186 = arith.constant 0 : index
    %c0_187 = arith.constant 0 : index
    %429 = vector.load %arg19[%c0_186, %c0_187] : memref<1x32xf32, #tpu.memory_space<vmem>>, vector<1x32xf32>
    %430 = vector.broadcast %429 : vector<1x32xf32> to vector<64x32xf32>
    %431 = arith.addf %428, %430 : vector<64x32xf32>
    %432 = arith.addf %270, %431 : vector<64x32xf32>
    %c0_188 = arith.constant 0 : index
    %c0_189 = arith.constant 0 : index
    %c0_190 = arith.constant 0 : index
    %433 = vector.load %arg20[%c0_188, %c0_189, %c0_190] : memref<1x64x32xf32, #tpu.memory_space<vmem>>, vector<1x64x32xf32>
    %434 = vector.shape_cast %433 : vector<1x64x32xf32> to vector<64x32xf32>
    %435 = vector.shape_cast %432 : vector<64x32xf32> to vector<1x64x32xf32>
    tpu.vector_store %arg20[%c0_188, %c0_189, %c0_190], %435 {strides = array<i32>} : memref<1x64x32xf32, #tpu.memory_space<vmem>>, vector<1x64x32xf32>,
    return
  }
  func.func @transform_0(%arg0: i32) -> (i32, i32, i32) {
    %c0_i32 = arith.constant 0 : i32
    %c0_i32_0 = arith.constant 0 : i32
    %c0_i32_1 = arith.constant 0 : i32
    return %arg0, %c0_i32, %c0_i32_0 : i32, i32, i32
  }
  func.func @transform_1(%arg0: i32) -> (i32, i32, i32) {
    %c0_i32 = arith.constant 0 : i32
    %c0_i32_0 = arith.constant 0 : i32
    %c0_i32_1 = arith.constant 0 : i32
    %c0_i32_2 = arith.constant 0 : i32
    return %c0_i32, %c0_i32_0, %c0_i32_1 : i32, i32, i32
  }
  func.func @transform_2(%arg0: i32) -> (i32, i32) {
    %c0_i32 = arith.constant 0 : i32
    %c0_i32_0 = arith.constant 0 : i32
    %c0_i32_1 = arith.constant 0 : i32
    return %c0_i32, %c0_i32_0 : i32, i32
  }
  func.func @transform_3(%arg0: i32) -> (i32, i32) {
    %c0_i32 = arith.constant 0 : i32
    %c0_i32_0 = arith.constant 0 : i32
    %c0_i32_1 = arith.constant 0 : i32
    return %c0_i32, %c0_i32_0 : i32, i32
  }
  func.func @transform_4(%arg0: i32) -> (i32, i32) {
    %c0_i32 = arith.constant 0 : i32
    %c0_i32_0 = arith.constant 0 : i32
    %c0_i32_1 = arith.constant 0 : i32
    return %c0_i32, %c0_i32_0 : i32, i32
  }
  func.func @transform_5(%arg0: i32) -> (i32, i32) {
    %c0_i32 = arith.constant 0 : i32
    %c0_i32_0 = arith.constant 0 : i32
    %c0_i32_1 = arith.constant 0 : i32
    return %c0_i32, %c0_i32_0 : i32, i32
  }
  func.func @transform_6(%arg0: i32) -> (i32, i32) {
    %c0_i32 = arith.constant 0 : i32
    %c0_i32_0 = arith.constant 0 : i32
    %c0_i32_1 = arith.constant 0 : i32
    return %c0_i32, %c0_i32_0 : i32, i32
  }
  func.func @transform_7(%arg0: i32) -> (i32, i32) {
    %c0_i32 = arith.constant 0 : i32
    %c0_i32_0 = arith.constant 0 : i32
    %c0_i32_1 = arith.constant 0 : i32
    return %c0_i32, %c0_i32_0 : i32, i32
  }
  func.func @transform_8(%arg0: i32) -> (i32, i32) {
    %c0_i32 = arith.constant 0 : i32
    %c0_i32_0 = arith.constant 0 : i32
    %c0_i32_1 = arith.constant 0 : i32
    return %c0_i32, %c0_i32_0 : i32, i32
  }
  func.func @transform_9(%arg0: i32) -> (i32, i32) {
    %c0_i32 = arith.constant 0 : i32
    %c0_i32_0 = arith.constant 0 : i32
    %c0_i32_1 = arith.constant 0 : i32
    return %c0_i32, %c0_i32_0 : i32, i32
  }
  func.func @transform_10(%arg0: i32) -> (i32, i32) {
    %c0_i32 = arith.constant 0 : i32
    %c0_i32_0 = arith.constant 0 : i32
    %c0_i32_1 = arith.constant 0 : i32
    return %c0_i32, %c0_i32_0 : i32, i32
  }
  func.func @transform_11(%arg0: i32) -> (i32, i32) {
    %c0_i32 = arith.constant 0 : i32
    %c0_i32_0 = arith.constant 0 : i32
    %c0_i32_1 = arith.constant 0 : i32
    return %c0_i32, %c0_i32_0 : i32, i32
  }
  func.func @transform_12(%arg0: i32) -> (i32, i32) {
    %c0_i32 = arith.constant 0 : i32
    %c0_i32_0 = arith.constant 0 : i32
    %c0_i32_1 = arith.constant 0 : i32
    return %c0_i32, %c0_i32_0 : i32, i32
  }
  func.func @transform_13(%arg0: i32) -> (i32, i32) {
    %c0_i32 = arith.constant 0 : i32
    %c0_i32_0 = arith.constant 0 : i32
    %c0_i32_1 = arith.constant 0 : i32
    return %c0_i32, %c0_i32_0 : i32, i32
  }
  func.func @transform_14(%arg0: i32) -> (i32, i32) {
    %c0_i32 = arith.constant 0 : i32
    %c0_i32_0 = arith.constant 0 : i32
    %c0_i32_1 = arith.constant 0 : i32
    return %c0_i32, %c0_i32_0 : i32, i32
  }
  func.func @transform_15(%arg0: i32) -> (i32, i32) {
    %c0_i32 = arith.constant 0 : i32
    %c0_i32_0 = arith.constant 0 : i32
    %c0_i32_1 = arith.constant 0 : i32
    return %c0_i32, %c0_i32_0 : i32, i32
  }
  func.func @transform_16(%arg0: i32) -> (i32, i32) {
    %c0_i32 = arith.constant 0 : i32
    %c0_i32_0 = arith.constant 0 : i32
    %c0_i32_1 = arith.constant 0 : i32
    return %c0_i32, %c0_i32_0 : i32, i32
  }
  func.func @transform_17(%arg0: i32) -> (i32, i32) {
    %c0_i32 = arith.constant 0 : i32
    %c0_i32_0 = arith.constant 0 : i32
    %c0_i32_1 = arith.constant 0 : i32
    return %c0_i32, %c0_i32_0 : i32, i32
  }
  func.func @transform_18(%arg0: i32) -> (i32, i32) {
    %c0_i32 = arith.constant 0 : i32
    %c0_i32_0 = arith.constant 0 : i32
    %c0_i32_1 = arith.constant 0 : i32
    return %c0_i32, %c0_i32_0 : i32, i32
  }
  func.func @transform_19(%arg0: i32) -> (i32, i32, i32) {
    %c0_i32 = arith.constant 0 : i32
    %c0_i32_0 = arith.constant 0 : i32
    %c0_i32_1 = arith.constant 0 : i32
    return %arg0, %c0_i32, %c0_i32_0 : i32, i32, i32
  }
}

</mosaic_0001>

<llo_original>
// kernel: _lambda_.1
$region0: #{_lambda_.1}
  #allocation0 [shape = 'u32[]', space=smem, size = 0x4, offset = 0x4, fixed_abs, tag = 'smem constant byte address 0x4 - core index']
  #allocation1 [shape = 'u32[144,128]{1,0:T(1,128)}', space=vmem, size = 0x12000, scoped, tag = 'internal scratch']
  %s0 = inlined_call_operand.vmem [shape: f32[2,64,32], index: 0, kind: input, shape index: {}]
  %s1 = inlined_call_operand.hbm [shape: f32[9,64,1], index: 1, kind: input, shape index: {}]
  %s2 = inlined_call_operand.vmem [shape: f32[9,32], index: 2, kind: input, shape index: {}]
  %s3 = inlined_call_operand.vmem [shape: f32[1,32], index: 3, kind: input, shape index: {}]
  %s4 = inlined_call_operand.vmem [shape: f32[1,32], index: 4, kind: input, shape index: {}]
  %s5 = inlined_call_operand.vmem [shape: f32[1,32], index: 5, kind: input, shape index: {}]
  %s6 = inlined_call_operand.vmem [shape: f32[1,32], index: 6, kind: input, shape index: {}]
  %s7 = inlined_call_operand.vmem [shape: bf16[32,96], index: 7, kind: input, shape index: {}]
  %s8 = inlined_call_operand.vmem [shape: f32[1,96], index: 8, kind: input, shape index: {}]
  %s9 = inlined_call_operand.vmem [shape: bf16[32,32], index: 9, kind: input, shape index: {}]
  %s10 = inlined_call_operand.vmem [shape: f32[1,32], index: 10, kind: input, shape index: {}]
  %s11 = inlined_call_operand.vmem [shape: f32[1,32], index: 11, kind: input, shape index: {}]
  %s12 = inlined_call_operand.vmem [shape: f32[1,32], index: 12, kind: input, shape index: {}]
  %s13 = inlined_call_operand.vmem [shape: bf16[32,128], index: 13, kind: input, shape index: {}]
  %s14 = inlined_call_operand.vmem [shape: f32[1,128], index: 14, kind: input, shape index: {}]
  %s15 = inlined_call_operand.vmem [shape: f32[9,128], index: 15, kind: input, shape index: {}]
  %s16 = inlined_call_operand.vmem [shape: f32[1,128], index: 16, kind: input, shape index: {}]
  %s17 = inlined_call_operand.vmem [shape: bf16[128,32], index: 17, kind: input, shape index: {}]
  %s18 = inlined_call_operand.vmem [shape: f32[1,32], index: 18, kind: input, shape index: {}]
  %s19 = inlined_call_operand.hbm [shape: f32[2,64,32], index: 19, kind: output, shape index: {}]
  %s20 = sld [smem:[#allocation0]]
  $region113: #{_lambda_.1} parent=0
    _
  %s22 = ssub.s32 1, %s20
  %s23 = scalar_select 0, %s22, %s20
  $region1: #{_lambda_.1} parent=0
    #allocation2 [shape = 'u8[294912]{0}', space=vmem, size = 0x48000, scoped, tag = 'input window, operand 1, single buffered']
    #allocation3 [shape = 's32[2]{0}', space=sflag, size = 0x8, scoped, tag = 'scoped memory for _lambda_.1']
    #allocation4 [shape = 's32[2]{0}', space=sflag, size = 0x8, scoped, tag = 'scoped memory for _lambda_.1']
    #allocation5 [shape = 'u8[65536]{0}', space=vmem, size = 0x10000, scoped, tag = 'output window, operand 0']
    %24 = vsyncpa [#allocation3], 0
    %25 = vsyncpa [#allocation4], 0
    %s26 = scalar_lea.sflag [#allocation4], 1
    %27 = vsyncpa %s26, 0
    loop: start=0, step=1, limit=4
    $region2: #{_lambda_.1} parent=1 // loop_pre_header
      _
    $region3: #{_lambda_.1} parent=1 // loop_header
      %s29 = sphi 0, %s33
      %p30 = scmp.ge.s32.totalorder %s29, 4
      %s39 = sphi 0, %s41
      %s42 = sphi 0, %s39
      %s43 = sphi 0, %s42
      %s59 = sphi 0, %s43
      %s63 = sphi 0, %s63
      %s65 = sphi 0, %s63
      %s66 = sphi 0, %s65
      %s80 = sphi 0, %s66
      %s84 = sphi 0, %s84
      %s86 = sphi 0, %s84
      %s87 = sphi 0, %s86
      %s101 = sphi 0, %s87
      %s105 = sphi 0, %s105
      %s107 = sphi 0, %s105
      %s108 = sphi 0, %s107
      %s122 = sphi 0, %s108
      %s126 = sphi 0, %s126
      %s128 = sphi 0, %s126
      %s129 = sphi 0, %s128
      %s143 = sphi 0, %s129
      %s147 = sphi 0, %s147
      %s149 = sphi 0, %s147
      %s150 = sphi 0, %s149
      %s164 = sphi 0, %s150
      %s168 = sphi 0, %s168
      %s170 = sphi 0, %s168
      %s171 = sphi 0, %s170
      %s185 = sphi 0, %s171
      %s189 = sphi 0, %s189
      %s191 = sphi 0, %s189
      %s192 = sphi 0, %s191
      %s206 = sphi 0, %s192
      %s210 = sphi 0, %s210
      %s212 = sphi 0, %s210
      %s213 = sphi 0, %s212
      %s227 = sphi 0, %s213
      %s231 = sphi 0, %s231
      %s233 = sphi 0, %s231
      %s234 = sphi 0, %s233
      %s248 = sphi 0, %s234
      %s252 = sphi 0, %s252
      %s254 = sphi 0, %s252
      %s255 = sphi 0, %s254
      %s269 = sphi 0, %s255
      %s273 = sphi 0, %s273
      %s275 = sphi 0, %s273
      %s276 = sphi 0, %s275
      %s290 = sphi 0, %s276
      %s294 = sphi 0, %s294
      %s296 = sphi 0, %s294
      %s297 = sphi 0, %s296
      %s311 = sphi 0, %s297
      %s315 = sphi 0, %s315
      %s317 = sphi 0, %s315
      %s318 = sphi 0, %s317
      %s332 = sphi 0, %s318
      %s336 = sphi 0, %s336
      %s338 = sphi 0, %s336
      %s339 = sphi 0, %s338
      %s353 = sphi 0, %s339
      %s357 = sphi 0, %s357
      %s359 = sphi 0, %s357
      %s360 = sphi 0, %s359
      %s374 = sphi 0, %s360
      %s378 = sphi 0, %s378
      %s380 = sphi 0, %s378
      %s381 = sphi 0, %s380
      %s395 = sphi 0, %s381
      %s399 = sphi 0, %s399
      %s401 = sphi 0, %s399
      %s402 = sphi 0, %s401
      %s416 = sphi 0, %s402
      %s420 = sphi 0, %s420
      %s422 = sphi 0, %s420
      %s423 = sphi 0, %s422
      %s437 = sphi 0, %s423
      %s443 = sphi 0, %s445
      %s446 = sphi 0, %s443
      %s447 = sphi 0, %s446
      %s463 = sphi 0, %s447
    $region4: #{_lambda_.1} parent=1 // loop_header_branch
      %32 = sbr.rel (%p30) target = $region8
    $region5: #{_lambda_.1} parent=1 // loop_body
      %s34 = ssub.s32 %s29, 1
      %s35 = ssub.s32 %s29, 2
      %s36 = sadd.s32 %s29, 1
      %s37 = ssub.s32 %s29, %s36
      %p38 = scmp.eq.s32.totalorder %s37, 0
      %s40 = sadd.s32 %s39, 1
      %s41 = scalar_select %p38, %s39, %s40
      %p44 = pneg %p38
      %p45 = scmp.eq.s32.totalorder %s29, 1
      %p46 = por %p44, %p45
      %p47 = scmp.ne.s32.totalorder %s39, %s42
      %p48 = scmp.eq.s32.totalorder %s29, 0
      %p49 = por %p47, %p48
      %p50 = scmp.ne.s32.totalorder %s39, %s42
      %p51 = scmp.eq.s32.totalorder %s34, 1
      %p52 = por %p50, %p51
      %p53 = scmp.ne.s32.totalorder %s42, %s43
      %p54 = scmp.eq.s32.totalorder %s34, 0
      %p55 = por %p53, %p54
      %p56 = scmp.ne.s32.totalorder %s42, %s43
      %p57 = scmp.eq.s32.totalorder %s35, 1
      %p58 = por %p56, %p57
      %p60 = scmp.ne.s32.totalorder %s43, %s59
      %p61 = scmp.eq.s32.totalorder %s35, 0
      %p62 = por %p60, %p61
      %s64 = sadd.s32 %s63, 1
      %p67 = scmp.eq.s32.totalorder %s29, 1
      %p68 = scmp.ne.s32.totalorder %s63, %s65
      %p69 = scmp.eq.s32.totalorder %s29, 0
      %p70 = por %p68, %p69
      %p71 = scmp.ne.s32.totalorder %s63, %s65
      %p72 = scmp.eq.s32.totalorder %s34, 1
      %p73 = por %p71, %p72
      %p74 = scmp.ne.s32.totalorder %s65, %s66
      %p75 = scmp.eq.s32.totalorder %s34, 0
      %p76 = por %p74, %p75
      %p77 = scmp.ne.s32.totalorder %s65, %s66
      %p78 = scmp.eq.s32.totalorder %s35, 1
      %p79 = por %p77, %p78
      %p81 = scmp.ne.s32.totalorder %s66, %s80
      %p82 = scmp.eq.s32.totalorder %s35, 0
      %p83 = por %p81, %p82
      %s85 = sadd.s32 %s84, 1
      %p88 = scmp.eq.s32.totalorder %s29, 1
      %p89 = scmp.ne.s32.totalorder %s84, %s86
      %p90 = scmp.eq.s32.totalorder %s29, 0
      %p91 = por %p89, %p90
      %p92 = scmp.ne.s32.totalorder %s84, %s86
      %p93 = scmp.eq.s32.totalorder %s34, 1
      %p94 = por %p92, %p93
      %p95 = scmp.ne.s32.totalorder %s86, %s87
      %p96 = scmp.eq.s32.totalorder %s34, 0
      %p97 = por %p95, %p96
      %p98 = scmp.ne.s32.totalorder %s86, %s87
      %p99 = scmp.eq.s32.totalorder %s35, 1
      %p100 = por %p98, %p99
      %p102 = scmp.ne.s32.totalorder %s87, %s101
      %p103 = scmp.eq.s32.totalorder %s35, 0
      %p104 = por %p102, %p103
      %s106 = sadd.s32 %s105, 1
      %p109 = scmp.eq.s32.totalorder %s29, 1
      %p110 = scmp.ne.s32.totalorder %s105, %s107
      %p111 = scmp.eq.s32.totalorder %s29, 0
      %p112 = por %p110, %p111
      %p113 = scmp.ne.s32.totalorder %s105, %s107
      %p114 = scmp.eq.s32.totalorder %s34, 1
      %p115 = por %p113, %p114
      %p116 = scmp.ne.s32.totalorder %s107, %s108
      %p117 = scmp.eq.s32.totalorder %s34, 0
      %p118 = por %p116, %p117
      %p119 = scmp.ne.s32.totalorder %s107, %s108
      %p120 = scmp.eq.s32.totalorder %s35, 1
      %p121 = por %p119, %p120
      %p123 = scmp.ne.s32.totalorder %s108, %s122
      %p124 = scmp.eq.s32.totalorder %s35, 0
      %p125 = por %p123, %p124
      %s127 = sadd.s32 %s126, 1
      %p130 = scmp.eq.s32.totalorder %s29, 1
      %p131 = scmp.ne.s32.totalorder %s126, %s128
      %p132 = scmp.eq.s32.totalorder %s29, 0
      %p133 = por %p131, %p132
      %p134 = scmp.ne.s32.totalorder %s126, %s128
      %p135 = scmp.eq.s32.totalorder %s34, 1
      %p136 = por %p134, %p135
      %p137 = scmp.ne.s32.totalorder %s128, %s129
      %p138 = scmp.eq.s32.totalorder %s34, 0
      %p139 = por %p137, %p138
      %p140 = scmp.ne.s32.totalorder %s128, %s129
      %p141 = scmp.eq.s32.totalorder %s35, 1
      %p142 = por %p140, %p141
      %p144 = scmp.ne.s32.totalorder %s129, %s143
      %p145 = scmp.eq.s32.totalorder %s35, 0
      %p146 = por %p144, %p145
      %s148 = sadd.s32 %s147, 1
      %p151 = scmp.eq.s32.totalorder %s29, 1
      %p152 = scmp.ne.s32.totalorder %s147, %s149
      %p153 = scmp.eq.s32.totalorder %s29, 0
      %p154 = por %p152, %p153
      %p155 = scmp.ne.s32.totalorder %s147, %s149
      %p156 = scmp.eq.s32.totalorder %s34, 1
      %p157 = por %p155, %p156
      %p158 = scmp.ne.s32.totalorder %s149, %s150
      %p159 = scmp.eq.s32.totalorder %s34, 0
      %p160 = por %p158, %p159
      %p161 = scmp.ne.s32.totalorder %s149, %s150
      %p162 = scmp.eq.s32.totalorder %s35, 1
      %p163 = por %p161, %p162
      %p165 = scmp.ne.s32.totalorder %s150, %s164
      %p166 = scmp.eq.s32.totalorder %s35, 0
      %p167 = por %p165, %p166
      %s169 = sadd.s32 %s168, 1
      %p172 = scmp.eq.s32.totalorder %s29, 1
      %p173 = scmp.ne.s32.totalorder %s168, %s170
      %p174 = scmp.eq.s32.totalorder %s29, 0
      %p175 = por %p173, %p174
      %p176 = scmp.ne.s32.totalorder %s168, %s170
      %p177 = scmp.eq.s32.totalorder %s34, 1
      %p178 = por %p176, %p177
      %p179 = scmp.ne.s32.totalorder %s170, %s171
      %p180 = scmp.eq.s32.totalorder %s34, 0
      %p181 = por %p179, %p180
      %p182 = scmp.ne.s32.totalorder %s170, %s171
      %p183 = scmp.eq.s32.totalorder %s35, 1
      %p184 = por %p182, %p183
      %p186 = scmp.ne.s32.totalorder %s171, %s185
      %p187 = scmp.eq.s32.totalorder %s35, 0
      %p188 = por %p186, %p187
      %s190 = sadd.s32 %s189, 1
      %p193 = scmp.eq.s32.totalorder %s29, 1
      %p194 = scmp.ne.s32.totalorder %s189, %s191
      %p195 = scmp.eq.s32.totalorder %s29, 0
      %p196 = por %p194, %p195
      %p197 = scmp.ne.s32.totalorder %s189, %s191
      %p198 = scmp.eq.s32.totalorder %s34, 1
      %p199 = por %p197, %p198
      %p200 = scmp.ne.s32.totalorder %s191, %s192
      %p201 = scmp.eq.s32.totalorder %s34, 0
      %p202 = por %p200, %p201
      %p203 = scmp.ne.s32.totalorder %s191, %s192
      %p204 = scmp.eq.s32.totalorder %s35, 1
      %p205 = por %p203, %p204
      %p207 = scmp.ne.s32.totalorder %s192, %s206
      %p208 = scmp.eq.s32.totalorder %s35, 0
      %p209 = por %p207, %p208
      %s211 = sadd.s32 %s210, 1
      %p214 = scmp.eq.s32.totalorder %s29, 1
      %p215 = scmp.ne.s32.totalorder %s210, %s212
      %p216 = scmp.eq.s32.totalorder %s29, 0
      %p217 = por %p215, %p216
      %p218 = scmp.ne.s32.totalorder %s210, %s212
      %p219 = scmp.eq.s32.totalorder %s34, 1
      %p220 = por %p218, %p219
      %p221 = scmp.ne.s32.totalorder %s212, %s213
      %p222 = scmp.eq.s32.totalorder %s34, 0
      %p223 = por %p221, %p222
      %p224 = scmp.ne.s32.totalorder %s212, %s213
      %p225 = scmp.eq.s32.totalorder %s35, 1
      %p226 = por %p224, %p225
      %p228 = scmp.ne.s32.totalorder %s213, %s227
      %p229 = scmp.eq.s32.totalorder %s35, 0
      %p230 = por %p228, %p229
      %s232 = sadd.s32 %s231, 1
      %p235 = scmp.eq.s32.totalorder %s29, 1
      %p236 = scmp.ne.s32.totalorder %s231, %s233
      %p237 = scmp.eq.s32.totalorder %s29, 0
      %p238 = por %p236, %p237
      %p239 = scmp.ne.s32.totalorder %s231, %s233
      %p240 = scmp.eq.s32.totalorder %s34, 1
      %p241 = por %p239, %p240
      %p242 = scmp.ne.s32.totalorder %s233, %s234
      %p243 = scmp.eq.s32.totalorder %s34, 0
      %p244 = por %p242, %p243
      %p245 = scmp.ne.s32.totalorder %s233, %s234
      %p246 = scmp.eq.s32.totalorder %s35, 1
      %p247 = por %p245, %p246
      %p249 = scmp.ne.s32.totalorder %s234, %s248
      %p250 = scmp.eq.s32.totalorder %s35, 0
      %p251 = por %p249, %p250
      %s253 = sadd.s32 %s252, 1
      %p256 = scmp.eq.s32.totalorder %s29, 1
      %p257 = scmp.ne.s32.totalorder %s252, %s254
      %p258 = scmp.eq.s32.totalorder %s29, 0
      %p259 = por %p257, %p258
      %p260 = scmp.ne.s32.totalorder %s252, %s254
      %p261 = scmp.eq.s32.totalorder %s34, 1
      %p262 = por %p260, %p261
      %p263 = scmp.ne.s32.totalorder %s254, %s255
      %p264 = scmp.eq.s32.totalorder %s34, 0
      %p265 = por %p263, %p264
      %p266 = scmp.ne.s32.totalorder %s254, %s255
      %p267 = scmp.eq.s32.totalorder %s35, 1
      %p268 = por %p266, %p267
      %p270 = scmp.ne.s32.totalorder %s255, %s269
      %p271 = scmp.eq.s32.totalorder %s35, 0
      %p272 = por %p270, %p271
      %s274 = sadd.s32 %s273, 1
      %p277 = scmp.eq.s32.totalorder %s29, 1
      %p278 = scmp.ne.s32.totalorder %s273, %s275
      %p279 = scmp.eq.s32.totalorder %s29, 0
      %p280 = por %p278, %p279
      %p281 = scmp.ne.s32.totalorder %s273, %s275
      %p282 = scmp.eq.s32.totalorder %s34, 1
      %p283 = por %p281, %p282
      %p284 = scmp.ne.s32.totalorder %s275, %s276
      %p285 = scmp.eq.s32.totalorder %s34, 0
      %p286 = por %p284, %p285
      %p287 = scmp.ne.s32.totalorder %s275, %s276
      %p288 = scmp.eq.s32.totalorder %s35, 1
      %p289 = por %p287, %p288
      %p291 = scmp.ne.s32.totalorder %s276, %s290
      %p292 = scmp.eq.s32.totalorder %s35, 0
      %p293 = por %p291, %p292
      %s295 = sadd.s32 %s294, 1
      %p298 = scmp.eq.s32.totalorder %s29, 1
      %p299 = scmp.ne.s32.totalorder %s294, %s296
      %p300 = scmp.eq.s32.totalorder %s29, 0
      %p301 = por %p299, %p300
      %p302 = scmp.ne.s32.totalorder %s294, %s296
      %p303 = scmp.eq.s32.totalorder %s34, 1
      %p304 = por %p302, %p303
      %p305 = scmp.ne.s32.totalorder %s296, %s297
      %p306 = scmp.eq.s32.totalorder %s34, 0
      %p307 = por %p305, %p306
      %p308 = scmp.ne.s32.totalorder %s296, %s297
      %p309 = scmp.eq.s32.totalorder %s35, 1
      %p310 = por %p308, %p309
      %p312 = scmp.ne.s32.totalorder %s297, %s311
      %p313 = scmp.eq.s32.totalorder %s35, 0
      %p314 = por %p312, %p313
      %s316 = sadd.s32 %s315, 1
      %p319 = scmp.eq.s32.totalorder %s29, 1
      %p320 = scmp.ne.s32.totalorder %s315, %s317
      %p321 = scmp.eq.s32.totalorder %s29, 0
      %p322 = por %p320, %p321
      %p323 = scmp.ne.s32.totalorder %s315, %s317
      %p324 = scmp.eq.s32.totalorder %s34, 1
      %p325 = por %p323, %p324
      %p326 = scmp.ne.s32.totalorder %s317, %s318
      %p327 = scmp.eq.s32.totalorder %s34, 0
      %p328 = por %p326, %p327
      %p329 = scmp.ne.s32.totalorder %s317, %s318
      %p330 = scmp.eq.s32.totalorder %s35, 1
      %p331 = por %p329, %p330
      %p333 = scmp.ne.s32.totalorder %s318, %s332
      %p334 = scmp.eq.s32.totalorder %s35, 0
      %p335 = por %p333, %p334
      %s337 = sadd.s32 %s336, 1
      %p340 = scmp.eq.s32.totalorder %s29, 1
      %p341 = scmp.ne.s32.totalorder %s336, %s338
      %p342 = scmp.eq.s32.totalorder %s29, 0
      %p343 = por %p341, %p342
      %p344 = scmp.ne.s32.totalorder %s336, %s338
      %p345 = scmp.eq.s32.totalorder %s34, 1
      %p346 = por %p344, %p345
      %p347 = scmp.ne.s32.totalorder %s338, %s339
      %p348 = scmp.eq.s32.totalorder %s34, 0
      %p349 = por %p347, %p348
      %p350 = scmp.ne.s32.totalorder %s338, %s339
      %p351 = scmp.eq.s32.totalorder %s35, 1
      %p352 = por %p350, %p351
      %p354 = scmp.ne.s32.totalorder %s339, %s353
      %p355 = scmp.eq.s32.totalorder %s35, 0
      %p356 = por %p354, %p355
      %s358 = sadd.s32 %s357, 1
      %p361 = scmp.eq.s32.totalorder %s29, 1
      %p362 = scmp.ne.s32.totalorder %s357, %s359
      %p363 = scmp.eq.s32.totalorder %s29, 0
      %p364 = por %p362, %p363
      %p365 = scmp.ne.s32.totalorder %s357, %s359
      %p366 = scmp.eq.s32.totalorder %s34, 1
      %p367 = por %p365, %p366
      %p368 = scmp.ne.s32.totalorder %s359, %s360
      %p369 = scmp.eq.s32.totalorder %s34, 0
      %p370 = por %p368, %p369
      %p371 = scmp.ne.s32.totalorder %s359, %s360
      %p372 = scmp.eq.s32.totalorder %s35, 1
      %p373 = por %p371, %p372
      %p375 = scmp.ne.s32.totalorder %s360, %s374
      %p376 = scmp.eq.s32.totalorder %s35, 0
      %p377 = por %p375, %p376
      %s379 = sadd.s32 %s378, 1
      %p382 = scmp.eq.s32.totalorder %s29, 1
      %p383 = scmp.ne.s32.totalorder %s378, %s380
      %p384 = scmp.eq.s32.totalorder %s29, 0
      %p385 = por %p383, %p384
      %p386 = scmp.ne.s32.totalorder %s378, %s380
      %p387 = scmp.eq.s32.totalorder %s34, 1
      %p388 = por %p386, %p387
      %p389 = scmp.ne.s32.totalorder %s380, %s381
      %p390 = scmp.eq.s32.totalorder %s34, 0
      %p391 = por %p389, %p390
      %p392 = scmp.ne.s32.totalorder %s380, %s381
      %p393 = scmp.eq.s32.totalorder %s35, 1
      %p394 = por %p392, %p393
      %p396 = scmp.ne.s32.totalorder %s381, %s395
      %p397 = scmp.eq.s32.totalorder %s35, 0
      %p398 = por %p396, %p397
      %s400 = sadd.s32 %s399, 1
      %p403 = scmp.eq.s32.totalorder %s29, 1
      %p404 = scmp.ne.s32.totalorder %s399, %s401
      %p405 = scmp.eq.s32.totalorder %s29, 0
      %p406 = por %p404, %p405
      %p407 = scmp.ne.s32.totalorder %s399, %s401
      %p408 = scmp.eq.s32.totalorder %s34, 1
      %p409 = por %p407, %p408
      %p410 = scmp.ne.s32.totalorder %s401, %s402
      %p411 = scmp.eq.s32.totalorder %s34, 0
      %p412 = por %p410, %p411
      %p413 = scmp.ne.s32.totalorder %s401, %s402
      %p414 = scmp.eq.s32.totalorder %s35, 1
      %p415 = por %p413, %p414
      %p417 = scmp.ne.s32.totalorder %s402, %s416
      %p418 = scmp.eq.s32.totalorder %s35, 0
      %p419 = por %p417, %p418
      %s421 = sadd.s32 %s420, 1
      %p424 = scmp.eq.s32.totalorder %s29, 1
      %p425 = scmp.ne.s32.totalorder %s420, %s422
      %p426 = scmp.eq.s32.totalorder %s29, 0
      %p427 = por %p425, %p426
      %p428 = scmp.ne.s32.totalorder %s420, %s422
      %p429 = scmp.eq.s32.totalorder %s34, 1
      %p430 = por %p428, %p429
      %p431 = scmp.ne.s32.totalorder %s422, %s423
      %p432 = scmp.eq.s32.totalorder %s34, 0
      %p433 = por %p431, %p432
      %p434 = scmp.ne.s32.totalorder %s422, %s423
      %p435 = scmp.eq.s32.totalorder %s35, 1
      %p436 = por %p434, %p435
      %p438 = scmp.ne.s32.totalorder %s423, %s437
      %p439 = scmp.eq.s32.totalorder %s35, 0
      %p440 = por %p438, %p439
      %s441 = ssub.s32 %s29, %s36
      %p442 = scmp.eq.s32.totalorder %s441, 0
      %s444 = sadd.s32 %s443, 1
      %s445 = scalar_select %p442, %s443, %s444
      %p448 = pneg %p442
      %p449 = scmp.eq.s32.totalorder %s29, 1
      %p450 = por %p448, %p449
      %p451 = scmp.ne.s32.totalorder %s443, %s446
      %p452 = scmp.eq.s32.totalorder %s29, 0
      %p453 = por %p451, %p452
      %p454 = scmp.ne.s32.totalorder %s443, %s446
      %p455 = scmp.eq.s32.totalorder %s34, 1
      %p456 = por %p454, %p455
      %p457 = scmp.ne.s32.totalorder %s446, %s447
      %p458 = scmp.eq.s32.totalorder %s34, 0
      %p459 = por %p457, %p458
      %p460 = scmp.ne.s32.totalorder %s446, %s447
      %p461 = scmp.eq.s32.totalorder %s35, 1
      %p462 = por %p460, %p461
      %p464 = scmp.ne.s32.totalorder %s447, %s463
      %p465 = scmp.eq.s32.totalorder %s35, 0
      %p466 = por %p464, %p465
      %p467 = scmp.le.s32.totalorder 1, %s29
      %p468 = scmp.lt.s32.totalorder %s29, 3
      %p469 = pnand %p467, %p468
      %p470 = pneg %p469
      // Predicated region
      $region9: #{_lambda_.1} parent=5 // pred_check
        _
      $region10: #{_lambda_.1} parent=5 // pred_check_branch
        %472 = sbr.rel (%p469) target = $region12
      $region11: #{_lambda_.1} parent=5 // pred_region
        %s473 = ssub.s32 %s29, 1
        // Predicated region
        $region13: #{_lambda_.1} parent=11 // pred_check
          %p474 = pneg %p76
        $region14: #{_lambda_.1} parent=11 // pred_check_branch
          %476 = sbr.rel (%p474) target = $region16
        $region15: #{_lambda_.1} parent=11 // pred_region
          %s478 = ssub.s32 9216, 9216
          %479 = vsyncadd [#allocation3], %s478
          %s480 = sshll.u32 [#allocation2], 4
          %s481 = int_to_ptr.vmem [resolvable:$true] %s480
          %486 = dma.hbm_to_vmem [thread:$0]  %s1, 9216, %s481, [#allocation3], 128, 128, 8
        $region16: #{_lambda_.1} parent=11 // pred_fallthru
          _
        // Predicated region
        $region17: #{_lambda_.1} parent=11 // pred_check
          %p487 = pneg %p97
        $region18: #{_lambda_.1} parent=11 // pred_check_branch
          %489 = sbr.rel (%p487) target = $region20
        $region19: #{_lambda_.1} parent=11 // pred_region
          _
        $region20: #{_lambda_.1} parent=11 // pred_fallthru
          _
        // Predicated region
        $region21: #{_lambda_.1} parent=11 // pred_check
          %p490 = pneg %p118
        $region22: #{_lambda_.1} parent=11 // pred_check_branch
          %492 = sbr.rel (%p490) target = $region24
        $region23: #{_lambda_.1} parent=11 // pred_region
          _
        $region24: #{_lambda_.1} parent=11 // pred_fallthru
          _
        // Predicated region
        $region25: #{_lambda_.1} parent=11 // pred_check
          %p493 = pneg %p139
        $region26: #{_lambda_.1} parent=11 // pred_check_branch
          %495 = sbr.rel (%p493) target = $region28
        $region27: #{_lambda_.1} parent=11 // pred_region
          _
        $region28: #{_lambda_.1} parent=11 // pred_fallthru
          _
        // Predicated region
        $region29: #{_lambda_.1} parent=11 // pred_check
          %p496 = pneg %p160
        $region30: #{_lambda_.1} parent=11 // pred_check_branch
          %498 = sbr.rel (%p496) target = $region32
        $region31: #{_lambda_.1} parent=11 // pred_region
          _
        $region32: #{_lambda_.1} parent=11 // pred_fallthru
          _
        // Predicated region
        $region33: #{_lambda_.1} parent=11 // pred_check
          %p499 = pneg %p181
        $region34: #{_lambda_.1} parent=11 // pred_check_branch
          %501 = sbr.rel (%p499) target = $region36
        $region35: #{_lambda_.1} parent=11 // pred_region
          _
        $region36: #{_lambda_.1} parent=11 // pred_fallthru
          _
        // Predicated region
        $region37: #{_lambda_.1} parent=11 // pred_check
          %p502 = pneg %p202
        $region38: #{_lambda_.1} parent=11 // pred_check_branch
          %504 = sbr.rel (%p502) target = $region40
        $region39: #{_lambda_.1} parent=11 // pred_region
          _
        $region40: #{_lambda_.1} parent=11 // pred_fallthru
          _
        // Predicated region
        $region41: #{_lambda_.1} parent=11 // pred_check
          %p505 = pneg %p223
        $region42: #{_lambda_.1} parent=11 // pred_check_branch
          %507 = sbr.rel (%p505) target = $region44
        $region43: #{_lambda_.1} parent=11 // pred_region
          _
        $region44: #{_lambda_.1} parent=11 // pred_fallthru
          _
        // Predicated region
        $region45: #{_lambda_.1} parent=11 // pred_check
          %p508 = pneg %p244
        $region46: #{_lambda_.1} parent=11 // pred_check_branch
          %510 = sbr.rel (%p508) target = $region48
        $region47: #{_lambda_.1} parent=11 // pred_region
          _
        $region48: #{_lambda_.1} parent=11 // pred_fallthru
          _
        // Predicated region
        $region49: #{_lambda_.1} parent=11 // pred_check
          %p511 = pneg %p265
        $region50: #{_lambda_.1} parent=11 // pred_check_branch
          %513 = sbr.rel (%p511) target = $region52
        $region51: #{_lambda_.1} parent=11 // pred_region
          _
        $region52: #{_lambda_.1} parent=11 // pred_fallthru
          _
        // Predicated region
        $region53: #{_lambda_.1} parent=11 // pred_check
          %p514 = pneg %p286
        $region54: #{_lambda_.1} parent=11 // pred_check_branch
          %516 = sbr.rel (%p514) target = $region56
        $region55: #{_lambda_.1} parent=11 // pred_region
          _
        $region56: #{_lambda_.1} parent=11 // pred_fallthru
          _
        // Predicated region
        $region57: #{_lambda_.1} parent=11 // pred_check
          %p517 = pneg %p307
        $region58: #{_lambda_.1} parent=11 // pred_check_branch
          %519 = sbr.rel (%p517) target = $region60
        $region59: #{_lambda_.1} parent=11 // pred_region
          _
        $region60: #{_lambda_.1} parent=11 // pred_fallthru
          _
        // Predicated region
        $region61: #{_lambda_.1} parent=11 // pred_check
          %p520 = pneg %p328
        $region62: #{_lambda_.1} parent=11 // pred_check_branch
          %522 = sbr.rel (%p520) target = $region64
        $region63: #{_lambda_.1} parent=11 // pred_region
          _
        $region64: #{_lambda_.1} parent=11 // pred_fallthru
          _
        // Predicated region
        $region65: #{_lambda_.1} parent=11 // pred_check
          %p523 = pneg %p349
        $region66: #{_lambda_.1} parent=11 // pred_check_branch
          %525 = sbr.rel (%p523) target = $region68
        $region67: #{_lambda_.1} parent=11 // pred_region
          _
        $region68: #{_lambda_.1} parent=11 // pred_fallthru
          _
        // Predicated region
        $region69: #{_lambda_.1} parent=11 // pred_check
          %p526 = pneg %p370
        $region70: #{_lambda_.1} parent=11 // pred_check_branch
          %528 = sbr.rel (%p526) target = $region72
        $region71: #{_lambda_.1} parent=11 // pred_region
          _
        $region72: #{_lambda_.1} parent=11 // pred_fallthru
          _
        // Predicated region
        $region73: #{_lambda_.1} parent=11 // pred_check
          %p529 = pneg %p391
        $region74: #{_lambda_.1} parent=11 // pred_check_branch
          %531 = sbr.rel (%p529) target = $region76
        $region75: #{_lambda_.1} parent=11 // pred_region
          _
        $region76: #{_lambda_.1} parent=11 // pred_fallthru
          _
        // Predicated region
        $region77: #{_lambda_.1} parent=11 // pred_check
          %p532 = pneg %p412
        $region78: #{_lambda_.1} parent=11 // pred_check_branch
          %534 = sbr.rel (%p532) target = $region80
        $region79: #{_lambda_.1} parent=11 // pred_region
          _
        $region80: #{_lambda_.1} parent=11 // pred_fallthru
          _
        // Predicated region
        $region81: #{_lambda_.1} parent=11 // pred_check
          %p535 = pneg %p433
        $region82: #{_lambda_.1} parent=11 // pred_check_branch
          %537 = sbr.rel (%p535) target = $region84
        $region83: #{_lambda_.1} parent=11 // pred_region
          _
        $region84: #{_lambda_.1} parent=11 // pred_fallthru
          _
      $region12: #{_lambda_.1} parent=5 // pred_fallthru
        _
      %p538 = scmp.lt.s32.totalorder %s29, 2
      // Predicated region
      $region85: #{_lambda_.1} parent=5 // pred_check
        %p539 = pneg %p538
      $region86: #{_lambda_.1} parent=5 // pred_check_branch
        %541 = sbr.rel (%p539) target = $region88
      $region87: #{_lambda_.1} parent=5 // pred_region
        // Predicated region
        $region89: #{_lambda_.1} parent=87 // pred_check
          %p542 = pneg %p49
        $region90: #{_lambda_.1} parent=87 // pred_check_branch
          %544 = sbr.rel (%p542) target = $region92
        $region91: #{_lambda_.1} parent=87 // pred_region
          %p545 = scmp.lt.s32.totalorder %s29, 1
          %s546 = scalar_select %p545, %s29, 1
          %s547 = smul.addr %s546, 8
          %s548 = smul.addr %s547, 8
          %s549 = scalar_lea.vmem %s0, %s548
        $region92: #{_lambda_.1} parent=87 // pred_fallthru
          _
      $region88: #{_lambda_.1} parent=5 // pred_fallthru
        _
      %p550 = scmp.le.s32.totalorder 1, %s29
      %p551 = scmp.lt.s32.totalorder %s29, 3
      %p552 = pnand %p550, %p551
      %p553 = pneg %p552
      // Predicated region
      $region93: #{_lambda_.1} parent=5 // pred_check
        _
      $region94: #{_lambda_.1} parent=5 // pred_check_branch
        %555 = sbr.rel (%p552) target = $region96
      $region95: #{_lambda_.1} parent=5 // pred_region
        %s556 = ssub.s32 %s29, 1
        // Predicated region
        $region97: #{_lambda_.1} parent=95 // pred_check
          %p557 = pneg %p76
        $region98: #{_lambda_.1} parent=95 // pred_check_branch
          %559 = sbr.rel (%p557) target = $region100
        $region99: #{_lambda_.1} parent=95 // pred_region
          %560 = dma.done [#allocation3], 9216
        $region100: #{_lambda_.1} parent=95 // pred_fallthru
          _
        %p561 = scmp.lt.s32.totalorder %s34, 1
        %s562 = scalar_select %p561, %s34, 1
        %s563 = smul.addr %s562, 8
        %s564 = smul.addr %s563, 8
        %s565 = scalar_lea.vmem %s0, %s564
        %p566 = pneg %p55
        %p567 = pneg %p52
        %p568 = pneg %p76
        %p569 = pneg %p73
        %p570 = pneg %p97
        %p571 = pneg %p94
        %p572 = pneg %p118
        %p573 = pneg %p115
        %p574 = pneg %p139
        %p575 = pneg %p136
        %p576 = pneg %p160
        %p577 = pneg %p157
        %p578 = pneg %p181
        %p579 = pneg %p178
        %p580 = pneg %p202
        %p581 = pneg %p199
        %p582 = pneg %p223
        %p583 = pneg %p220
        %p584 = pneg %p244
        %p585 = pneg %p241
        %p586 = pneg %p265
        %p587 = pneg %p262
        %p588 = pneg %p286
        %p589 = pneg %p283
        %p590 = pneg %p307
        %p591 = pneg %p304
        %p592 = pneg %p328
        %p593 = pneg %p325
        %p594 = pneg %p349
        %p595 = pneg %p346
        %p596 = pneg %p370
        %p597 = pneg %p367
        %p598 = pneg %p391
        %p599 = pneg %p388
        %p600 = pneg %p412
        %p601 = pneg %p409
        %p602 = pneg %p433
        %p603 = pneg %p430
        %p604 = pneg %p459
        %p605 = pneg %p456
        %s606 = sand.u32 %s446, 1
        %s607 = scalar_lea.sflag [#allocation4], %s606
        %s608 = sand.u32 %s446, 1
        %s609 = smul.addr %s608, 64
        %s610 = scalar_lea.vmem [#allocation5], %s609
        %p611 = scmp.lt.s32.totalorder %s34, 1
        %s612 = scalar_select %p611, %s34, 1
        %s613 = smul.addr %s612, 8
        %s614 = smul.addr %s613, 8
        %s615 = scalar_lea.vmem %s0, %s614
        %v619 = vld [vmem:[%s615] sm:$0xff]
        %v620 = vld [vmem:[%s615 + $0x8] sm:$0xff]
        %v621 = vld [vmem:[%s615 + $0x10] sm:$0xff]
        %v622 = vld [vmem:[%s615 + $0x18] sm:$0xff]
        %v623 = vld [vmem:[%s615 + $0x20] sm:$0xff]
        %v624 = vld [vmem:[%s615 + $0x28] sm:$0xff]
        %v625 = vld [vmem:[%s615 + $0x30] sm:$0xff]
        %v626 = vld [vmem:[%s615 + $0x38] sm:$0xff]
        %v627 = vrot.slane %v619, 7
        %v628 = vrot.slane %v620, 7
        %v629 = vrot.slane %v621, 7
        %v630 = vrot.slane %v622, 7
        %v631 = vrot.slane %v623, 7
        %v632 = vrot.slane %v624, 7
        %v633 = vrot.slane %v625, 7
        %v634 = vrot.slane %v626, 7
        %v635 = vlaneseq
        %v636 = vshrl.u32 %v635, 7
        %vm637 = vcmp.lt.s32.totalorder %v636, 1
        %v638 = vsel %vm637, %v633, %v634
        %v639 = vsel %vm637, %v632, %v633
        %v640 = vsel %vm637, %v631, %v632
        %v641 = vsel %vm637, %v630, %v631
        %v642 = vsel %vm637, %v629, %v630
        %v643 = vsel %vm637, %v628, %v629
        %v644 = vsel %vm637, %v627, %v628
        %v645 = vsel %vm637, %v634, %v627
        %v646 = vld [vmem:[%s2] sm:$0x1]
        %v647 = vld [vmem:[#allocation2] sm:$0xff]
        %v648 = vld [vmem:[#allocation2 + $0x8] sm:$0xff]
        %v649 = vld [vmem:[#allocation2 + $0x10] sm:$0xff]
        %v650 = vld [vmem:[#allocation2 + $0x18] sm:$0xff]
        %v651 = vld [vmem:[#allocation2 + $0x20] sm:$0xff]
        %v652 = vld [vmem:[#allocation2 + $0x28] sm:$0xff]
        %v653 = vld [vmem:[#allocation2 + $0x30] sm:$0xff]
        %v654 = vld [vmem:[#allocation2 + $0x38] sm:$0xff]
        %v655 = vlaneseq
        %v656 = vshrl.u32 %v655, 7
        %v657 = vsub.s32 0, %v656
        %v658 = vrot.slane %v646, %v657
        %v659 = vmul.f32 %v638, %v658
        %v660 = vmul.f32 %v645, %v658
        %v661 = vmul.f32 %v644, %v658
        %v662 = vmul.f32 %v643, %v658
        %v663 = vmul.f32 %v642, %v658
        %v664 = vmul.f32 %v641, %v658
        %v665 = vmul.f32 %v640, %v658
        %v666 = vmul.f32 %v639, %v658
        %668 = vset.pattern.permute.xlu0 0
        %669 = vperm.xlu0 %668, %v647
        %v670 = vpop.permute.xlu0 %669
        %673 = vset.pattern.permute.xlu0 0
        %674 = vperm.xlu0 %673, %v648
        %v675 = vpop.permute.xlu0 %674
        %678 = vset.pattern.permute.xlu0 0
        %679 = vperm.xlu0 %678, %v649
        %v680 = vpop.permute.xlu0 %679
        %683 = vset.pattern.permute.xlu0 0
        %684 = vperm.xlu0 %683, %v650
        %v685 = vpop.permute.xlu0 %684
        %688 = vset.pattern.permute.xlu0 0
        %689 = vperm.xlu0 %688, %v651
        %v690 = vpop.permute.xlu0 %689
        %693 = vset.pattern.permute.xlu0 0
        %694 = vperm.xlu0 %693, %v652
        %v695 = vpop.permute.xlu0 %694
        %698 = vset.pattern.permute.xlu0 0
        %699 = vperm.xlu0 %698, %v653
        %v700 = vpop.permute.xlu0 %699
        %703 = vset.pattern.permute.xlu0 0
        %704 = vperm.xlu0 %703, %v654
        %v705 = vpop.permute.xlu0 %704
        %v707 = vmul.f32 %v659, %v670
        %v708 = vmul.f32 %v660, %v675
        %v709 = vmul.f32 %v661, %v680
        %v710 = vmul.f32 %v662, %v685
        %v711 = vmul.f32 %v663, %v690
        %v712 = vmul.f32 %v664, %v695
        %v713 = vmul.f32 %v665, %v700
        %v714 = vmul.f32 %v666, %v705
        %v715 = vadd.f32 %v707, 0.0
        %v716 = vadd.f32 %v708, 0.0
        %v717 = vadd.f32 %v709, 0.0
        %v718 = vadd.f32 %v710, 0.0
        %v719 = vadd.f32 %v711, 0.0
        %v720 = vadd.f32 %v712, 0.0
        %v721 = vadd.f32 %v713, 0.0
        %v722 = vadd.f32 %v714, 0.0
        %v723 = vld [vmem:[%s2 + $0x1] sm:$0x1]
        %s724 = scalar_lea.vmem [#allocation2], 64
        %v725 = vld [vmem:[%s724] sm:$0xff]
        %v726 = vld [vmem:[%s724 + $0x8] sm:$0xff]
        %v727 = vld [vmem:[%s724 + $0x10] sm:$0xff]
        %v728 = vld [vmem:[%s724 + $0x18] sm:$0xff]
        %v729 = vld [vmem:[%s724 + $0x20] sm:$0xff]
        %v730 = vld [vmem:[%s724 + $0x28] sm:$0xff]
        %v731 = vld [vmem:[%s724 + $0x30] sm:$0xff]
        %v732 = vld [vmem:[%s724 + $0x38] sm:$0xff]
        %v733 = vlaneseq
        %v734 = vshrl.u32 %v733, 7
        %v735 = vsub.s32 0, %v734
        %v736 = vrot.slane %v723, %v735
        %v737 = vmul.f32 %v626, %v736
        %v738 = vmul.f32 %v619, %v736
        %v739 = vmul.f32 %v620, %v736
        %v740 = vmul.f32 %v621, %v736
        %v741 = vmul.f32 %v622, %v736
        %v742 = vmul.f32 %v623, %v736
        %v743 = vmul.f32 %v624, %v736
        %v744 = vmul.f32 %v625, %v736
        %746 = vset.pattern.permute.xlu0 0
        %747 = vperm.xlu0 %746, %v725
        %v748 = vpop.permute.xlu0 %747
        %751 = vset.pattern.permute.xlu0 0
        %752 = vperm.xlu0 %751, %v726
        %v753 = vpop.permute.xlu0 %752
        %756 = vset.pattern.permute.xlu0 0
        %757 = vperm.xlu0 %756, %v727
        %v758 = vpop.permute.xlu0 %757
        %761 = vset.pattern.permute.xlu0 0
        %762 = vperm.xlu0 %761, %v728
        %v763 = vpop.permute.xlu0 %762
        %766 = vset.pattern.permute.xlu0 0
        %767 = vperm.xlu0 %766, %v729
        %v768 = vpop.permute.xlu0 %767
        %771 = vset.pattern.permute.xlu0 0
        %772 = vperm.xlu0 %771, %v730
        %v773 = vpop.permute.xlu0 %772
        %776 = vset.pattern.permute.xlu0 0
        %777 = vperm.xlu0 %776, %v731
        %v778 = vpop.permute.xlu0 %777
        %781 = vset.pattern.permute.xlu0 0
        %782 = vperm.xlu0 %781, %v732
        %v783 = vpop.permute.xlu0 %782
        %v785 = vmul.f32 %v737, %v748
        %v786 = vmul.f32 %v738, %v753
        %v787 = vmul.f32 %v739, %v758
        %v788 = vmul.f32 %v740, %v763
        %v789 = vmul.f32 %v741, %v768
        %v790 = vmul.f32 %v742, %v773
        %v791 = vmul.f32 %v743, %v778
        %v792 = vmul.f32 %v744, %v783
        %v793 = vadd.f32 %v715, %v785
        %v794 = vadd.f32 %v716, %v786
        %v795 = vadd.f32 %v717, %v787
        %v796 = vadd.f32 %v718, %v788
        %v797 = vadd.f32 %v719, %v789
        %v798 = vadd.f32 %v720, %v790
        %v799 = vadd.f32 %v721, %v791
        %v800 = vadd.f32 %v722, %v792
        %v801 = vrot.slane %v619, 1
        %v802 = vrot.slane %v620, 1
        %v803 = vrot.slane %v621, 1
        %v804 = vrot.slane %v622, 1
        %v805 = vrot.slane %v623, 1
        %v806 = vrot.slane %v624, 1
        %v807 = vrot.slane %v625, 1
        %v808 = vrot.slane %v626, 1
        %vm809 = vcmp.lt.s32.totalorder %v636, 7
        %v810 = vsel %vm809, %v807, %v808
        %v811 = vsel %vm809, %v806, %v807
        %v812 = vsel %vm809, %v805, %v806
        %v813 = vsel %vm809, %v804, %v805
        %v814 = vsel %vm809, %v803, %v804
        %v815 = vsel %vm809, %v802, %v803
        %v816 = vsel %vm809, %v801, %v802
        %v817 = vsel %vm809, %v808, %v801
        %v818 = vld [vmem:[%s2 + $0x2] sm:$0x1]
        %s819 = scalar_lea.vmem [#allocation2], 128
        %v820 = vld [vmem:[%s819] sm:$0xff]
        %v821 = vld [vmem:[%s819 + $0x8] sm:$0xff]
        %v822 = vld [vmem:[%s819 + $0x10] sm:$0xff]
        %v823 = vld [vmem:[%s819 + $0x18] sm:$0xff]
        %v824 = vld [vmem:[%s819 + $0x20] sm:$0xff]
        %v825 = vld [vmem:[%s819 + $0x28] sm:$0xff]
        %v826 = vld [vmem:[%s819 + $0x30] sm:$0xff]
        %v827 = vld [vmem:[%s819 + $0x38] sm:$0xff]
        %v828 = vlaneseq
        %v829 = vshrl.u32 %v828, 7
        %v830 = vsub.s32 0, %v829
        %v831 = vrot.slane %v818, %v830
        %v832 = vmul.f32 %v817, %v831
        %v833 = vmul.f32 %v816, %v831
        %v834 = vmul.f32 %v815, %v831
        %v835 = vmul.f32 %v814, %v831
        %v836 = vmul.f32 %v813, %v831
        %v837 = vmul.f32 %v812, %v831
        %v838 = vmul.f32 %v811, %v831
        %v839 = vmul.f32 %v810, %v831
        %841 = vset.pattern.permute.xlu0 0
        %842 = vperm.xlu0 %841, %v820
        %v843 = vpop.permute.xlu0 %842
        %846 = vset.pattern.permute.xlu0 0
        %847 = vperm.xlu0 %846, %v821
        %v848 = vpop.permute.xlu0 %847
        %851 = vset.pattern.permute.xlu0 0
        %852 = vperm.xlu0 %851, %v822
        %v853 = vpop.permute.xlu0 %852
        %856 = vset.pattern.permute.xlu0 0
        %857 = vperm.xlu0 %856, %v823
        %v858 = vpop.permute.xlu0 %857
        %861 = vset.pattern.permute.xlu0 0
        %862 = vperm.xlu0 %861, %v824
        %v863 = vpop.permute.xlu0 %862
        %866 = vset.pattern.permute.xlu0 0
        %867 = vperm.xlu0 %866, %v825
        %v868 = vpop.permute.xlu0 %867
        %871 = vset.pattern.permute.xlu0 0
        %872 = vperm.xlu0 %871, %v826
        %v873 = vpop.permute.xlu0 %872
        %876 = vset.pattern.permute.xlu0 0
        %877 = vperm.xlu0 %876, %v827
        %v878 = vpop.permute.xlu0 %877
        %v880 = vmul.f32 %v832, %v843
        %v881 = vmul.f32 %v833, %v848
        %v882 = vmul.f32 %v834, %v853
        %v883 = vmul.f32 %v835, %v858
        %v884 = vmul.f32 %v836, %v863
        %v885 = vmul.f32 %v837, %v868
        %v886 = vmul.f32 %v838, %v873
        %v887 = vmul.f32 %v839, %v878
        %v888 = vadd.f32 %v793, %v880
        %v889 = vadd.f32 %v794, %v881
        %v890 = vadd.f32 %v795, %v882
        %v891 = vadd.f32 %v796, %v883
        %v892 = vadd.f32 %v797, %v884
        %v893 = vadd.f32 %v798, %v885
        %v894 = vadd.f32 %v799, %v886
        %v895 = vadd.f32 %v800, %v887
        %v896 = vld [vmem:[%s2 + $0x3] sm:$0x1]
        %s897 = scalar_lea.vmem [#allocation2], 192
        %v898 = vld [vmem:[%s897] sm:$0xff]
        %v899 = vld [vmem:[%s897 + $0x8] sm:$0xff]
        %v900 = vld [vmem:[%s897 + $0x10] sm:$0xff]
        %v901 = vld [vmem:[%s897 + $0x18] sm:$0xff]
        %v902 = vld [vmem:[%s897 + $0x20] sm:$0xff]
        %v903 = vld [vmem:[%s897 + $0x28] sm:$0xff]
        %v904 = vld [vmem:[%s897 + $0x30] sm:$0xff]
        %v905 = vld [vmem:[%s897 + $0x38] sm:$0xff]
        %v906 = vlaneseq
        %v907 = vshrl.u32 %v906, 7
        %v908 = vsub.s32 0, %v907
        %v909 = vrot.slane %v896, %v908
        %v910 = vmul.f32 %v645, %v909
        %v911 = vmul.f32 %v644, %v909
        %v912 = vmul.f32 %v643, %v909
        %v913 = vmul.f32 %v642, %v909
        %v914 = vmul.f32 %v641, %v909
        %v915 = vmul.f32 %v640, %v909
        %v916 = vmul.f32 %v639, %v909
        %v917 = vmul.f32 %v638, %v909
        %919 = vset.pattern.permute.xlu0 0
        %920 = vperm.xlu0 %919, %v898
        %v921 = vpop.permute.xlu0 %920
        %924 = vset.pattern.permute.xlu0 0
        %925 = vperm.xlu0 %924, %v899
        %v926 = vpop.permute.xlu0 %925
        %929 = vset.pattern.permute.xlu0 0
        %930 = vperm.xlu0 %929, %v900
        %v931 = vpop.permute.xlu0 %930
        %934 = vset.pattern.permute.xlu0 0
        %935 = vperm.xlu0 %934, %v901
        %v936 = vpop.permute.xlu0 %935
        %939 = vset.pattern.permute.xlu0 0
        %940 = vperm.xlu0 %939, %v902
        %v941 = vpop.permute.xlu0 %940
        %944 = vset.pattern.permute.xlu0 0
        %945 = vperm.xlu0 %944, %v903
        %v946 = vpop.permute.xlu0 %945
        %949 = vset.pattern.permute.xlu0 0
        %950 = vperm.xlu0 %949, %v904
        %v951 = vpop.permute.xlu0 %950
        %954 = vset.pattern.permute.xlu0 0
        %955 = vperm.xlu0 %954, %v905
        %v956 = vpop.permute.xlu0 %955
        %v958 = vmul.f32 %v910, %v921
        %v959 = vmul.f32 %v911, %v926
        %v960 = vmul.f32 %v912, %v931
        %v961 = vmul.f32 %v913, %v936
        %v962 = vmul.f32 %v914, %v941
        %v963 = vmul.f32 %v915, %v946
        %v964 = vmul.f32 %v916, %v951
        %v965 = vmul.f32 %v917, %v956
        %v966 = vadd.f32 %v888, %v958
        %v967 = vadd.f32 %v889, %v959
        %v968 = vadd.f32 %v890, %v960
        %v969 = vadd.f32 %v891, %v961
        %v970 = vadd.f32 %v892, %v962
        %v971 = vadd.f32 %v893, %v963
        %v972 = vadd.f32 %v894, %v964
        %v973 = vadd.f32 %v895, %v965
        %v974 = vld [vmem:[%s2 + $0x4] sm:$0x1]
        %s975 = scalar_lea.vmem [#allocation2], 256
        %v976 = vld [vmem:[%s975] sm:$0xff]
        %v977 = vld [vmem:[%s975 + $0x8] sm:$0xff]
        %v978 = vld [vmem:[%s975 + $0x10] sm:$0xff]
        %v979 = vld [vmem:[%s975 + $0x18] sm:$0xff]
        %v980 = vld [vmem:[%s975 + $0x20] sm:$0xff]
        %v981 = vld [vmem:[%s975 + $0x28] sm:$0xff]
        %v982 = vld [vmem:[%s975 + $0x30] sm:$0xff]
        %v983 = vld [vmem:[%s975 + $0x38] sm:$0xff]
        %v984 = vlaneseq
        %v985 = vshrl.u32 %v984, 7
        %v986 = vsub.s32 0, %v985
        %v987 = vrot.slane %v974, %v986
        %v988 = vmul.f32 %v619, %v987
        %v989 = vmul.f32 %v620, %v987
        %v990 = vmul.f32 %v621, %v987
        %v991 = vmul.f32 %v622, %v987
        %v992 = vmul.f32 %v623, %v987
        %v993 = vmul.f32 %v624, %v987
        %v994 = vmul.f32 %v625, %v987
        %v995 = vmul.f32 %v626, %v987
        %997 = vset.pattern.permute.xlu0 0
        %998 = vperm.xlu0 %997, %v976
        %v999 = vpop.permute.xlu0 %998
        %1002 = vset.pattern.permute.xlu0 0
        %1003 = vperm.xlu0 %1002, %v977
        %v1004 = vpop.permute.xlu0 %1003
        %1007 = vset.pattern.permute.xlu0 0
        %1008 = vperm.xlu0 %1007, %v978
        %v1009 = vpop.permute.xlu0 %1008
        %1012 = vset.pattern.permute.xlu0 0
        %1013 = vperm.xlu0 %1012, %v979
        %v1014 = vpop.permute.xlu0 %1013
        %1017 = vset.pattern.permute.xlu0 0
        %1018 = vperm.xlu0 %1017, %v980
        %v1019 = vpop.permute.xlu0 %1018
        %1022 = vset.pattern.permute.xlu0 0
        %1023 = vperm.xlu0 %1022, %v981
        %v1024 = vpop.permute.xlu0 %1023
        %1027 = vset.pattern.permute.xlu0 0
        %1028 = vperm.xlu0 %1027, %v982
        %v1029 = vpop.permute.xlu0 %1028
        %1032 = vset.pattern.permute.xlu0 0
        %1033 = vperm.xlu0 %1032, %v983
        %v1034 = vpop.permute.xlu0 %1033
        %v1036 = vmul.f32 %v988, %v999
        %v1037 = vmul.f32 %v989, %v1004
        %v1038 = vmul.f32 %v990, %v1009
        %v1039 = vmul.f32 %v991, %v1014
        %v1040 = vmul.f32 %v992, %v1019
        %v1041 = vmul.f32 %v993, %v1024
        %v1042 = vmul.f32 %v994, %v1029
        %v1043 = vmul.f32 %v995, %v1034
        %v1044 = vadd.f32 %v966, %v1036
        %v1045 = vadd.f32 %v967, %v1037
        %v1046 = vadd.f32 %v968, %v1038
        %v1047 = vadd.f32 %v969, %v1039
        %v1048 = vadd.f32 %v970, %v1040
        %v1049 = vadd.f32 %v971, %v1041
        %v1050 = vadd.f32 %v972, %v1042
        %v1051 = vadd.f32 %v973, %v1043
        %v1052 = vld [vmem:[%s2 + $0x5] sm:$0x1]
        %s1053 = scalar_lea.vmem [#allocation2], 320
        %v1054 = vld [vmem:[%s1053] sm:$0xff]
        %v1055 = vld [vmem:[%s1053 + $0x8] sm:$0xff]
        %v1056 = vld [vmem:[%s1053 + $0x10] sm:$0xff]
        %v1057 = vld [vmem:[%s1053 + $0x18] sm:$0xff]
        %v1058 = vld [vmem:[%s1053 + $0x20] sm:$0xff]
        %v1059 = vld [vmem:[%s1053 + $0x28] sm:$0xff]
        %v1060 = vld [vmem:[%s1053 + $0x30] sm:$0xff]
        %v1061 = vld [vmem:[%s1053 + $0x38] sm:$0xff]
        %v1062 = vlaneseq
        %v1063 = vshrl.u32 %v1062, 7
        %v1064 = vsub.s32 0, %v1063
        %v1065 = vrot.slane %v1052, %v1064
        %v1066 = vmul.f32 %v816, %v1065
        %v1067 = vmul.f32 %v815, %v1065
        %v1068 = vmul.f32 %v814, %v1065
        %v1069 = vmul.f32 %v813, %v1065
        %v1070 = vmul.f32 %v812, %v1065
        %v1071 = vmul.f32 %v811, %v1065
        %v1072 = vmul.f32 %v810, %v1065
        %v1073 = vmul.f32 %v817, %v1065
        %1075 = vset.pattern.permute.xlu0 0
        %1076 = vperm.xlu0 %1075, %v1054
        %v1077 = vpop.permute.xlu0 %1076
        %1080 = vset.pattern.permute.xlu0 0
        %1081 = vperm.xlu0 %1080, %v1055
        %v1082 = vpop.permute.xlu0 %1081
        %1085 = vset.pattern.permute.xlu0 0
        %1086 = vperm.xlu0 %1085, %v1056
        %v1087 = vpop.permute.xlu0 %1086
        %1090 = vset.pattern.permute.xlu0 0
        %1091 = vperm.xlu0 %1090, %v1057
        %v1092 = vpop.permute.xlu0 %1091
        %1095 = vset.pattern.permute.xlu0 0
        %1096 = vperm.xlu0 %1095, %v1058
        %v1097 = vpop.permute.xlu0 %1096
        %1100 = vset.pattern.permute.xlu0 0
        %1101 = vperm.xlu0 %1100, %v1059
        %v1102 = vpop.permute.xlu0 %1101
        %1105 = vset.pattern.permute.xlu0 0
        %1106 = vperm.xlu0 %1105, %v1060
        %v1107 = vpop.permute.xlu0 %1106
        %1110 = vset.pattern.permute.xlu0 0
        %1111 = vperm.xlu0 %1110, %v1061
        %v1112 = vpop.permute.xlu0 %1111
        %v1114 = vmul.f32 %v1066, %v1077
        %v1115 = vmul.f32 %v1067, %v1082
        %v1116 = vmul.f32 %v1068, %v1087
        %v1117 = vmul.f32 %v1069, %v1092
        %v1118 = vmul.f32 %v1070, %v1097
        %v1119 = vmul.f32 %v1071, %v1102
        %v1120 = vmul.f32 %v1072, %v1107
        %v1121 = vmul.f32 %v1073, %v1112
        %v1122 = vadd.f32 %v1044, %v1114
        %v1123 = vadd.f32 %v1045, %v1115
        %v1124 = vadd.f32 %v1046, %v1116
        %v1125 = vadd.f32 %v1047, %v1117
        %v1126 = vadd.f32 %v1048, %v1118
        %v1127 = vadd.f32 %v1049, %v1119
        %v1128 = vadd.f32 %v1050, %v1120
        %v1129 = vadd.f32 %v1051, %v1121
        %v1130 = vld [vmem:[%s2 + $0x6] sm:$0x1]
        %s1131 = scalar_lea.vmem [#allocation2], 384
        %v1132 = vld [vmem:[%s1131] sm:$0xff]
        %v1133 = vld [vmem:[%s1131 + $0x8] sm:$0xff]
        %v1134 = vld [vmem:[%s1131 + $0x10] sm:$0xff]
        %v1135 = vld [vmem:[%s1131 + $0x18] sm:$0xff]
        %v1136 = vld [vmem:[%s1131 + $0x20] sm:$0xff]
        %v1137 = vld [vmem:[%s1131 + $0x28] sm:$0xff]
        %v1138 = vld [vmem:[%s1131 + $0x30] sm:$0xff]
        %v1139 = vld [vmem:[%s1131 + $0x38] sm:$0xff]
        %v1140 = vlaneseq
        %v1141 = vshrl.u32 %v1140, 7
        %v1142 = vsub.s32 0, %v1141
        %v1143 = vrot.slane %v1130, %v1142
        %v1144 = vmul.f32 %v644, %v1143
        %v1145 = vmul.f32 %v643, %v1143
        %v1146 = vmul.f32 %v642, %v1143
        %v1147 = vmul.f32 %v641, %v1143
        %v1148 = vmul.f32 %v640, %v1143
        %v1149 = vmul.f32 %v639, %v1143
        %v1150 = vmul.f32 %v638, %v1143
        %v1151 = vmul.f32 %v645, %v1143
        %1153 = vset.pattern.permute.xlu0 0
        %1154 = vperm.xlu0 %1153, %v1132
        %v1155 = vpop.permute.xlu0 %1154
        %1158 = vset.pattern.permute.xlu0 0
        %1159 = vperm.xlu0 %1158, %v1133
        %v1160 = vpop.permute.xlu0 %1159
        %1163 = vset.pattern.permute.xlu0 0
        %1164 = vperm.xlu0 %1163, %v1134
        %v1165 = vpop.permute.xlu0 %1164
        %1168 = vset.pattern.permute.xlu0 0
        %1169 = vperm.xlu0 %1168, %v1135
        %v1170 = vpop.permute.xlu0 %1169
        %1173 = vset.pattern.permute.xlu0 0
        %1174 = vperm.xlu0 %1173, %v1136
        %v1175 = vpop.permute.xlu0 %1174
        %1178 = vset.pattern.permute.xlu0 0
        %1179 = vperm.xlu0 %1178, %v1137
        %v1180 = vpop.permute.xlu0 %1179
        %1183 = vset.pattern.permute.xlu0 0
        %1184 = vperm.xlu0 %1183, %v1138
        %v1185 = vpop.permute.xlu0 %1184
        %1188 = vset.pattern.permute.xlu0 0
        %1189 = vperm.xlu0 %1188, %v1139
        %v1190 = vpop.permute.xlu0 %1189
        %v1192 = vmul.f32 %v1144, %v1155
        %v1193 = vmul.f32 %v1145, %v1160
        %v1194 = vmul.f32 %v1146, %v1165
        %v1195 = vmul.f32 %v1147, %v1170
        %v1196 = vmul.f32 %v1148, %v1175
        %v1197 = vmul.f32 %v1149, %v1180
        %v1198 = vmul.f32 %v1150, %v1185
        %v1199 = vmul.f32 %v1151, %v1190
        %v1200 = vadd.f32 %v1122, %v1192
        %v1201 = vadd.f32 %v1123, %v1193
        %v1202 = vadd.f32 %v1124, %v1194
        %v1203 = vadd.f32 %v1125, %v1195
        %v1204 = vadd.f32 %v1126, %v1196
        %v1205 = vadd.f32 %v1127, %v1197
        %v1206 = vadd.f32 %v1128, %v1198
        %v1207 = vadd.f32 %v1129, %v1199
        %v1208 = vld [vmem:[%s2 + $0x7] sm:$0x1]
        %s1209 = scalar_lea.vmem [#allocation2], 448
        %v1210 = vld [vmem:[%s1209] sm:$0xff]
        %v1211 = vld [vmem:[%s1209 + $0x8] sm:$0xff]
        %v1212 = vld [vmem:[%s1209 + $0x10] sm:$0xff]
        %v1213 = vld [vmem:[%s1209 + $0x18] sm:$0xff]
        %v1214 = vld [vmem:[%s1209 + $0x20] sm:$0xff]
        %v1215 = vld [vmem:[%s1209 + $0x28] sm:$0xff]
        %v1216 = vld [vmem:[%s1209 + $0x30] sm:$0xff]
        %v1217 = vld [vmem:[%s1209 + $0x38] sm:$0xff]
        %v1218 = vlaneseq
        %v1219 = vshrl.u32 %v1218, 7
        %v1220 = vsub.s32 0, %v1219
        %v1221 = vrot.slane %v1208, %v1220
        %v1222 = vmul.f32 %v620, %v1221
        %v1223 = vmul.f32 %v621, %v1221
        %v1224 = vmul.f32 %v622, %v1221
        %v1225 = vmul.f32 %v623, %v1221
        %v1226 = vmul.f32 %v624, %v1221
        %v1227 = vmul.f32 %v625, %v1221
        %v1228 = vmul.f32 %v626, %v1221
        %v1229 = vmul.f32 %v619, %v1221
        %1231 = vset.pattern.permute.xlu0 0
        %1232 = vperm.xlu0 %1231, %v1210
        %v1233 = vpop.permute.xlu0 %1232
        %1236 = vset.pattern.permute.xlu0 0
        %1237 = vperm.xlu0 %1236, %v1211
        %v1238 = vpop.permute.xlu0 %1237
        %1241 = vset.pattern.permute.xlu0 0
        %1242 = vperm.xlu0 %1241, %v1212
        %v1243 = vpop.permute.xlu0 %1242
        %1246 = vset.pattern.permute.xlu0 0
        %1247 = vperm.xlu0 %1246, %v1213
        %v1248 = vpop.permute.xlu0 %1247
        %1251 = vset.pattern.permute.xlu0 0
        %1252 = vperm.xlu0 %1251, %v1214
        %v1253 = vpop.permute.xlu0 %1252
        %1256 = vset.pattern.permute.xlu0 0
        %1257 = vperm.xlu0 %1256, %v1215
        %v1258 = vpop.permute.xlu0 %1257
        %1261 = vset.pattern.permute.xlu0 0
        %1262 = vperm.xlu0 %1261, %v1216
        %v1263 = vpop.permute.xlu0 %1262
        %1266 = vset.pattern.permute.xlu0 0
        %1267 = vperm.xlu0 %1266, %v1217
        %v1268 = vpop.permute.xlu0 %1267
        %v1270 = vmul.f32 %v1222, %v1233
        %v1271 = vmul.f32 %v1223, %v1238
        %v1272 = vmul.f32 %v1224, %v1243
        %v1273 = vmul.f32 %v1225, %v1248
        %v1274 = vmul.f32 %v1226, %v1253
        %v1275 = vmul.f32 %v1227, %v1258
        %v1276 = vmul.f32 %v1228, %v1263
        %v1277 = vmul.f32 %v1229, %v1268
        %v1278 = vadd.f32 %v1200, %v1270
        %v1279 = vadd.f32 %v1201, %v1271
        %v1280 = vadd.f32 %v1202, %v1272
        %v1281 = vadd.f32 %v1203, %v1273
        %v1282 = vadd.f32 %v1204, %v1274
        %v1283 = vadd.f32 %v1205, %v1275
        %v1284 = vadd.f32 %v1206, %v1276
        %v1285 = vadd.f32 %v1207, %v1277
        %v1286 = vld [vmem:[%s2 + $0x8] sm:$0x1]
        %s1287 = scalar_lea.vmem [#allocation2], 512
        %v1288 = vld [vmem:[%s1287] sm:$0xff]
        %v1289 = vld [vmem:[%s1287 + $0x8] sm:$0xff]
        %v1290 = vld [vmem:[%s1287 + $0x10] sm:$0xff]
        %v1291 = vld [vmem:[%s1287 + $0x18] sm:$0xff]
        %v1292 = vld [vmem:[%s1287 + $0x20] sm:$0xff]
        %v1293 = vld [vmem:[%s1287 + $0x28] sm:$0xff]
        %v1294 = vld [vmem:[%s1287 + $0x30] sm:$0xff]
        %v1295 = vld [vmem:[%s1287 + $0x38] sm:$0xff]
        %v1296 = vlaneseq
        %v1297 = vshrl.u32 %v1296, 7
        %v1298 = vsub.s32 0, %v1297
        %v1299 = vrot.slane %v1286, %v1298
        %v1300 = vmul.f32 %v815, %v1299
        %v1301 = vmul.f32 %v814, %v1299
        %v1302 = vmul.f32 %v813, %v1299
        %v1303 = vmul.f32 %v812, %v1299
        %v1304 = vmul.f32 %v811, %v1299
        %v1305 = vmul.f32 %v810, %v1299
        %v1306 = vmul.f32 %v817, %v1299
        %v1307 = vmul.f32 %v816, %v1299
        %1309 = vset.pattern.permute.xlu0 0
        %1310 = vperm.xlu0 %1309, %v1288
        %v1311 = vpop.permute.xlu0 %1310
        %1314 = vset.pattern.permute.xlu0 0
        %1315 = vperm.xlu0 %1314, %v1289
        %v1316 = vpop.permute.xlu0 %1315
        %1319 = vset.pattern.permute.xlu0 0
        %1320 = vperm.xlu0 %1319, %v1290
        %v1321 = vpop.permute.xlu0 %1320
        %1324 = vset.pattern.permute.xlu0 0
        %1325 = vperm.xlu0 %1324, %v1291
        %v1326 = vpop.permute.xlu0 %1325
        %1329 = vset.pattern.permute.xlu0 0
        %1330 = vperm.xlu0 %1329, %v1292
        %v1331 = vpop.permute.xlu0 %1330
        %1334 = vset.pattern.permute.xlu0 0
        %1335 = vperm.xlu0 %1334, %v1293
        %v1336 = vpop.permute.xlu0 %1335
        %1339 = vset.pattern.permute.xlu0 0
        %1340 = vperm.xlu0 %1339, %v1294
        %v1341 = vpop.permute.xlu0 %1340
        %1344 = vset.pattern.permute.xlu0 0
        %1345 = vperm.xlu0 %1344, %v1295
        %v1346 = vpop.permute.xlu0 %1345
        %v1348 = vmul.f32 %v1300, %v1311
        %v1349 = vmul.f32 %v1301, %v1316
        %v1350 = vmul.f32 %v1302, %v1321
        %v1351 = vmul.f32 %v1303, %v1326
        %v1352 = vmul.f32 %v1304, %v1331
        %v1353 = vmul.f32 %v1305, %v1336
        %v1354 = vmul.f32 %v1306, %v1341
        %v1355 = vmul.f32 %v1307, %v1346
        %v1356 = vadd.f32 %v1278, %v1348
        %v1357 = vadd.f32 %v1279, %v1349
        %v1358 = vadd.f32 %v1280, %v1350
        %v1359 = vadd.f32 %v1281, %v1351
        %v1360 = vadd.f32 %v1282, %v1352
        %v1361 = vadd.f32 %v1283, %v1353
        %v1362 = vadd.f32 %v1284, %v1354
        %v1363 = vadd.f32 %v1285, %v1355
        %v1364 = vld [vmem:[%s3] sm:$0x1]
        %v1365 = vld [vmem:[%s4] sm:$0x1]
        %vm1366 = vcmask 261120
        %v1367 = vsel %vm1366, %v1356, 0.0
        %1368 = vadd.xlane.f32.xlu0 %v1367
        %v1369 = vpop.xlane.xlu0 %1368
        %v1370 = vsel %vm1366, %v1357, 0.0
        %1371 = vadd.xlane.f32.xlu0 %v1370
        %v1372 = vpop.xlane.xlu0 %1371
        %v1373 = vsel %vm1366, %v1358, 0.0
        %1374 = vadd.xlane.f32.xlu0 %v1373
        %v1375 = vpop.xlane.xlu0 %1374
        %v1376 = vsel %vm1366, %v1359, 0.0
        %1377 = vadd.xlane.f32.xlu0 %v1376
        %v1378 = vpop.xlane.xlu0 %1377
        %v1379 = vsel %vm1366, %v1360, 0.0
        %1380 = vadd.xlane.f32.xlu0 %v1379
        %v1381 = vpop.xlane.xlu0 %1380
        %v1382 = vsel %vm1366, %v1361, 0.0
        %1383 = vadd.xlane.f32.xlu0 %v1382
        %v1384 = vpop.xlane.xlu0 %1383
        %v1385 = vsel %vm1366, %v1362, 0.0
        %1386 = vadd.xlane.f32.xlu0 %v1385
        %v1387 = vpop.xlane.xlu0 %1386
        %v1388 = vsel %vm1366, %v1363, 0.0
        %1389 = vadd.xlane.f32.xlu0 %v1388
        %v1390 = vpop.xlane.xlu0 %1389
        %v1391 = vrcp.pop 32.0
        %v1392 = vmul.f32 %v1369, %v1391
        %v1393 = vmul.f32 %v1372, %v1391
        %v1394 = vmul.f32 %v1375, %v1391
        %v1395 = vmul.f32 %v1378, %v1391
        %v1396 = vmul.f32 %v1381, %v1391
        %v1397 = vmul.f32 %v1384, %v1391
        %v1398 = vmul.f32 %v1387, %v1391
        %v1399 = vmul.f32 %v1390, %v1391
        %v1400 = vsub.f32 %v1356, %v1392
        %v1401 = vsub.f32 %v1357, %v1393
        %v1402 = vsub.f32 %v1358, %v1394
        %v1403 = vsub.f32 %v1359, %v1395
        %v1404 = vsub.f32 %v1360, %v1396
        %v1405 = vsub.f32 %v1361, %v1397
        %v1406 = vsub.f32 %v1362, %v1398
        %v1407 = vsub.f32 %v1363, %v1399
        %v1408 = vmul.f32 %v1400, %v1400
        %v1409 = vmul.f32 %v1401, %v1401
        %v1410 = vmul.f32 %v1402, %v1402
        %v1411 = vmul.f32 %v1403, %v1403
        %v1412 = vmul.f32 %v1404, %v1404
        %v1413 = vmul.f32 %v1405, %v1405
        %v1414 = vmul.f32 %v1406, %v1406
        %v1415 = vmul.f32 %v1407, %v1407
        %v1416 = vsel %vm1366, %v1408, 0.0
        %1417 = vadd.xlane.f32.xlu0 %v1416
        %v1418 = vpop.xlane.xlu0 %1417
        %v1419 = vsel %vm1366, %v1409, 0.0
        %1420 = vadd.xlane.f32.xlu0 %v1419
        %v1421 = vpop.xlane.xlu0 %1420
        %v1422 = vsel %vm1366, %v1410, 0.0
        %1423 = vadd.xlane.f32.xlu0 %v1422
        %v1424 = vpop.xlane.xlu0 %1423
        %v1425 = vsel %vm1366, %v1411, 0.0
        %1426 = vadd.xlane.f32.xlu0 %v1425
        %v1427 = vpop.xlane.xlu0 %1426
        %v1428 = vsel %vm1366, %v1412, 0.0
        %1429 = vadd.xlane.f32.xlu0 %v1428
        %v1430 = vpop.xlane.xlu0 %1429
        %v1431 = vsel %vm1366, %v1413, 0.0
        %1432 = vadd.xlane.f32.xlu0 %v1431
        %v1433 = vpop.xlane.xlu0 %1432
        %v1434 = vsel %vm1366, %v1414, 0.0
        %1435 = vadd.xlane.f32.xlu0 %v1434
        %v1436 = vpop.xlane.xlu0 %1435
        %v1437 = vsel %vm1366, %v1415, 0.0
        %1438 = vadd.xlane.f32.xlu0 %v1437
        %v1439 = vpop.xlane.xlu0 %1438
        %v1440 = vmul.f32 %v1418, %v1391
        %v1441 = vmul.f32 %v1421, %v1391
        %v1442 = vmul.f32 %v1424, %v1391
        %v1443 = vmul.f32 %v1427, %v1391
        %v1444 = vmul.f32 %v1430, %v1391
        %v1445 = vmul.f32 %v1433, %v1391
        %v1446 = vmul.f32 %v1436, %v1391
        %v1447 = vmul.f32 %v1439, %v1391
        %v1448 = vadd.f32 %v1440, 1e-06
        %v1449 = vadd.f32 %v1441, 1e-06
        %v1450 = vadd.f32 %v1442, 1e-06
        %v1451 = vadd.f32 %v1443, 1e-06
        %v1452 = vadd.f32 %v1444, 1e-06
        %v1453 = vadd.f32 %v1445, 1e-06
        %v1454 = vadd.f32 %v1446, 1e-06
        %v1455 = vadd.f32 %v1447, 1e-06
        %v1456 = vrsqrt.pop %v1448
        %v1457 = vrsqrt.pop %v1449
        %v1458 = vrsqrt.pop %v1450
        %v1459 = vrsqrt.pop %v1451
        %v1460 = vrsqrt.pop %v1452
        %v1461 = vrsqrt.pop %v1453
        %v1462 = vrsqrt.pop %v1454
        %v1463 = vrsqrt.pop %v1455
        %v1464 = vmul.f32 %v1400, %v1456
        %v1465 = vmul.f32 %v1401, %v1457
        %v1466 = vmul.f32 %v1402, %v1458
        %v1467 = vmul.f32 %v1403, %v1459
        %v1468 = vmul.f32 %v1404, %v1460
        %v1469 = vmul.f32 %v1405, %v1461
        %v1470 = vmul.f32 %v1406, %v1462
        %v1471 = vmul.f32 %v1407, %v1463
        %v1473 = vlaneseq
        %v1474 = vshrl.u32 %v1473, 7
        %v1475 = vsub.s32 0, %v1474
        %v1476 = vrot.slane %v1364, %v1475
        %v1478 = vmul.f32 %v1464, %v1476
        %v1479 = vmul.f32 %v1465, %v1476
        %v1480 = vmul.f32 %v1466, %v1476
        %v1481 = vmul.f32 %v1467, %v1476
        %v1482 = vmul.f32 %v1468, %v1476
        %v1483 = vmul.f32 %v1469, %v1476
        %v1484 = vmul.f32 %v1470, %v1476
        %v1485 = vmul.f32 %v1471, %v1476
        %v1487 = vlaneseq
        %v1488 = vshrl.u32 %v1487, 7
        %v1489 = vsub.s32 0, %v1488
        %v1490 = vrot.slane %v1365, %v1489
        %v1492 = vadd.f32 %v1478, %v1490
        %v1493 = vadd.f32 %v1479, %v1490
        %v1494 = vadd.f32 %v1480, %v1490
        %v1495 = vadd.f32 %v1481, %v1490
        %v1496 = vadd.f32 %v1482, %v1490
        %v1497 = vadd.f32 %v1483, %v1490
        %v1498 = vadd.f32 %v1484, %v1490
        %v1499 = vadd.f32 %v1485, %v1490
        %v1500 = vadd.f32 %v619, %v1492
        %v1501 = vadd.f32 %v620, %v1493
        %v1502 = vadd.f32 %v621, %v1494
        %v1503 = vadd.f32 %v622, %v1495
        %v1504 = vadd.f32 %v623, %v1496
        %v1505 = vadd.f32 %v624, %v1497
        %v1506 = vadd.f32 %v625, %v1498
        %v1507 = vadd.f32 %v626, %v1499
        %v1508 = vld [vmem:[%s5] sm:$0x1]
        %v1509 = vld [vmem:[%s6] sm:$0x1]
        %v1510 = vsel %vm1366, %v1500, 0.0
        %1511 = vadd.xlane.f32.xlu0 %v1510
        %v1512 = vpop.xlane.xlu0 %1511
        %v1513 = vsel %vm1366, %v1501, 0.0
        %1514 = vadd.xlane.f32.xlu0 %v1513
        %v1515 = vpop.xlane.xlu0 %1514
        %v1516 = vsel %vm1366, %v1502, 0.0
        %1517 = vadd.xlane.f32.xlu0 %v1516
        %v1518 = vpop.xlane.xlu0 %1517
        %v1519 = vsel %vm1366, %v1503, 0.0
        %1520 = vadd.xlane.f32.xlu0 %v1519
        %v1521 = vpop.xlane.xlu0 %1520
        %v1522 = vsel %vm1366, %v1504, 0.0
        %1523 = vadd.xlane.f32.xlu0 %v1522
        %v1524 = vpop.xlane.xlu0 %1523
        %v1525 = vsel %vm1366, %v1505, 0.0
        %1526 = vadd.xlane.f32.xlu0 %v1525
        %v1527 = vpop.xlane.xlu0 %1526
        %v1528 = vsel %vm1366, %v1506, 0.0
        %1529 = vadd.xlane.f32.xlu0 %v1528
        %v1530 = vpop.xlane.xlu0 %1529
        %v1531 = vsel %vm1366, %v1507, 0.0
        %1532 = vadd.xlane.f32.xlu0 %v1531
        %v1533 = vpop.xlane.xlu0 %1532
        %v1534 = vmul.f32 %v1512, %v1391
        %v1535 = vmul.f32 %v1515, %v1391
        %v1536 = vmul.f32 %v1518, %v1391
        %v1537 = vmul.f32 %v1521, %v1391
        %v1538 = vmul.f32 %v1524, %v1391
        %v1539 = vmul.f32 %v1527, %v1391
        %v1540 = vmul.f32 %v1530, %v1391
        %v1541 = vmul.f32 %v1533, %v1391
        %v1542 = vsub.f32 %v1500, %v1534
        %v1543 = vsub.f32 %v1501, %v1535
        %v1544 = vsub.f32 %v1502, %v1536
        %v1545 = vsub.f32 %v1503, %v1537
        %v1546 = vsub.f32 %v1504, %v1538
        %v1547 = vsub.f32 %v1505, %v1539
        %v1548 = vsub.f32 %v1506, %v1540
        %v1549 = vsub.f32 %v1507, %v1541
        %v1550 = vmul.f32 %v1542, %v1542
        %v1551 = vmul.f32 %v1543, %v1543
        %v1552 = vmul.f32 %v1544, %v1544
        %v1553 = vmul.f32 %v1545, %v1545
        %v1554 = vmul.f32 %v1546, %v1546
        %v1555 = vmul.f32 %v1547, %v1547
        %v1556 = vmul.f32 %v1548, %v1548
        %v1557 = vmul.f32 %v1549, %v1549
        %v1558 = vsel %vm1366, %v1550, 0.0
        %1559 = vadd.xlane.f32.xlu0 %v1558
        %v1560 = vpop.xlane.xlu0 %1559
        %v1561 = vsel %vm1366, %v1551, 0.0
        %1562 = vadd.xlane.f32.xlu0 %v1561
        %v1563 = vpop.xlane.xlu0 %1562
        %v1564 = vsel %vm1366, %v1552, 0.0
        %1565 = vadd.xlane.f32.xlu0 %v1564
        %v1566 = vpop.xlane.xlu0 %1565
        %v1567 = vsel %vm1366, %v1553, 0.0
        %1568 = vadd.xlane.f32.xlu0 %v1567
        %v1569 = vpop.xlane.xlu0 %1568
        %v1570 = vsel %vm1366, %v1554, 0.0
        %1571 = vadd.xlane.f32.xlu0 %v1570
        %v1572 = vpop.xlane.xlu0 %1571
        %v1573 = vsel %vm1366, %v1555, 0.0
        %1574 = vadd.xlane.f32.xlu0 %v1573
        %v1575 = vpop.xlane.xlu0 %1574
        %v1576 = vsel %vm1366, %v1556, 0.0
        %1577 = vadd.xlane.f32.xlu0 %v1576
        %v1578 = vpop.xlane.xlu0 %1577
        %v1579 = vsel %vm1366, %v1557, 0.0
        %1580 = vadd.xlane.f32.xlu0 %v1579
        %v1581 = vpop.xlane.xlu0 %1580
        %v1582 = vmul.f32 %v1560, %v1391
        %v1583 = vmul.f32 %v1563, %v1391
        %v1584 = vmul.f32 %v1566, %v1391
        %v1585 = vmul.f32 %v1569, %v1391
        %v1586 = vmul.f32 %v1572, %v1391
        %v1587 = vmul.f32 %v1575, %v1391
        %v1588 = vmul.f32 %v1578, %v1391
        %v1589 = vmul.f32 %v1581, %v1391
        %v1590 = vadd.f32 %v1582, 1e-05
        %v1591 = vadd.f32 %v1583, 1e-05
        %v1592 = vadd.f32 %v1584, 1e-05
        %v1593 = vadd.f32 %v1585, 1e-05
        %v1594 = vadd.f32 %v1586, 1e-05
        %v1595 = vadd.f32 %v1587, 1e-05
        %v1596 = vadd.f32 %v1588, 1e-05
        %v1597 = vadd.f32 %v1589, 1e-05
        %v1598 = vrsqrt.pop %v1590
        %v1599 = vrsqrt.pop %v1591
        %v1600 = vrsqrt.pop %v1592
        %v1601 = vrsqrt.pop %v1593
        %v1602 = vrsqrt.pop %v1594
        %v1603 = vrsqrt.pop %v1595
        %v1604 = vrsqrt.pop %v1596
        %v1605 = vrsqrt.pop %v1597
        %v1606 = vmul.f32 %v1542, %v1598
        %v1607 = vmul.f32 %v1543, %v1599
        %v1608 = vmul.f32 %v1544, %v1600
        %v1609 = vmul.f32 %v1545, %v1601
        %v1610 = vmul.f32 %v1546, %v1602
        %v1611 = vmul.f32 %v1547, %v1603
        %v1612 = vmul.f32 %v1548, %v1604
        %v1613 = vmul.f32 %v1549, %v1605
        %v1615 = vlaneseq
        %v1616 = vshrl.u32 %v1615, 7
        %v1617 = vsub.s32 0, %v1616
        %v1618 = vrot.slane %v1508, %v1617
        %v1620 = vmul.f32 %v1606, %v1618
        %v1621 = vmul.f32 %v1607, %v1618
        %v1622 = vmul.f32 %v1608, %v1618
        %v1623 = vmul.f32 %v1609, %v1618
        %v1624 = vmul.f32 %v1610, %v1618
        %v1625 = vmul.f32 %v1611, %v1618
        %v1626 = vmul.f32 %v1612, %v1618
        %v1627 = vmul.f32 %v1613, %v1618
        %v1629 = vlaneseq
        %v1630 = vshrl.u32 %v1629, 7
        %v1631 = vsub.s32 0, %v1630
        %v1632 = vrot.slane %v1509, %v1631
        %v1634 = vadd.f32 %v1620, %v1632
        %v1635 = vadd.f32 %v1621, %v1632
        %v1636 = vadd.f32 %v1622, %v1632
        %v1637 = vadd.f32 %v1623, %v1632
        %v1638 = vadd.f32 %v1624, %v1632
        %v1639 = vadd.f32 %v1625, %v1632
        %v1640 = vadd.f32 %v1626, %v1632
        %v1641 = vadd.f32 %v1627, %v1632
        %v1642 = vpack.c.bf16 %v1635, %v1634
        %v1643 = vpack.c.bf16 %v1637, %v1636
        %v1644 = vpack.c.bf16 %v1639, %v1638
        %v1645 = vpack.c.bf16 %v1641, %v1640
        %v1646 = vld [vmem:[%s7] sm:$0xf]
        %v1647 = vld [vmem:[%s7 + $0x4] sm:$0xf]
        %v1648 = vld [vmem:[%s7 + $0x8] sm:$0xf]
        %v1649 = vld [vmem:[%s7 + $0xc] sm:$0xf]
        %v1650 = vld [vmem:[%s8] sm:$0x1]
        %v1652 = vlaneseq
        %v1653 = vshrl.u32 %v1652, 7
        %v1654 = vsub.s32 0, %v1653
        %v1655 = vrot.slane %v1650, %v1654
        %v1661 = vunpack.c.l.b16 %v1646
        %v1662 = vunpack.c.l.b16 %v1647
        %v1663 = vunpack.c.l.b16 %v1648
        %v1664 = vunpack.c.l.b16 %v1649
        %v1665 = vpack.c.b16 %v1662, %v1661
        %v1666 = vpack.c.b16 %v1664, %v1663
        %v1670 = vsel %vm1366, %v1642, 0
        %v1673 = vsel %vm1366, %v1643, 0
        %v1676 = vsel %vm1366, %v1644, 0
        %v1679 = vsel %vm1366, %v1645, 0
        %1681 = vmatprep.subr.bf16.mxu0 0
        %1682 = vmatpush1.bf16.msra.mxu0 0
        %1683 = vmatprep.subr.bf16.mxu0 0
        %1684 = vmatpush1.bf16.msra.mxu0 0
        %1685 = vmatprep.subr.bf16.mxu0 0
        %1686 = vmatpush1.bf16.msra.mxu0 0
        %1687 = vmatprep.subr.bf16.mxu0 0
        %1688 = vmatpush1.bf16.msra.mxu0 0
        %1689 = vmatprep.subr.bf16.mxu0 0
        %1690 = vmatpush1.bf16.msra.mxu0 0
        %1691 = vmatprep.subr.bf16.mxu0 0
        %1692 = vmatpush1.bf16.msra.mxu0 0
        %1693 = vmatprep.subr.bf16.mxu0 0
        %1694 = vmatpush1.bf16.msra.mxu0 %v1666
        %1695 = vmatprep.subr.bf16.mxu0 0
        %1696 = vmatpush1.bf16.msra.mxu0 %v1665
        %1697 = vmatprep.subr.bf16.mxu0 0
        %1698 = vmatpush2.bf16.msra.mxu0 0
        %1699 = vmatprep.subr.bf16.mxu0 0
        %1700 = vmatpush2.bf16.msra.mxu0 0
        %1701 = vmatprep.subr.bf16.mxu0 0
        %1702 = vmatpush2.bf16.msra.mxu0 0
        %1703 = vmatprep.subr.bf16.mxu0 0
        %1704 = vmatpush2.bf16.msra.mxu0 0
        %1705 = vmatprep.subr.bf16.mxu0 0
        %1706 = vmatpush2.bf16.msra.mxu0 0
        %1707 = vmatprep.subr.bf16.mxu0 0
        %1708 = vmatpush2.bf16.msra.mxu0 0
        %1709 = vmatprep.subr.bf16.mxu0 0
        %1710 = vmatpush2.bf16.msra.mxu0 0
        %1711 = vmatprep.subr.bf16.mxu0 0
        %1712 = vmatpush2.bf16.msra.mxu0 0
        %1713 = vmatprep.mubr.bf16.mxu0 0
        %1714 = vmatmul.mubr.bf16.gmra.mxu0 %v1670
        %v1715 = vpop.f32.mrf.mxu0
        %v1716 = vadd.f32 %v1655, %v1715
        %v1717 = vpop.f32.mrf.mxu0
        %v1718 = vpop.f32.mrf.mxu0
        %v1719 = vadd.f32 %v1655, %v1718
        %v1720 = vpop.f32.mrf.mxu0
        %1721 = vmatprep.mubr.bf16.mxu0 0
        %1722 = vmatmul.mubr.bf16.gmra.mxu0 %v1673
        %v1723 = vpop.f32.mrf.mxu0
        %v1724 = vadd.f32 %v1655, %v1723
        %v1725 = vpop.f32.mrf.mxu0
        %v1726 = vpop.f32.mrf.mxu0
        %v1727 = vadd.f32 %v1655, %v1726
        %v1728 = vpop.f32.mrf.mxu0
        %1729 = vmatprep.mubr.bf16.mxu0 0
        %1730 = vmatmul.mubr.bf16.gmra.mxu0 %v1676
        %v1731 = vpop.f32.mrf.mxu0
        %v1732 = vadd.f32 %v1655, %v1731
        %v1733 = vpop.f32.mrf.mxu0
        %v1734 = vpop.f32.mrf.mxu0
        %v1735 = vadd.f32 %v1655, %v1734
        %v1736 = vpop.f32.mrf.mxu0
        %1737 = vmatprep.mubr.bf16.mxu0 0
        %1738 = vmatmul.mubr.bf16.gmra.mxu0 %v1679
        %v1739 = vpop.f32.mrf.mxu0
        %v1740 = vadd.f32 %v1655, %v1739
        %v1741 = vpop.f32.mrf.mxu0
        %v1742 = vpop.f32.mrf.mxu0
        %v1743 = vadd.f32 %v1655, %v1742
        %v1744 = vpop.f32.mrf.mxu0
        %1745 = vdwg.mxu0
        %v1746 = vmul.f32 %v1716, 0.35355338
        %v1747 = vmul.f32 %v1719, 0.35355338
        %v1748 = vmul.f32 %v1724, 0.35355338
        %v1749 = vmul.f32 %v1727, 0.35355338
        %v1750 = vmul.f32 %v1732, 0.35355338
        %v1751 = vmul.f32 %v1735, 0.35355338
        %v1752 = vmul.f32 %v1740, 0.35355338
        %v1753 = vmul.f32 %v1743, 0.35355338
        %v1754 = vpack.c.bf16 %v1747, %v1746
        %v1755 = vpack.c.bf16 %v1749, %v1748
        %v1756 = vpack.c.bf16 %v1751, %v1750
        %v1757 = vpack.c.bf16 %v1753, %v1752
        %v1758 = vpack.c.bf16 %v1719, %v1716
        %v1759 = vpack.c.bf16 %v1727, %v1724
        %v1760 = vpack.c.bf16 %v1735, %v1732
        %v1761 = vpack.c.bf16 %v1743, %v1740
        %v1762 = vlaneseq
        %v1763 = vand.u32 %v1762, 127
        %vm1764 = vcmp.ge.s32.totalorder %v1763, 0
        %vm1765 = vcmp.lt.s32.totalorder %v1763, 8
        %vm1766 = vmand %vm1764, %vm1765
        %v1767 = vsel %vm1766, 1, 0
        %vm1768 = vcmp.eq.s32.totalorder %v1767, 1
        %vm1769 = vmpackc.low %vm1768, %vm1768
        %v1770 = vsel %vm1769, 65537, 0
        %v1771 = vlaneseq
        %v1772 = vshrl.u32 %v1771, 7
        %v1773 = vsub.s32 0, %v1772
        %v1774 = vrot.slane %v1770, %v1773
        %vm1775 = vcmp.ne.s16.totalorder %v1774, 0
        %v1776 = vsel %vm1775, %v1754, 0
        %v1777 = vsel %vm1775, %v1755, 0
        %v1778 = vsel %vm1775, %v1756, 0
        %v1779 = vsel %vm1775, %v1757, 0
        %1780 = vrot.lane.b32.xlu0 %v1774, 64
        %v1781 = vpop.permute.xlu0 %1780
        %vm1782 = vcmp.ne.s16.totalorder %v1781, 0
        %v1783 = vsel %vm1782, %v1758, 0
        %v1784 = vsel %vm1782, %v1759, 0
        %v1785 = vsel %vm1782, %v1760, 0
        %v1786 = vsel %vm1782, %v1761, 0
        %1791 = vrot.lane.b32.xlu0 %v1758, 96
        %v1792 = vpop.permute.xlu0 %1791
        %1793 = vrot.lane.b32.xlu0 %v1759, 96
        %v1794 = vpop.permute.xlu0 %1793
        %1795 = vrot.lane.b32.xlu0 %v1760, 96
        %v1796 = vpop.permute.xlu0 %1795
        %1797 = vrot.lane.b32.xlu0 %v1761, 96
        %v1798 = vpop.permute.xlu0 %1797
        %v1800 = vsel %vm1366, %v1776, 0
        %v1803 = vsel %vm1366, %v1777, 0
        %v1806 = vsel %vm1366, %v1778, 0
        %v1809 = vsel %vm1366, %v1779, 0
        %v1812 = vsel %vm1366, %v1792, 0
        %v1815 = vsel %vm1366, %v1794, 0
        %v1818 = vsel %vm1366, %v1796, 0
        %v1821 = vsel %vm1366, %v1798, 0
        %1823 = vmatprep.subr.bf16.mxu0 0
        %1824 = vmatpush1.bf16.xpose.msra.mxu0 0
        %1825 = vmatprep.subr.bf16.mxu0 0
        %1826 = vmatpush1.bf16.xpose.msra.mxu0 0
        %1827 = vmatprep.subr.bf16.mxu0 0
        %1828 = vmatpush1.bf16.xpose.msra.mxu0 0
        %1829 = vmatprep.subr.bf16.mxu0 0
        %1830 = vmatpush1.bf16.xpose.msra.mxu0 0
        %1831 = vmatprep.subr.bf16.mxu0 0
        %1832 = vmatpush1.bf16.xpose.msra.mxu0 %v1821
        %1833 = vmatprep.subr.bf16.mxu0 0
        %1834 = vmatpush1.bf16.xpose.msra.mxu0 %v1818
        %1835 = vmatprep.subr.bf16.mxu0 0
        %1836 = vmatpush1.bf16.xpose.msra.mxu0 %v1815
        %1837 = vmatprep.subr.bf16.mxu0 0
        %1838 = vmatpush1.bf16.xpose.msra.mxu0 %v1812
        %1839 = vmatprep.subr.bf16.mxu0 0
        %1840 = vmatpush2.bf16.xpose.msra.mxu0 0
        %1841 = vmatprep.subr.bf16.mxu0 0
        %1842 = vmatpush2.bf16.xpose.msra.mxu0 0
        %1843 = vmatprep.subr.bf16.mxu0 0
        %1844 = vmatpush2.bf16.xpose.msra.mxu0 0
        %1845 = vmatprep.subr.bf16.mxu0 0
        %1846 = vmatpush2.bf16.xpose.msra.mxu0 0
        %1847 = vmatprep.subr.bf16.mxu0 0
        %1848 = vmatpush2.bf16.xpose.msra.mxu0 0
        %1849 = vmatprep.subr.bf16.mxu0 0
        %1850 = vmatpush2.bf16.xpose.msra.mxu0 0
        %1851 = vmatprep.subr.bf16.mxu0 0
        %1852 = vmatpush2.bf16.xpose.msra.mxu0 0
        %1853 = vmatprep.subr.bf16.mxu0 0
        %1854 = vmatpush2.bf16.xpose.msra.mxu0 0
        %1855 = vmatprep.mubr.bf16.mxu0 0
        %1856 = vmatmul.mubr.bf16.gmra.mxu0 %v1800
        %v1857 = vpop.f32.mrf.mxu0
        %v1858 = vadd.f32 0.0, %v1857
        %v1859 = vpop.f32.mrf.mxu0
        %v1860 = vpop.f32.mrf.mxu0
        %v1861 = vadd.f32 0.0, %v1860
        %v1862 = vpop.f32.mrf.mxu0
        %1863 = vmatprep.mubr.bf16.mxu0 0
        %1864 = vmatmul.mubr.bf16.gmra.mxu0 %v1803
        %v1865 = vpop.f32.mrf.mxu0
        %v1866 = vadd.f32 0.0, %v1865
        %v1867 = vpop.f32.mrf.mxu0
        %v1868 = vpop.f32.mrf.mxu0
        %v1869 = vadd.f32 0.0, %v1868
        %v1870 = vpop.f32.mrf.mxu0
        %1871 = vmatprep.mubr.bf16.mxu0 0
        %1872 = vmatmul.mubr.bf16.gmra.mxu0 %v1806
        %v1873 = vpop.f32.mrf.mxu0
        %v1874 = vadd.f32 0.0, %v1873
        %v1875 = vpop.f32.mrf.mxu0
        %v1876 = vpop.f32.mrf.mxu0
        %v1877 = vadd.f32 0.0, %v1876
        %v1878 = vpop.f32.mrf.mxu0
        %1879 = vmatprep.mubr.bf16.mxu0 0
        %1880 = vmatmul.mubr.bf16.gmra.mxu0 %v1809
        %v1881 = vpop.f32.mrf.mxu0
        %v1882 = vadd.f32 0.0, %v1881
        %v1883 = vpop.f32.mrf.mxu0
        %v1884 = vpop.f32.mrf.mxu0
        %v1885 = vadd.f32 0.0, %v1884
        %v1886 = vpop.f32.mrf.mxu0
        %1887 = vdwg.mxu0
        %vm1888 = vcmask 523264
        %v1889 = vsel %vm1888, %v1858, -inf
        %1890 = vmax.xlane.f32.xlu0 %v1889
        %v1891 = vpop.xlane.xlu0 %1890
        %v1892 = vsel %vm1888, %v1861, -inf
        %1893 = vmax.xlane.f32.xlu0 %v1892
        %v1894 = vpop.xlane.xlu0 %1893
        %v1895 = vsel %vm1888, %v1866, -inf
        %1896 = vmax.xlane.f32.xlu0 %v1895
        %v1897 = vpop.xlane.xlu0 %1896
        %v1898 = vsel %vm1888, %v1869, -inf
        %1899 = vmax.xlane.f32.xlu0 %v1898
        %v1900 = vpop.xlane.xlu0 %1899
        %v1901 = vsel %vm1888, %v1874, -inf
        %1902 = vmax.xlane.f32.xlu0 %v1901
        %v1903 = vpop.xlane.xlu0 %1902
        %v1904 = vsel %vm1888, %v1877, -inf
        %1905 = vmax.xlane.f32.xlu0 %v1904
        %v1906 = vpop.xlane.xlu0 %1905
        %v1907 = vsel %vm1888, %v1882, -inf
        %1908 = vmax.xlane.f32.xlu0 %v1907
        %v1909 = vpop.xlane.xlu0 %1908
        %v1910 = vsel %vm1888, %v1885, -inf
        %1911 = vmax.xlane.f32.xlu0 %v1910
        %v1912 = vpop.xlane.xlu0 %1911
        %v1913 = vsub.f32 %v1858, %v1891
        %v1914 = vsub.f32 %v1861, %v1894
        %v1915 = vsub.f32 %v1866, %v1897
        %v1916 = vsub.f32 %v1869, %v1900
        %v1917 = vsub.f32 %v1874, %v1903
        %v1918 = vsub.f32 %v1877, %v1906
        %v1919 = vsub.f32 %v1882, %v1909
        %v1920 = vsub.f32 %v1885, %v1912
        %v1921 = vmul.f32 %v1913, 1.442695
        %v1922 = vpow.pop %v1921
        %v1923 = vmul.f32 %v1914, 1.442695
        %v1924 = vpow.pop %v1923
        %v1925 = vmul.f32 %v1915, 1.442695
        %v1926 = vpow.pop %v1925
        %v1927 = vmul.f32 %v1916, 1.442695
        %v1928 = vpow.pop %v1927
        %v1929 = vmul.f32 %v1917, 1.442695
        %v1930 = vpow.pop %v1929
        %v1931 = vmul.f32 %v1918, 1.442695
        %v1932 = vpow.pop %v1931
        %v1933 = vmul.f32 %v1919, 1.442695
        %v1934 = vpow.pop %v1933
        %v1935 = vmul.f32 %v1920, 1.442695
        %v1936 = vpow.pop %v1935
        %v1937 = vsel %vm1888, %v1922, 0.0
        %1938 = vadd.xlane.f32.xlu0 %v1937
        %v1939 = vpop.xlane.xlu0 %1938
        %v1940 = vsel %vm1888, %v1924, 0.0
        %1941 = vadd.xlane.f32.xlu0 %v1940
        %v1942 = vpop.xlane.xlu0 %1941
        %v1943 = vsel %vm1888, %v1926, 0.0
        %1944 = vadd.xlane.f32.xlu0 %v1943
        %v1945 = vpop.xlane.xlu0 %1944
        %v1946 = vsel %vm1888, %v1928, 0.0
        %1947 = vadd.xlane.f32.xlu0 %v1946
        %v1948 = vpop.xlane.xlu0 %1947
        %v1949 = vsel %vm1888, %v1930, 0.0
        %1950 = vadd.xlane.f32.xlu0 %v1949
        %v1951 = vpop.xlane.xlu0 %1950
        %v1952 = vsel %vm1888, %v1932, 0.0
        %1953 = vadd.xlane.f32.xlu0 %v1952
        %v1954 = vpop.xlane.xlu0 %1953
        %v1955 = vsel %vm1888, %v1934, 0.0
        %1956 = vadd.xlane.f32.xlu0 %v1955
        %v1957 = vpop.xlane.xlu0 %1956
        %v1958 = vsel %vm1888, %v1936, 0.0
        %1959 = vadd.xlane.f32.xlu0 %v1958
        %v1960 = vpop.xlane.xlu0 %1959
        %v1961 = vrcp.pop %v1939
        %v1962 = vrcp.pop %v1942
        %v1963 = vrcp.pop %v1945
        %v1964 = vrcp.pop %v1948
        %v1965 = vrcp.pop %v1951
        %v1966 = vrcp.pop %v1954
        %v1967 = vrcp.pop %v1957
        %v1968 = vrcp.pop %v1960
        %v1969 = vpack.c.bf16 %v1924, %v1922
        %v1970 = vpack.c.bf16 %v1928, %v1926
        %v1971 = vpack.c.bf16 %v1932, %v1930
        %v1972 = vpack.c.bf16 %v1936, %v1934
        %1977 = vrot.lane.b32.xlu0 %v1783, 64
        %v1978 = vpop.permute.xlu0 %1977
        %1979 = vrot.lane.b32.xlu0 %v1784, 64
        %v1980 = vpop.permute.xlu0 %1979
        %1981 = vrot.lane.b32.xlu0 %v1785, 64
        %v1982 = vpop.permute.xlu0 %1981
        %1983 = vrot.lane.b32.xlu0 %v1786, 64
        %v1984 = vpop.permute.xlu0 %1983
        %v1990 = vsel %vm1888, %v1969, 0
        %v1993 = vsel %vm1888, %v1970, 0
        %v1996 = vsel %vm1888, %v1971, 0
        %v1999 = vsel %vm1888, %v1972, 0
        %2001 = vmatprep.subr.bf16.mxu0 0
        %2002 = vmatpush1.bf16.msra.mxu0 0
        %2003 = vmatprep.subr.bf16.mxu0 0
        %2004 = vmatpush1.bf16.msra.mxu0 0
        %2005 = vmatprep.subr.bf16.mxu0 0
        %2006 = vmatpush1.bf16.msra.mxu0 0
        %2007 = vmatprep.subr.bf16.mxu0 0
        %2008 = vmatpush1.bf16.msra.mxu0 0
        %2009 = vmatprep.subr.bf16.mxu0 0
        %2010 = vmatpush1.bf16.msra.mxu0 %v1984
        %2011 = vmatprep.subr.bf16.mxu0 0
        %2012 = vmatpush1.bf16.msra.mxu0 %v1982
        %2013 = vmatprep.subr.bf16.mxu0 0
        %2014 = vmatpush1.bf16.msra.mxu0 %v1980
        %2015 = vmatprep.subr.bf16.mxu0 0
        %2016 = vmatpush1.bf16.msra.mxu0 %v1978
        %2017 = vmatprep.subr.bf16.mxu0 0
        %2018 = vmatpush2.bf16.msra.mxu0 0
        %2019 = vmatprep.subr.bf16.mxu0 0
        %2020 = vmatpush2.bf16.msra.mxu0 0
        %2021 = vmatprep.subr.bf16.mxu0 0
        %2022 = vmatpush2.bf16.msra.mxu0 0
        %2023 = vmatprep.subr.bf16.mxu0 0
        %2024 = vmatpush2.bf16.msra.mxu0 0
        %2025 = vmatprep.subr.bf16.mxu0 0
        %2026 = vmatpush2.bf16.msra.mxu0 0
        %2027 = vmatprep.subr.bf16.mxu0 0
        %2028 = vmatpush2.bf16.msra.mxu0 0
        %2029 = vmatprep.subr.bf16.mxu0 0
        %2030 = vmatpush2.bf16.msra.mxu0 0
        %2031 = vmatprep.subr.bf16.mxu0 0
        %2032 = vmatpush2.bf16.msra.mxu0 0
        %2033 = vmatprep.mubr.bf16.mxu0 0
        %2034 = vmatmul.mubr.bf16.gmra.mxu0 %v1990
        %v2035 = vpop.f32.mrf.mxu0
        %v2036 = vadd.f32 0.0, %v2035
        %v2037 = vpop.f32.mrf.mxu0
        %v2038 = vpop.f32.mrf.mxu0
        %v2039 = vadd.f32 0.0, %v2038
        %v2040 = vpop.f32.mrf.mxu0
        %2041 = vmatprep.mubr.bf16.mxu0 0
        %2042 = vmatmul.mubr.bf16.gmra.mxu0 %v1993
        %v2043 = vpop.f32.mrf.mxu0
        %v2044 = vadd.f32 0.0, %v2043
        %v2045 = vpop.f32.mrf.mxu0
        %v2046 = vpop.f32.mrf.mxu0
        %v2047 = vadd.f32 0.0, %v2046
        %v2048 = vpop.f32.mrf.mxu0
        %2049 = vmatprep.mubr.bf16.mxu0 0
        %2050 = vmatmul.mubr.bf16.gmra.mxu0 %v1996
        %v2051 = vpop.f32.mrf.mxu0
        %v2052 = vadd.f32 0.0, %v2051
        %v2053 = vpop.f32.mrf.mxu0
        %v2054 = vpop.f32.mrf.mxu0
        %v2055 = vadd.f32 0.0, %v2054
        %v2056 = vpop.f32.mrf.mxu0
        %2057 = vmatprep.mubr.bf16.mxu0 0
        %2058 = vmatmul.mubr.bf16.gmra.mxu0 %v1999
        %v2059 = vpop.f32.mrf.mxu0
        %v2060 = vadd.f32 0.0, %v2059
        %v2061 = vpop.f32.mrf.mxu0
        %v2062 = vpop.f32.mrf.mxu0
        %v2063 = vadd.f32 0.0, %v2062
        %v2064 = vpop.f32.mrf.mxu0
        %2065 = vdwg.mxu0
        %v2066 = vmul.f32 %v2036, %v1961
        %v2067 = vmul.f32 %v2039, %v1962
        %v2068 = vmul.f32 %v2044, %v1963
        %v2069 = vmul.f32 %v2047, %v1964
        %v2070 = vmul.f32 %v2052, %v1965
        %v2071 = vmul.f32 %v2055, %v1966
        %v2072 = vmul.f32 %v2060, %v1967
        %v2073 = vmul.f32 %v2063, %v1968
        %v2074 = vadd.f32 %v2066, 0.0
        %v2075 = vadd.f32 %v2067, 0.0
        %v2076 = vadd.f32 %v2068, 0.0
        %v2077 = vadd.f32 %v2069, 0.0
        %v2078 = vadd.f32 %v2070, 0.0
        %v2079 = vadd.f32 %v2071, 0.0
        %v2080 = vadd.f32 %v2072, 0.0
        %v2081 = vadd.f32 %v2073, 0.0
        %vm2082 = vcmp.ge.s32.totalorder %v1763, 8
        %vm2083 = vcmp.lt.s32.totalorder %v1763, 16
        %vm2084 = vmand %vm2082, %vm2083
        %v2085 = vsel %vm2084, 1, 0
        %vm2086 = vcmp.eq.s32.totalorder %v2085, 1
        %vm2087 = vmpackc.low %vm2086, %vm2086
        %v2088 = vsel %vm2087, 65537, 0
        %v2089 = vlaneseq
        %v2090 = vshrl.u32 %v2089, 7
        %v2091 = vsub.s32 0, %v2090
        %v2092 = vrot.slane %v2088, %v2091
        %vm2093 = vcmp.ne.s16.totalorder %v2092, 0
        %v2094 = vsel %vm2093, %v1754, 0
        %v2095 = vsel %vm2093, %v1755, 0
        %v2096 = vsel %vm2093, %v1756, 0
        %v2097 = vsel %vm2093, %v1757, 0
        %2098 = vrot.lane.b32.xlu0 %v2092, 64
        %v2099 = vpop.permute.xlu0 %2098
        %vm2100 = vcmp.ne.s16.totalorder %v2099, 0
        %v2101 = vsel %vm2100, %v1758, 0
        %v2102 = vsel %vm2100, %v1759, 0
        %v2103 = vsel %vm2100, %v1760, 0
        %v2104 = vsel %vm2100, %v1761, 0
        %v2106 = vsel %vm1366, %v2094, 0
        %v2109 = vsel %vm1366, %v2095, 0
        %v2112 = vsel %vm1366, %v2096, 0
        %v2115 = vsel %vm1366, %v2097, 0
        %2117 = vmatprep.subr.bf16.mxu0 0
        %2118 = vmatpush1.bf16.xpose.msra.mxu0 0
        %2119 = vmatprep.subr.bf16.mxu0 0
        %2120 = vmatpush1.bf16.xpose.msra.mxu0 0
        %2121 = vmatprep.subr.bf16.mxu0 0
        %2122 = vmatpush1.bf16.xpose.msra.mxu0 0
        %2123 = vmatprep.subr.bf16.mxu0 0
        %2124 = vmatpush1.bf16.xpose.msra.mxu0 0
        %2125 = vmatprep.subr.bf16.mxu0 0
        %2126 = vmatpush1.bf16.xpose.msra.mxu0 %v1821
        %2127 = vmatprep.subr.bf16.mxu0 0
        %2128 = vmatpush1.bf16.xpose.msra.mxu0 %v1818
        %2129 = vmatprep.subr.bf16.mxu0 0
        %2130 = vmatpush1.bf16.xpose.msra.mxu0 %v1815
        %2131 = vmatprep.subr.bf16.mxu0 0
        %2132 = vmatpush1.bf16.xpose.msra.mxu0 %v1812
        %2133 = vmatprep.subr.bf16.mxu0 0
        %2134 = vmatpush2.bf16.xpose.msra.mxu0 0
        %2135 = vmatprep.subr.bf16.mxu0 0
        %2136 = vmatpush2.bf16.xpose.msra.mxu0 0
        %2137 = vmatprep.subr.bf16.mxu0 0
        %2138 = vmatpush2.bf16.xpose.msra.mxu0 0
        %2139 = vmatprep.subr.bf16.mxu0 0
        %2140 = vmatpush2.bf16.xpose.msra.mxu0 0
        %2141 = vmatprep.subr.bf16.mxu0 0
        %2142 = vmatpush2.bf16.xpose.msra.mxu0 0
        %2143 = vmatprep.subr.bf16.mxu0 0
        %2144 = vmatpush2.bf16.xpose.msra.mxu0 0
        %2145 = vmatprep.subr.bf16.mxu0 0
        %2146 = vmatpush2.bf16.xpose.msra.mxu0 0
        %2147 = vmatprep.subr.bf16.mxu0 0
        %2148 = vmatpush2.bf16.xpose.msra.mxu0 0
        %2149 = vmatprep.mubr.bf16.mxu0 0
        %2150 = vmatmul.mubr.bf16.gmra.mxu0 %v2106
        %v2151 = vpop.f32.mrf.mxu0
        %v2152 = vadd.f32 0.0, %v2151
        %v2153 = vpop.f32.mrf.mxu0
        %v2154 = vpop.f32.mrf.mxu0
        %v2155 = vadd.f32 0.0, %v2154
        %v2156 = vpop.f32.mrf.mxu0
        %2157 = vmatprep.mubr.bf16.mxu0 0
        %2158 = vmatmul.mubr.bf16.gmra.mxu0 %v2109
        %v2159 = vpop.f32.mrf.mxu0
        %v2160 = vadd.f32 0.0, %v2159
        %v2161 = vpop.f32.mrf.mxu0
        %v2162 = vpop.f32.mrf.mxu0
        %v2163 = vadd.f32 0.0, %v2162
        %v2164 = vpop.f32.mrf.mxu0
        %2165 = vmatprep.mubr.bf16.mxu0 0
        %2166 = vmatmul.mubr.bf16.gmra.mxu0 %v2112
        %v2167 = vpop.f32.mrf.mxu0
        %v2168 = vadd.f32 0.0, %v2167
        %v2169 = vpop.f32.mrf.mxu0
        %v2170 = vpop.f32.mrf.mxu0
        %v2171 = vadd.f32 0.0, %v2170
        %v2172 = vpop.f32.mrf.mxu0
        %2173 = vmatprep.mubr.bf16.mxu0 0
        %2174 = vmatmul.mubr.bf16.gmra.mxu0 %v2115
        %v2175 = vpop.f32.mrf.mxu0
        %v2176 = vadd.f32 0.0, %v2175
        %v2177 = vpop.f32.mrf.mxu0
        %v2178 = vpop.f32.mrf.mxu0
        %v2179 = vadd.f32 0.0, %v2178
        %v2180 = vpop.f32.mrf.mxu0
        %2181 = vdwg.mxu0
        %v2182 = vsel %vm1888, %v2152, -inf
        %2183 = vmax.xlane.f32.xlu0 %v2182
        %v2184 = vpop.xlane.xlu0 %2183
        %v2185 = vsel %vm1888, %v2155, -inf
        %2186 = vmax.xlane.f32.xlu0 %v2185
        %v2187 = vpop.xlane.xlu0 %2186
        %v2188 = vsel %vm1888, %v2160, -inf
        %2189 = vmax.xlane.f32.xlu0 %v2188
        %v2190 = vpop.xlane.xlu0 %2189
        %v2191 = vsel %vm1888, %v2163, -inf
        %2192 = vmax.xlane.f32.xlu0 %v2191
        %v2193 = vpop.xlane.xlu0 %2192
        %v2194 = vsel %vm1888, %v2168, -inf
        %2195 = vmax.xlane.f32.xlu0 %v2194
        %v2196 = vpop.xlane.xlu0 %2195
        %v2197 = vsel %vm1888, %v2171, -inf
        %2198 = vmax.xlane.f32.xlu0 %v2197
        %v2199 = vpop.xlane.xlu0 %2198
        %v2200 = vsel %vm1888, %v2176, -inf
        %2201 = vmax.xlane.f32.xlu0 %v2200
        %v2202 = vpop.xlane.xlu0 %2201
        %v2203 = vsel %vm1888, %v2179, -inf
        %2204 = vmax.xlane.f32.xlu0 %v2203
        %v2205 = vpop.xlane.xlu0 %2204
        %v2206 = vsub.f32 %v2152, %v2184
        %v2207 = vsub.f32 %v2155, %v2187
        %v2208 = vsub.f32 %v2160, %v2190
        %v2209 = vsub.f32 %v2163, %v2193
        %v2210 = vsub.f32 %v2168, %v2196
        %v2211 = vsub.f32 %v2171, %v2199
        %v2212 = vsub.f32 %v2176, %v2202
        %v2213 = vsub.f32 %v2179, %v2205
        %v2214 = vmul.f32 %v2206, 1.442695
        %v2215 = vpow.pop %v2214
        %v2216 = vmul.f32 %v2207, 1.442695
        %v2217 = vpow.pop %v2216
        %v2218 = vmul.f32 %v2208, 1.442695
        %v2219 = vpow.pop %v2218
        %v2220 = vmul.f32 %v2209, 1.442695
        %v2221 = vpow.pop %v2220
        %v2222 = vmul.f32 %v2210, 1.442695
        %v2223 = vpow.pop %v2222
        %v2224 = vmul.f32 %v2211, 1.442695
        %v2225 = vpow.pop %v2224
        %v2226 = vmul.f32 %v2212, 1.442695
        %v2227 = vpow.pop %v2226
        %v2228 = vmul.f32 %v2213, 1.442695
        %v2229 = vpow.pop %v2228
        %v2230 = vsel %vm1888, %v2215, 0.0
        %2231 = vadd.xlane.f32.xlu0 %v2230
        %v2232 = vpop.xlane.xlu0 %2231
        %v2233 = vsel %vm1888, %v2217, 0.0
        %2234 = vadd.xlane.f32.xlu0 %v2233
        %v2235 = vpop.xlane.xlu0 %2234
        %v2236 = vsel %vm1888, %v2219, 0.0
        %2237 = vadd.xlane.f32.xlu0 %v2236
        %v2238 = vpop.xlane.xlu0 %2237
        %v2239 = vsel %vm1888, %v2221, 0.0
        %2240 = vadd.xlane.f32.xlu0 %v2239
        %v2241 = vpop.xlane.xlu0 %2240
        %v2242 = vsel %vm1888, %v2223, 0.0
        %2243 = vadd.xlane.f32.xlu0 %v2242
        %v2244 = vpop.xlane.xlu0 %2243
        %v2245 = vsel %vm1888, %v2225, 0.0
        %2246 = vadd.xlane.f32.xlu0 %v2245
        %v2247 = vpop.xlane.xlu0 %2246
        %v2248 = vsel %vm1888, %v2227, 0.0
        %2249 = vadd.xlane.f32.xlu0 %v2248
        %v2250 = vpop.xlane.xlu0 %2249
        %v2251 = vsel %vm1888, %v2229, 0.0
        %2252 = vadd.xlane.f32.xlu0 %v2251
        %v2253 = vpop.xlane.xlu0 %2252
        %v2254 = vrcp.pop %v2232
        %v2255 = vrcp.pop %v2235
        %v2256 = vrcp.pop %v2238
        %v2257 = vrcp.pop %v2241
        %v2258 = vrcp.pop %v2244
        %v2259 = vrcp.pop %v2247
        %v2260 = vrcp.pop %v2250
        %v2261 = vrcp.pop %v2253
        %v2262 = vpack.c.bf16 %v2217, %v2215
        %v2263 = vpack.c.bf16 %v2221, %v2219
        %v2264 = vpack.c.bf16 %v2225, %v2223
        %v2265 = vpack.c.bf16 %v2229, %v2227
        %2270 = vrot.lane.b32.xlu0 %v2101, 64
        %v2271 = vpop.permute.xlu0 %2270
        %2272 = vrot.lane.b32.xlu0 %v2102, 64
        %v2273 = vpop.permute.xlu0 %2272
        %2274 = vrot.lane.b32.xlu0 %v2103, 64
        %v2275 = vpop.permute.xlu0 %2274
        %2276 = vrot.lane.b32.xlu0 %v2104, 64
        %v2277 = vpop.permute.xlu0 %2276
        %v2283 = vsel %vm1888, %v2262, 0
        %v2286 = vsel %vm1888, %v2263, 0
        %v2289 = vsel %vm1888, %v2264, 0
        %v2292 = vsel %vm1888, %v2265, 0
        %2294 = vmatprep.subr.bf16.mxu0 0
        %2295 = vmatpush1.bf16.msra.mxu0 0
        %2296 = vmatprep.subr.bf16.mxu0 0
        %2297 = vmatpush1.bf16.msra.mxu0 0
        %2298 = vmatprep.subr.bf16.mxu0 0
        %2299 = vmatpush1.bf16.msra.mxu0 0
        %2300 = vmatprep.subr.bf16.mxu0 0
        %2301 = vmatpush1.bf16.msra.mxu0 0
        %2302 = vmatprep.subr.bf16.mxu0 0
        %2303 = vmatpush1.bf16.msra.mxu0 %v2277
        %2304 = vmatprep.subr.bf16.mxu0 0
        %2305 = vmatpush1.bf16.msra.mxu0 %v2275
        %2306 = vmatprep.subr.bf16.mxu0 0
        %2307 = vmatpush1.bf16.msra.mxu0 %v2273
        %2308 = vmatprep.subr.bf16.mxu0 0
        %2309 = vmatpush1.bf16.msra.mxu0 %v2271
        %2310 = vmatprep.subr.bf16.mxu0 0
        %2311 = vmatpush2.bf16.msra.mxu0 0
        %2312 = vmatprep.subr.bf16.mxu0 0
        %2313 = vmatpush2.bf16.msra.mxu0 0
        %2314 = vmatprep.subr.bf16.mxu0 0
        %2315 = vmatpush2.bf16.msra.mxu0 0
        %2316 = vmatprep.subr.bf16.mxu0 0
        %2317 = vmatpush2.bf16.msra.mxu0 0
        %2318 = vmatprep.subr.bf16.mxu0 0
        %2319 = vmatpush2.bf16.msra.mxu0 0
        %2320 = vmatprep.subr.bf16.mxu0 0
        %2321 = vmatpush2.bf16.msra.mxu0 0
        %2322 = vmatprep.subr.bf16.mxu0 0
        %2323 = vmatpush2.bf16.msra.mxu0 0
        %2324 = vmatprep.subr.bf16.mxu0 0
        %2325 = vmatpush2.bf16.msra.mxu0 0
        %2326 = vmatprep.mubr.bf16.mxu0 0
        %2327 = vmatmul.mubr.bf16.gmra.mxu0 %v2283
        %v2328 = vpop.f32.mrf.mxu0
        %v2329 = vadd.f32 0.0, %v2328
        %v2330 = vpop.f32.mrf.mxu0
        %v2331 = vpop.f32.mrf.mxu0
        %v2332 = vadd.f32 0.0, %v2331
        %v2333 = vpop.f32.mrf.mxu0
        %2334 = vmatprep.mubr.bf16.mxu0 0
        %2335 = vmatmul.mubr.bf16.gmra.mxu0 %v2286
        %v2336 = vpop.f32.mrf.mxu0
        %v2337 = vadd.f32 0.0, %v2336
        %v2338 = vpop.f32.mrf.mxu0
        %v2339 = vpop.f32.mrf.mxu0
        %v2340 = vadd.f32 0.0, %v2339
        %v2341 = vpop.f32.mrf.mxu0
        %2342 = vmatprep.mubr.bf16.mxu0 0
        %2343 = vmatmul.mubr.bf16.gmra.mxu0 %v2289
        %v2344 = vpop.f32.mrf.mxu0
        %v2345 = vadd.f32 0.0, %v2344
        %v2346 = vpop.f32.mrf.mxu0
        %v2347 = vpop.f32.mrf.mxu0
        %v2348 = vadd.f32 0.0, %v2347
        %v2349 = vpop.f32.mrf.mxu0
        %2350 = vmatprep.mubr.bf16.mxu0 0
        %2351 = vmatmul.mubr.bf16.gmra.mxu0 %v2292
        %v2352 = vpop.f32.mrf.mxu0
        %v2353 = vadd.f32 0.0, %v2352
        %v2354 = vpop.f32.mrf.mxu0
        %v2355 = vpop.f32.mrf.mxu0
        %v2356 = vadd.f32 0.0, %v2355
        %v2357 = vpop.f32.mrf.mxu0
        %2358 = vdwg.mxu0
        %v2359 = vmul.f32 %v2329, %v2254
        %v2360 = vmul.f32 %v2332, %v2255
        %v2361 = vmul.f32 %v2337, %v2256
        %v2362 = vmul.f32 %v2340, %v2257
        %v2363 = vmul.f32 %v2345, %v2258
        %v2364 = vmul.f32 %v2348, %v2259
        %v2365 = vmul.f32 %v2353, %v2260
        %v2366 = vmul.f32 %v2356, %v2261
        %v2367 = vadd.f32 %v2074, %v2359
        %v2368 = vadd.f32 %v2075, %v2360
        %v2369 = vadd.f32 %v2076, %v2361
        %v2370 = vadd.f32 %v2077, %v2362
        %v2371 = vadd.f32 %v2078, %v2363
        %v2372 = vadd.f32 %v2079, %v2364
        %v2373 = vadd.f32 %v2080, %v2365
        %v2374 = vadd.f32 %v2081, %v2366
        %vm2375 = vcmp.ge.s32.totalorder %v1763, 16
        %vm2376 = vcmp.lt.s32.totalorder %v1763, 24
        %vm2377 = vmand %vm2375, %vm2376
        %v2378 = vsel %vm2377, 1, 0
        %vm2379 = vcmp.eq.s32.totalorder %v2378, 1
        %vm2380 = vmpackc.low %vm2379, %vm2379
        %v2381 = vsel %vm2380, 65537, 0
        %v2382 = vlaneseq
        %v2383 = vshrl.u32 %v2382, 7
        %v2384 = vsub.s32 0, %v2383
        %v2385 = vrot.slane %v2381, %v2384
        %vm2386 = vcmp.ne.s16.totalorder %v2385, 0
        %v2387 = vsel %vm2386, %v1754, 0
        %v2388 = vsel %vm2386, %v1755, 0
        %v2389 = vsel %vm2386, %v1756, 0
        %v2390 = vsel %vm2386, %v1757, 0
        %2391 = vrot.lane.b32.xlu0 %v2385, 64
        %v2392 = vpop.permute.xlu0 %2391
        %vm2393 = vcmp.ne.s16.totalorder %v2392, 0
        %v2394 = vsel %vm2393, %v1758, 0
        %v2395 = vsel %vm2393, %v1759, 0
        %v2396 = vsel %vm2393, %v1760, 0
        %v2397 = vsel %vm2393, %v1761, 0
        %v2399 = vsel %vm1366, %v2387, 0
        %v2402 = vsel %vm1366, %v2388, 0
        %v2405 = vsel %vm1366, %v2389, 0
        %v2408 = vsel %vm1366, %v2390, 0
        %2410 = vmatprep.subr.bf16.mxu0 0
        %2411 = vmatpush1.bf16.xpose.msra.mxu0 0
        %2412 = vmatprep.subr.bf16.mxu0 0
        %2413 = vmatpush1.bf16.xpose.msra.mxu0 0
        %2414 = vmatprep.subr.bf16.mxu0 0
        %2415 = vmatpush1.bf16.xpose.msra.mxu0 0
        %2416 = vmatprep.subr.bf16.mxu0 0
        %2417 = vmatpush1.bf16.xpose.msra.mxu0 0
        %2418 = vmatprep.subr.bf16.mxu0 0
        %2419 = vmatpush1.bf16.xpose.msra.mxu0 %v1821
        %2420 = vmatprep.subr.bf16.mxu0 0
        %2421 = vmatpush1.bf16.xpose.msra.mxu0 %v1818
        %2422 = vmatprep.subr.bf16.mxu0 0
        %2423 = vmatpush1.bf16.xpose.msra.mxu0 %v1815
        %2424 = vmatprep.subr.bf16.mxu0 0
        %2425 = vmatpush1.bf16.xpose.msra.mxu0 %v1812
        %2426 = vmatprep.subr.bf16.mxu0 0
        %2427 = vmatpush2.bf16.xpose.msra.mxu0 0
        %2428 = vmatprep.subr.bf16.mxu0 0
        %2429 = vmatpush2.bf16.xpose.msra.mxu0 0
        %2430 = vmatprep.subr.bf16.mxu0 0
        %2431 = vmatpush2.bf16.xpose.msra.mxu0 0
        %2432 = vmatprep.subr.bf16.mxu0 0
        %2433 = vmatpush2.bf16.xpose.msra.mxu0 0
        %2434 = vmatprep.subr.bf16.mxu0 0
        %2435 = vmatpush2.bf16.xpose.msra.mxu0 0
        %2436 = vmatprep.subr.bf16.mxu0 0
        %2437 = vmatpush2.bf16.xpose.msra.mxu0 0
        %2438 = vmatprep.subr.bf16.mxu0 0
        %2439 = vmatpush2.bf16.xpose.msra.mxu0 0
        %2440 = vmatprep.subr.bf16.mxu0 0
        %2441 = vmatpush2.bf16.xpose.msra.mxu0 0
        %2442 = vmatprep.mubr.bf16.mxu0 0
        %2443 = vmatmul.mubr.bf16.gmra.mxu0 %v2399
        %v2444 = vpop.f32.mrf.mxu0
        %v2445 = vadd.f32 0.0, %v2444
        %v2446 = vpop.f32.mrf.mxu0
        %v2447 = vpop.f32.mrf.mxu0
        %v2448 = vadd.f32 0.0, %v2447
        %v2449 = vpop.f32.mrf.mxu0
        %2450 = vmatprep.mubr.bf16.mxu0 0
        %2451 = vmatmul.mubr.bf16.gmra.mxu0 %v2402
        %v2452 = vpop.f32.mrf.mxu0
        %v2453 = vadd.f32 0.0, %v2452
        %v2454 = vpop.f32.mrf.mxu0
        %v2455 = vpop.f32.mrf.mxu0
        %v2456 = vadd.f32 0.0, %v2455
        %v2457 = vpop.f32.mrf.mxu0
        %2458 = vmatprep.mubr.bf16.mxu0 0
        %2459 = vmatmul.mubr.bf16.gmra.mxu0 %v2405
        %v2460 = vpop.f32.mrf.mxu0
        %v2461 = vadd.f32 0.0, %v2460
        %v2462 = vpop.f32.mrf.mxu0
        %v2463 = vpop.f32.mrf.mxu0
        %v2464 = vadd.f32 0.0, %v2463
        %v2465 = vpop.f32.mrf.mxu0
        %2466 = vmatprep.mubr.bf16.mxu0 0
        %2467 = vmatmul.mubr.bf16.gmra.mxu0 %v2408
        %v2468 = vpop.f32.mrf.mxu0
        %v2469 = vadd.f32 0.0, %v2468
        %v2470 = vpop.f32.mrf.mxu0
        %v2471 = vpop.f32.mrf.mxu0
        %v2472 = vadd.f32 0.0, %v2471
        %v2473 = vpop.f32.mrf.mxu0
        %2474 = vdwg.mxu0
        %v2475 = vsel %vm1888, %v2445, -inf
        %2476 = vmax.xlane.f32.xlu0 %v2475
        %v2477 = vpop.xlane.xlu0 %2476
        %v2478 = vsel %vm1888, %v2448, -inf
        %2479 = vmax.xlane.f32.xlu0 %v2478
        %v2480 = vpop.xlane.xlu0 %2479
        %v2481 = vsel %vm1888, %v2453, -inf
        %2482 = vmax.xlane.f32.xlu0 %v2481
        %v2483 = vpop.xlane.xlu0 %2482
        %v2484 = vsel %vm1888, %v2456, -inf
        %2485 = vmax.xlane.f32.xlu0 %v2484
        %v2486 = vpop.xlane.xlu0 %2485
        %v2487 = vsel %vm1888, %v2461, -inf
        %2488 = vmax.xlane.f32.xlu0 %v2487
        %v2489 = vpop.xlane.xlu0 %2488
        %v2490 = vsel %vm1888, %v2464, -inf
        %2491 = vmax.xlane.f32.xlu0 %v2490
        %v2492 = vpop.xlane.xlu0 %2491
        %v2493 = vsel %vm1888, %v2469, -inf
        %2494 = vmax.xlane.f32.xlu0 %v2493
        %v2495 = vpop.xlane.xlu0 %2494
        %v2496 = vsel %vm1888, %v2472, -inf
        %2497 = vmax.xlane.f32.xlu0 %v2496
        %v2498 = vpop.xlane.xlu0 %2497
        %v2499 = vsub.f32 %v2445, %v2477
        %v2500 = vsub.f32 %v2448, %v2480
        %v2501 = vsub.f32 %v2453, %v2483
        %v2502 = vsub.f32 %v2456, %v2486
        %v2503 = vsub.f32 %v2461, %v2489
        %v2504 = vsub.f32 %v2464, %v2492
        %v2505 = vsub.f32 %v2469, %v2495
        %v2506 = vsub.f32 %v2472, %v2498
        %v2507 = vmul.f32 %v2499, 1.442695
        %v2508 = vpow.pop %v2507
        %v2509 = vmul.f32 %v2500, 1.442695
        %v2510 = vpow.pop %v2509
        %v2511 = vmul.f32 %v2501, 1.442695
        %v2512 = vpow.pop %v2511
        %v2513 = vmul.f32 %v2502, 1.442695
        %v2514 = vpow.pop %v2513
        %v2515 = vmul.f32 %v2503, 1.442695
        %v2516 = vpow.pop %v2515
        %v2517 = vmul.f32 %v2504, 1.442695
        %v2518 = vpow.pop %v2517
        %v2519 = vmul.f32 %v2505, 1.442695
        %v2520 = vpow.pop %v2519
        %v2521 = vmul.f32 %v2506, 1.442695
        %v2522 = vpow.pop %v2521
        %v2523 = vsel %vm1888, %v2508, 0.0
        %2524 = vadd.xlane.f32.xlu0 %v2523
        %v2525 = vpop.xlane.xlu0 %2524
        %v2526 = vsel %vm1888, %v2510, 0.0
        %2527 = vadd.xlane.f32.xlu0 %v2526
        %v2528 = vpop.xlane.xlu0 %2527
        %v2529 = vsel %vm1888, %v2512, 0.0
        %2530 = vadd.xlane.f32.xlu0 %v2529
        %v2531 = vpop.xlane.xlu0 %2530
        %v2532 = vsel %vm1888, %v2514, 0.0
        %2533 = vadd.xlane.f32.xlu0 %v2532
        %v2534 = vpop.xlane.xlu0 %2533
        %v2535 = vsel %vm1888, %v2516, 0.0
        %2536 = vadd.xlane.f32.xlu0 %v2535
        %v2537 = vpop.xlane.xlu0 %2536
        %v2538 = vsel %vm1888, %v2518, 0.0
        %2539 = vadd.xlane.f32.xlu0 %v2538
        %v2540 = vpop.xlane.xlu0 %2539
        %v2541 = vsel %vm1888, %v2520, 0.0
        %2542 = vadd.xlane.f32.xlu0 %v2541
        %v2543 = vpop.xlane.xlu0 %2542
        %v2544 = vsel %vm1888, %v2522, 0.0
        %2545 = vadd.xlane.f32.xlu0 %v2544
        %v2546 = vpop.xlane.xlu0 %2545
        %v2547 = vrcp.pop %v2525
        %v2548 = vrcp.pop %v2528
        %v2549 = vrcp.pop %v2531
        %v2550 = vrcp.pop %v2534
        %v2551 = vrcp.pop %v2537
        %v2552 = vrcp.pop %v2540
        %v2553 = vrcp.pop %v2543
        %v2554 = vrcp.pop %v2546
        %v2555 = vpack.c.bf16 %v2510, %v2508
        %v2556 = vpack.c.bf16 %v2514, %v2512
        %v2557 = vpack.c.bf16 %v2518, %v2516
        %v2558 = vpack.c.bf16 %v2522, %v2520
        %2563 = vrot.lane.b32.xlu0 %v2394, 64
        %v2564 = vpop.permute.xlu0 %2563
        %2565 = vrot.lane.b32.xlu0 %v2395, 64
        %v2566 = vpop.permute.xlu0 %2565
        %2567 = vrot.lane.b32.xlu0 %v2396, 64
        %v2568 = vpop.permute.xlu0 %2567
        %2569 = vrot.lane.b32.xlu0 %v2397, 64
        %v2570 = vpop.permute.xlu0 %2569
        %v2576 = vsel %vm1888, %v2555, 0
        %v2579 = vsel %vm1888, %v2556, 0
        %v2582 = vsel %vm1888, %v2557, 0
        %v2585 = vsel %vm1888, %v2558, 0
        %2587 = vmatprep.subr.bf16.mxu0 0
        %2588 = vmatpush1.bf16.msra.mxu0 0
        %2589 = vmatprep.subr.bf16.mxu0 0
        %2590 = vmatpush1.bf16.msra.mxu0 0
        %2591 = vmatprep.subr.bf16.mxu0 0
        %2592 = vmatpush1.bf16.msra.mxu0 0
        %2593 = vmatprep.subr.bf16.mxu0 0
        %2594 = vmatpush1.bf16.msra.mxu0 0
        %2595 = vmatprep.subr.bf16.mxu0 0
        %2596 = vmatpush1.bf16.msra.mxu0 %v2570
        %2597 = vmatprep.subr.bf16.mxu0 0
        %2598 = vmatpush1.bf16.msra.mxu0 %v2568
        %2599 = vmatprep.subr.bf16.mxu0 0
        %2600 = vmatpush1.bf16.msra.mxu0 %v2566
        %2601 = vmatprep.subr.bf16.mxu0 0
        %2602 = vmatpush1.bf16.msra.mxu0 %v2564
        %2603 = vmatprep.subr.bf16.mxu0 0
        %2604 = vmatpush2.bf16.msra.mxu0 0
        %2605 = vmatprep.subr.bf16.mxu0 0
        %2606 = vmatpush2.bf16.msra.mxu0 0
        %2607 = vmatprep.subr.bf16.mxu0 0
        %2608 = vmatpush2.bf16.msra.mxu0 0
        %2609 = vmatprep.subr.bf16.mxu0 0
        %2610 = vmatpush2.bf16.msra.mxu0 0
        %2611 = vmatprep.subr.bf16.mxu0 0
        %2612 = vmatpush2.bf16.msra.mxu0 0
        %2613 = vmatprep.subr.bf16.mxu0 0
        %2614 = vmatpush2.bf16.msra.mxu0 0
        %2615 = vmatprep.subr.bf16.mxu0 0
        %2616 = vmatpush2.bf16.msra.mxu0 0
        %2617 = vmatprep.subr.bf16.mxu0 0
        %2618 = vmatpush2.bf16.msra.mxu0 0
        %2619 = vmatprep.mubr.bf16.mxu0 0
        %2620 = vmatmul.mubr.bf16.gmra.mxu0 %v2576
        %v2621 = vpop.f32.mrf.mxu0
        %v2622 = vadd.f32 0.0, %v2621
        %v2623 = vpop.f32.mrf.mxu0
        %v2624 = vpop.f32.mrf.mxu0
        %v2625 = vadd.f32 0.0, %v2624
        %v2626 = vpop.f32.mrf.mxu0
        %2627 = vmatprep.mubr.bf16.mxu0 0
        %2628 = vmatmul.mubr.bf16.gmra.mxu0 %v2579
        %v2629 = vpop.f32.mrf.mxu0
        %v2630 = vadd.f32 0.0, %v2629
        %v2631 = vpop.f32.mrf.mxu0
        %v2632 = vpop.f32.mrf.mxu0
        %v2633 = vadd.f32 0.0, %v2632
        %v2634 = vpop.f32.mrf.mxu0
        %2635 = vmatprep.mubr.bf16.mxu0 0
        %2636 = vmatmul.mubr.bf16.gmra.mxu0 %v2582
        %v2637 = vpop.f32.mrf.mxu0
        %v2638 = vadd.f32 0.0, %v2637
        %v2639 = vpop.f32.mrf.mxu0
        %v2640 = vpop.f32.mrf.mxu0
        %v2641 = vadd.f32 0.0, %v2640
        %v2642 = vpop.f32.mrf.mxu0
        %2643 = vmatprep.mubr.bf16.mxu0 0
        %2644 = vmatmul.mubr.bf16.gmra.mxu0 %v2585
        %v2645 = vpop.f32.mrf.mxu0
        %v2646 = vadd.f32 0.0, %v2645
        %v2647 = vpop.f32.mrf.mxu0
        %v2648 = vpop.f32.mrf.mxu0
        %v2649 = vadd.f32 0.0, %v2648
        %v2650 = vpop.f32.mrf.mxu0
        %2651 = vdwg.mxu0
        %v2652 = vmul.f32 %v2622, %v2547
        %v2653 = vmul.f32 %v2625, %v2548
        %v2654 = vmul.f32 %v2630, %v2549
        %v2655 = vmul.f32 %v2633, %v2550
        %v2656 = vmul.f32 %v2638, %v2551
        %v2657 = vmul.f32 %v2641, %v2552
        %v2658 = vmul.f32 %v2646, %v2553
        %v2659 = vmul.f32 %v2649, %v2554
        %v2660 = vadd.f32 %v2367, %v2652
        %v2661 = vadd.f32 %v2368, %v2653
        %v2662 = vadd.f32 %v2369, %v2654
        %v2663 = vadd.f32 %v2370, %v2655
        %v2664 = vadd.f32 %v2371, %v2656
        %v2665 = vadd.f32 %v2372, %v2657
        %v2666 = vadd.f32 %v2373, %v2658
        %v2667 = vadd.f32 %v2374, %v2659
        %vm2668 = vcmp.ge.s32.totalorder %v1763, 24
        %vm2669 = vcmp.lt.s32.totalorder %v1763, 32
        %vm2670 = vmand %vm2668, %vm2669
        %v2671 = vsel %vm2670, 1, 0
        %vm2672 = vcmp.eq.s32.totalorder %v2671, 1
        %vm2673 = vmpackc.low %vm2672, %vm2672
        %v2674 = vsel %vm2673, 65537, 0
        %v2675 = vlaneseq
        %v2676 = vshrl.u32 %v2675, 7
        %v2677 = vsub.s32 0, %v2676
        %v2678 = vrot.slane %v2674, %v2677
        %vm2679 = vcmp.ne.s16.totalorder %v2678, 0
        %v2680 = vsel %vm2679, %v1754, 0
        %v2681 = vsel %vm2679, %v1755, 0
        %v2682 = vsel %vm2679, %v1756, 0
        %v2683 = vsel %vm2679, %v1757, 0
        %2684 = vrot.lane.b32.xlu0 %v2678, 64
        %v2685 = vpop.permute.xlu0 %2684
        %vm2686 = vcmp.ne.s16.totalorder %v2685, 0
        %v2687 = vsel %vm2686, %v1758, 0
        %v2688 = vsel %vm2686, %v1759, 0
        %v2689 = vsel %vm2686, %v1760, 0
        %v2690 = vsel %vm2686, %v1761, 0
        %v2692 = vsel %vm1366, %v2680, 0
        %v2695 = vsel %vm1366, %v2681, 0
        %v2698 = vsel %vm1366, %v2682, 0
        %v2701 = vsel %vm1366, %v2683, 0
        %2703 = vmatprep.subr.bf16.mxu0 0
        %2704 = vmatpush1.bf16.xpose.msra.mxu0 0
        %2705 = vmatprep.subr.bf16.mxu0 0
        %2706 = vmatpush1.bf16.xpose.msra.mxu0 0
        %2707 = vmatprep.subr.bf16.mxu0 0
        %2708 = vmatpush1.bf16.xpose.msra.mxu0 0
        %2709 = vmatprep.subr.bf16.mxu0 0
        %2710 = vmatpush1.bf16.xpose.msra.mxu0 0
        %2711 = vmatprep.subr.bf16.mxu0 0
        %2712 = vmatpush1.bf16.xpose.msra.mxu0 %v1821
        %2713 = vmatprep.subr.bf16.mxu0 0
        %2714 = vmatpush1.bf16.xpose.msra.mxu0 %v1818
        %2715 = vmatprep.subr.bf16.mxu0 0
        %2716 = vmatpush1.bf16.xpose.msra.mxu0 %v1815
        %2717 = vmatprep.subr.bf16.mxu0 0
        %2718 = vmatpush1.bf16.xpose.msra.mxu0 %v1812
        %2719 = vmatprep.subr.bf16.mxu0 0
        %2720 = vmatpush2.bf16.xpose.msra.mxu0 0
        %2721 = vmatprep.subr.bf16.mxu0 0
        %2722 = vmatpush2.bf16.xpose.msra.mxu0 0
        %2723 = vmatprep.subr.bf16.mxu0 0
        %2724 = vmatpush2.bf16.xpose.msra.mxu0 0
        %2725 = vmatprep.subr.bf16.mxu0 0
        %2726 = vmatpush2.bf16.xpose.msra.mxu0 0
        %2727 = vmatprep.subr.bf16.mxu0 0
        %2728 = vmatpush2.bf16.xpose.msra.mxu0 0
        %2729 = vmatprep.subr.bf16.mxu0 0
        %2730 = vmatpush2.bf16.xpose.msra.mxu0 0
        %2731 = vmatprep.subr.bf16.mxu0 0
        %2732 = vmatpush2.bf16.xpose.msra.mxu0 0
        %2733 = vmatprep.subr.bf16.mxu0 0
        %2734 = vmatpush2.bf16.xpose.msra.mxu0 0
        %2735 = vmatprep.mubr.bf16.mxu0 0
        %2736 = vmatmul.mubr.bf16.gmra.mxu0 %v2692
        %v2737 = vpop.f32.mrf.mxu0
        %v2738 = vadd.f32 0.0, %v2737
        %v2739 = vpop.f32.mrf.mxu0
        %v2740 = vpop.f32.mrf.mxu0
        %v2741 = vadd.f32 0.0, %v2740
        %v2742 = vpop.f32.mrf.mxu0
        %2743 = vmatprep.mubr.bf16.mxu0 0
        %2744 = vmatmul.mubr.bf16.gmra.mxu0 %v2695
        %v2745 = vpop.f32.mrf.mxu0
        %v2746 = vadd.f32 0.0, %v2745
        %v2747 = vpop.f32.mrf.mxu0
        %v2748 = vpop.f32.mrf.mxu0
        %v2749 = vadd.f32 0.0, %v2748
        %v2750 = vpop.f32.mrf.mxu0
        %2751 = vmatprep.mubr.bf16.mxu0 0
        %2752 = vmatmul.mubr.bf16.gmra.mxu0 %v2698
        %v2753 = vpop.f32.mrf.mxu0
        %v2754 = vadd.f32 0.0, %v2753
        %v2755 = vpop.f32.mrf.mxu0
        %v2756 = vpop.f32.mrf.mxu0
        %v2757 = vadd.f32 0.0, %v2756
        %v2758 = vpop.f32.mrf.mxu0
        %2759 = vmatprep.mubr.bf16.mxu0 0
        %2760 = vmatmul.mubr.bf16.gmra.mxu0 %v2701
        %v2761 = vpop.f32.mrf.mxu0
        %v2762 = vadd.f32 0.0, %v2761
        %v2763 = vpop.f32.mrf.mxu0
        %v2764 = vpop.f32.mrf.mxu0
        %v2765 = vadd.f32 0.0, %v2764
        %v2766 = vpop.f32.mrf.mxu0
        %2767 = vdwg.mxu0
        %v2768 = vsel %vm1888, %v2738, -inf
        %2769 = vmax.xlane.f32.xlu0 %v2768
        %v2770 = vpop.xlane.xlu0 %2769
        %v2771 = vsel %vm1888, %v2741, -inf
        %2772 = vmax.xlane.f32.xlu0 %v2771
        %v2773 = vpop.xlane.xlu0 %2772
        %v2774 = vsel %vm1888, %v2746, -inf
        %2775 = vmax.xlane.f32.xlu0 %v2774
        %v2776 = vpop.xlane.xlu0 %2775
        %v2777 = vsel %vm1888, %v2749, -inf
        %2778 = vmax.xlane.f32.xlu0 %v2777
        %v2779 = vpop.xlane.xlu0 %2778
        %v2780 = vsel %vm1888, %v2754, -inf
        %2781 = vmax.xlane.f32.xlu0 %v2780
        %v2782 = vpop.xlane.xlu0 %2781
        %v2783 = vsel %vm1888, %v2757, -inf
        %2784 = vmax.xlane.f32.xlu0 %v2783
        %v2785 = vpop.xlane.xlu0 %2784
        %v2786 = vsel %vm1888, %v2762, -inf
        %2787 = vmax.xlane.f32.xlu0 %v2786
        %v2788 = vpop.xlane.xlu0 %2787
        %v2789 = vsel %vm1888, %v2765, -inf
        %2790 = vmax.xlane.f32.xlu0 %v2789
        %v2791 = vpop.xlane.xlu0 %2790
        %v2792 = vsub.f32 %v2738, %v2770
        %v2793 = vsub.f32 %v2741, %v2773
        %v2794 = vsub.f32 %v2746, %v2776
        %v2795 = vsub.f32 %v2749, %v2779
        %v2796 = vsub.f32 %v2754, %v2782
        %v2797 = vsub.f32 %v2757, %v2785
        %v2798 = vsub.f32 %v2762, %v2788
        %v2799 = vsub.f32 %v2765, %v2791
        %v2800 = vmul.f32 %v2792, 1.442695
        %v2801 = vpow.pop %v2800
        %v2802 = vmul.f32 %v2793, 1.442695
        %v2803 = vpow.pop %v2802
        %v2804 = vmul.f32 %v2794, 1.442695
        %v2805 = vpow.pop %v2804
        %v2806 = vmul.f32 %v2795, 1.442695
        %v2807 = vpow.pop %v2806
        %v2808 = vmul.f32 %v2796, 1.442695
        %v2809 = vpow.pop %v2808
        %v2810 = vmul.f32 %v2797, 1.442695
        %v2811 = vpow.pop %v2810
        %v2812 = vmul.f32 %v2798, 1.442695
        %v2813 = vpow.pop %v2812
        %v2814 = vmul.f32 %v2799, 1.442695
        %v2815 = vpow.pop %v2814
        %v2816 = vsel %vm1888, %v2801, 0.0
        %2817 = vadd.xlane.f32.xlu0 %v2816
        %v2818 = vpop.xlane.xlu0 %2817
        %v2819 = vsel %vm1888, %v2803, 0.0
        %2820 = vadd.xlane.f32.xlu0 %v2819
        %v2821 = vpop.xlane.xlu0 %2820
        %v2822 = vsel %vm1888, %v2805, 0.0
        %2823 = vadd.xlane.f32.xlu0 %v2822
        %v2824 = vpop.xlane.xlu0 %2823
        %v2825 = vsel %vm1888, %v2807, 0.0
        %2826 = vadd.xlane.f32.xlu0 %v2825
        %v2827 = vpop.xlane.xlu0 %2826
        %v2828 = vsel %vm1888, %v2809, 0.0
        %2829 = vadd.xlane.f32.xlu0 %v2828
        %v2830 = vpop.xlane.xlu0 %2829
        %v2831 = vsel %vm1888, %v2811, 0.0
        %2832 = vadd.xlane.f32.xlu0 %v2831
        %v2833 = vpop.xlane.xlu0 %2832
        %v2834 = vsel %vm1888, %v2813, 0.0
        %2835 = vadd.xlane.f32.xlu0 %v2834
        %v2836 = vpop.xlane.xlu0 %2835
        %v2837 = vsel %vm1888, %v2815, 0.0
        %2838 = vadd.xlane.f32.xlu0 %v2837
        %v2839 = vpop.xlane.xlu0 %2838
        %v2840 = vrcp.pop %v2818
        %v2841 = vrcp.pop %v2821
        %v2842 = vrcp.pop %v2824
        %v2843 = vrcp.pop %v2827
        %v2844 = vrcp.pop %v2830
        %v2845 = vrcp.pop %v2833
        %v2846 = vrcp.pop %v2836
        %v2847 = vrcp.pop %v2839
        %v2848 = vpack.c.bf16 %v2803, %v2801
        %v2849 = vpack.c.bf16 %v2807, %v2805
        %v2850 = vpack.c.bf16 %v2811, %v2809
        %v2851 = vpack.c.bf16 %v2815, %v2813
        %2856 = vrot.lane.b32.xlu0 %v2687, 64
        %v2857 = vpop.permute.xlu0 %2856
        %2858 = vrot.lane.b32.xlu0 %v2688, 64
        %v2859 = vpop.permute.xlu0 %2858
        %2860 = vrot.lane.b32.xlu0 %v2689, 64
        %v2861 = vpop.permute.xlu0 %2860
        %2862 = vrot.lane.b32.xlu0 %v2690, 64
        %v2863 = vpop.permute.xlu0 %2862
        %v2869 = vsel %vm1888, %v2848, 0
        %v2872 = vsel %vm1888, %v2849, 0
        %v2875 = vsel %vm1888, %v2850, 0
        %v2878 = vsel %vm1888, %v2851, 0
        %2880 = vmatprep.subr.bf16.mxu0 0
        %2881 = vmatpush1.bf16.msra.mxu0 0
        %2882 = vmatprep.subr.bf16.mxu0 0
        %2883 = vmatpush1.bf16.msra.mxu0 0
        %2884 = vmatprep.subr.bf16.mxu0 0
        %2885 = vmatpush1.bf16.msra.mxu0 0
        %2886 = vmatprep.subr.bf16.mxu0 0
        %2887 = vmatpush1.bf16.msra.mxu0 0
        %2888 = vmatprep.subr.bf16.mxu0 0
        %2889 = vmatpush1.bf16.msra.mxu0 %v2863
        %2890 = vmatprep.subr.bf16.mxu0 0
        %2891 = vmatpush1.bf16.msra.mxu0 %v2861
        %2892 = vmatprep.subr.bf16.mxu0 0
        %2893 = vmatpush1.bf16.msra.mxu0 %v2859
        %2894 = vmatprep.subr.bf16.mxu0 0
        %2895 = vmatpush1.bf16.msra.mxu0 %v2857
        %2896 = vmatprep.subr.bf16.mxu0 0
        %2897 = vmatpush2.bf16.msra.mxu0 0
        %2898 = vmatprep.subr.bf16.mxu0 0
        %2899 = vmatpush2.bf16.msra.mxu0 0
        %2900 = vmatprep.subr.bf16.mxu0 0
        %2901 = vmatpush2.bf16.msra.mxu0 0
        %2902 = vmatprep.subr.bf16.mxu0 0
        %2903 = vmatpush2.bf16.msra.mxu0 0
        %2904 = vmatprep.subr.bf16.mxu0 0
        %2905 = vmatpush2.bf16.msra.mxu0 0
        %2906 = vmatprep.subr.bf16.mxu0 0
        %2907 = vmatpush2.bf16.msra.mxu0 0
        %2908 = vmatprep.subr.bf16.mxu0 0
        %2909 = vmatpush2.bf16.msra.mxu0 0
        %2910 = vmatprep.subr.bf16.mxu0 0
        %2911 = vmatpush2.bf16.msra.mxu0 0
        %2912 = vmatprep.mubr.bf16.mxu0 0
        %2913 = vmatmul.mubr.bf16.gmra.mxu0 %v2869
        %v2914 = vpop.f32.mrf.mxu0
        %v2915 = vadd.f32 0.0, %v2914
        %v2916 = vpop.f32.mrf.mxu0
        %v2917 = vpop.f32.mrf.mxu0
        %v2918 = vadd.f32 0.0, %v2917
        %v2919 = vpop.f32.mrf.mxu0
        %2920 = vmatprep.mubr.bf16.mxu0 0
        %2921 = vmatmul.mubr.bf16.gmra.mxu0 %v2872
        %v2922 = vpop.f32.mrf.mxu0
        %v2923 = vadd.f32 0.0, %v2922
        %v2924 = vpop.f32.mrf.mxu0
        %v2925 = vpop.f32.mrf.mxu0
        %v2926 = vadd.f32 0.0, %v2925
        %v2927 = vpop.f32.mrf.mxu0
        %2928 = vmatprep.mubr.bf16.mxu0 0
        %2929 = vmatmul.mubr.bf16.gmra.mxu0 %v2875
        %v2930 = vpop.f32.mrf.mxu0
        %v2931 = vadd.f32 0.0, %v2930
        %v2932 = vpop.f32.mrf.mxu0
        %v2933 = vpop.f32.mrf.mxu0
        %v2934 = vadd.f32 0.0, %v2933
        %v2935 = vpop.f32.mrf.mxu0
        %2936 = vmatprep.mubr.bf16.mxu0 0
        %2937 = vmatmul.mubr.bf16.gmra.mxu0 %v2878
        %v2938 = vpop.f32.mrf.mxu0
        %v2939 = vadd.f32 0.0, %v2938
        %v2940 = vpop.f32.mrf.mxu0
        %v2941 = vpop.f32.mrf.mxu0
        %v2942 = vadd.f32 0.0, %v2941
        %v2943 = vpop.f32.mrf.mxu0
        %2944 = vdwg.mxu0
        %v2945 = vmul.f32 %v2915, %v2840
        %v2946 = vmul.f32 %v2918, %v2841
        %v2947 = vmul.f32 %v2923, %v2842
        %v2948 = vmul.f32 %v2926, %v2843
        %v2949 = vmul.f32 %v2931, %v2844
        %v2950 = vmul.f32 %v2934, %v2845
        %v2951 = vmul.f32 %v2939, %v2846
        %v2952 = vmul.f32 %v2942, %v2847
        %v2953 = vadd.f32 %v2660, %v2945
        %v2954 = vadd.f32 %v2661, %v2946
        %v2955 = vadd.f32 %v2662, %v2947
        %v2956 = vadd.f32 %v2663, %v2948
        %v2957 = vadd.f32 %v2664, %v2949
        %v2958 = vadd.f32 %v2665, %v2950
        %v2959 = vadd.f32 %v2666, %v2951
        %v2960 = vadd.f32 %v2667, %v2952
        %v2961 = vpack.c.bf16 %v2954, %v2953
        %v2962 = vpack.c.bf16 %v2956, %v2955
        %v2963 = vpack.c.bf16 %v2958, %v2957
        %v2964 = vpack.c.bf16 %v2960, %v2959
        %v2965 = vld [vmem:[%s9] sm:$0xf]
        %v2966 = vld [vmem:[%s9 + $0x4] sm:$0xf]
        %v2967 = vld [vmem:[%s9 + $0x8] sm:$0xf]
        %v2968 = vld [vmem:[%s9 + $0xc] sm:$0xf]
        %v2973 = vunpack.c.l.b16 %v2965
        %v2974 = vunpack.c.l.b16 %v2966
        %v2975 = vunpack.c.l.b16 %v2967
        %v2976 = vunpack.c.l.b16 %v2968
        %v2977 = vpack.c.b16 %v2974, %v2973
        %v2978 = vpack.c.b16 %v2976, %v2975
        %v2982 = vsel %vm1366, %v2961, 0
        %v2985 = vsel %vm1366, %v2962, 0
        %v2988 = vsel %vm1366, %v2963, 0
        %v2991 = vsel %vm1366, %v2964, 0
        %2993 = vmatprep.subr.bf16.mxu0 0
        %2994 = vmatpush1.bf16.msra.mxu0 0
        %2995 = vmatprep.subr.bf16.mxu0 0
        %2996 = vmatpush1.bf16.msra.mxu0 0
        %2997 = vmatprep.subr.bf16.mxu0 0
        %2998 = vmatpush1.bf16.msra.mxu0 0
        %2999 = vmatprep.subr.bf16.mxu0 0
        %3000 = vmatpush1.bf16.msra.mxu0 0
        %3001 = vmatprep.subr.bf16.mxu0 0
        %3002 = vmatpush1.bf16.msra.mxu0 0
        %3003 = vmatprep.subr.bf16.mxu0 0
        %3004 = vmatpush1.bf16.msra.mxu0 0
        %3005 = vmatprep.subr.bf16.mxu0 0
        %3006 = vmatpush1.bf16.msra.mxu0 %v2978
        %3007 = vmatprep.subr.bf16.mxu0 0
        %3008 = vmatpush1.bf16.msra.mxu0 %v2977
        %3009 = vmatprep.subr.bf16.mxu0 0
        %3010 = vmatpush2.bf16.msra.mxu0 0
        %3011 = vmatprep.subr.bf16.mxu0 0
        %3012 = vmatpush2.bf16.msra.mxu0 0
        %3013 = vmatprep.subr.bf16.mxu0 0
        %3014 = vmatpush2.bf16.msra.mxu0 0
        %3015 = vmatprep.subr.bf16.mxu0 0
        %3016 = vmatpush2.bf16.msra.mxu0 0
        %3017 = vmatprep.subr.bf16.mxu0 0
        %3018 = vmatpush2.bf16.msra.mxu0 0
        %3019 = vmatprep.subr.bf16.mxu0 0
        %3020 = vmatpush2.bf16.msra.mxu0 0
        %3021 = vmatprep.subr.bf16.mxu0 0
        %3022 = vmatpush2.bf16.msra.mxu0 0
        %3023 = vmatprep.subr.bf16.mxu0 0
        %3024 = vmatpush2.bf16.msra.mxu0 0
        %3025 = vmatprep.mubr.bf16.mxu0 0
        %3026 = vmatmul.mubr.bf16.gmra.mxu0 %v2982
        %v3027 = vpop.f32.mrf.mxu0
        %v3028 = vadd.f32 0.0, %v3027
        %v3029 = vpop.f32.mrf.mxu0
        %v3030 = vpop.f32.mrf.mxu0
        %v3031 = vadd.f32 0.0, %v3030
        %v3032 = vpop.f32.mrf.mxu0
        %3033 = vmatprep.mubr.bf16.mxu0 0
        %3034 = vmatmul.mubr.bf16.gmra.mxu0 %v2985
        %v3035 = vpop.f32.mrf.mxu0
        %v3036 = vadd.f32 0.0, %v3035
        %v3037 = vpop.f32.mrf.mxu0
        %v3038 = vpop.f32.mrf.mxu0
        %v3039 = vadd.f32 0.0, %v3038
        %v3040 = vpop.f32.mrf.mxu0
        %3041 = vmatprep.mubr.bf16.mxu0 0
        %3042 = vmatmul.mubr.bf16.gmra.mxu0 %v2988
        %v3043 = vpop.f32.mrf.mxu0
        %v3044 = vadd.f32 0.0, %v3043
        %v3045 = vpop.f32.mrf.mxu0
        %v3046 = vpop.f32.mrf.mxu0
        %v3047 = vadd.f32 0.0, %v3046
        %v3048 = vpop.f32.mrf.mxu0
        %3049 = vmatprep.mubr.bf16.mxu0 0
        %3050 = vmatmul.mubr.bf16.gmra.mxu0 %v2991
        %v3051 = vpop.f32.mrf.mxu0
        %v3052 = vadd.f32 0.0, %v3051
        %v3053 = vpop.f32.mrf.mxu0
        %v3054 = vpop.f32.mrf.mxu0
        %v3055 = vadd.f32 0.0, %v3054
        %v3056 = vpop.f32.mrf.mxu0
        %3057 = vdwg.mxu0
        %v3058 = vadd.f32 %v1500, %v3028
        %v3059 = vadd.f32 %v1501, %v3031
        %v3060 = vadd.f32 %v1502, %v3036
        %v3061 = vadd.f32 %v1503, %v3039
        %v3062 = vadd.f32 %v1504, %v3044
        %v3063 = vadd.f32 %v1505, %v3047
        %v3064 = vadd.f32 %v1506, %v3052
        %v3065 = vadd.f32 %v1507, %v3055
        %v3066 = vld [vmem:[%s10] sm:$0x1]
        %v3068 = vlaneseq
        %v3069 = vshrl.u32 %v3068, 7
        %v3070 = vsub.s32 0, %v3069
        %v3071 = vrot.slane %v3066, %v3070
        %v3073 = vadd.f32 %v3058, %v3071
        %v3074 = vadd.f32 %v3059, %v3071
        %v3075 = vadd.f32 %v3060, %v3071
        %v3076 = vadd.f32 %v3061, %v3071
        %v3077 = vadd.f32 %v3062, %v3071
        %v3078 = vadd.f32 %v3063, %v3071
        %v3079 = vadd.f32 %v3064, %v3071
        %v3080 = vadd.f32 %v3065, %v3071
        %v3081 = vld [vmem:[%s11] sm:$0x1]
        %v3082 = vld [vmem:[%s12] sm:$0x1]
        %v3083 = vsel %vm1366, %v3073, 0.0
        %3084 = vadd.xlane.f32.xlu0 %v3083
        %v3085 = vpop.xlane.xlu0 %3084
        %v3086 = vsel %vm1366, %v3074, 0.0
        %3087 = vadd.xlane.f32.xlu0 %v3086
        %v3088 = vpop.xlane.xlu0 %3087
        %v3089 = vsel %vm1366, %v3075, 0.0
        %3090 = vadd.xlane.f32.xlu0 %v3089
        %v3091 = vpop.xlane.xlu0 %3090
        %v3092 = vsel %vm1366, %v3076, 0.0
        %3093 = vadd.xlane.f32.xlu0 %v3092
        %v3094 = vpop.xlane.xlu0 %3093
        %v3095 = vsel %vm1366, %v3077, 0.0
        %3096 = vadd.xlane.f32.xlu0 %v3095
        %v3097 = vpop.xlane.xlu0 %3096
        %v3098 = vsel %vm1366, %v3078, 0.0
        %3099 = vadd.xlane.f32.xlu0 %v3098
        %v3100 = vpop.xlane.xlu0 %3099
        %v3101 = vsel %vm1366, %v3079, 0.0
        %3102 = vadd.xlane.f32.xlu0 %v3101
        %v3103 = vpop.xlane.xlu0 %3102
        %v3104 = vsel %vm1366, %v3080, 0.0
        %3105 = vadd.xlane.f32.xlu0 %v3104
        %v3106 = vpop.xlane.xlu0 %3105
        %v3107 = vmul.f32 %v3085, %v1391
        %v3108 = vmul.f32 %v3088, %v1391
        %v3109 = vmul.f32 %v3091, %v1391
        %v3110 = vmul.f32 %v3094, %v1391
        %v3111 = vmul.f32 %v3097, %v1391
        %v3112 = vmul.f32 %v3100, %v1391
        %v3113 = vmul.f32 %v3103, %v1391
        %v3114 = vmul.f32 %v3106, %v1391
        %v3115 = vsub.f32 %v3073, %v3107
        %v3116 = vsub.f32 %v3074, %v3108
        %v3117 = vsub.f32 %v3075, %v3109
        %v3118 = vsub.f32 %v3076, %v3110
        %v3119 = vsub.f32 %v3077, %v3111
        %v3120 = vsub.f32 %v3078, %v3112
        %v3121 = vsub.f32 %v3079, %v3113
        %v3122 = vsub.f32 %v3080, %v3114
        %v3123 = vmul.f32 %v3115, %v3115
        %v3124 = vmul.f32 %v3116, %v3116
        %v3125 = vmul.f32 %v3117, %v3117
        %v3126 = vmul.f32 %v3118, %v3118
        %v3127 = vmul.f32 %v3119, %v3119
        %v3128 = vmul.f32 %v3120, %v3120
        %v3129 = vmul.f32 %v3121, %v3121
        %v3130 = vmul.f32 %v3122, %v3122
        %v3131 = vsel %vm1366, %v3123, 0.0
        %3132 = vadd.xlane.f32.xlu0 %v3131
        %v3133 = vpop.xlane.xlu0 %3132
        %v3134 = vsel %vm1366, %v3124, 0.0
        %3135 = vadd.xlane.f32.xlu0 %v3134
        %v3136 = vpop.xlane.xlu0 %3135
        %v3137 = vsel %vm1366, %v3125, 0.0
        %3138 = vadd.xlane.f32.xlu0 %v3137
        %v3139 = vpop.xlane.xlu0 %3138
        %v3140 = vsel %vm1366, %v3126, 0.0
        %3141 = vadd.xlane.f32.xlu0 %v3140
        %v3142 = vpop.xlane.xlu0 %3141
        %v3143 = vsel %vm1366, %v3127, 0.0
        %3144 = vadd.xlane.f32.xlu0 %v3143
        %v3145 = vpop.xlane.xlu0 %3144
        %v3146 = vsel %vm1366, %v3128, 0.0
        %3147 = vadd.xlane.f32.xlu0 %v3146
        %v3148 = vpop.xlane.xlu0 %3147
        %v3149 = vsel %vm1366, %v3129, 0.0
        %3150 = vadd.xlane.f32.xlu0 %v3149
        %v3151 = vpop.xlane.xlu0 %3150
        %v3152 = vsel %vm1366, %v3130, 0.0
        %3153 = vadd.xlane.f32.xlu0 %v3152
        %v3154 = vpop.xlane.xlu0 %3153
        %v3155 = vmul.f32 %v3133, %v1391
        %v3156 = vmul.f32 %v3136, %v1391
        %v3157 = vmul.f32 %v3139, %v1391
        %v3158 = vmul.f32 %v3142, %v1391
        %v3159 = vmul.f32 %v3145, %v1391
        %v3160 = vmul.f32 %v3148, %v1391
        %v3161 = vmul.f32 %v3151, %v1391
        %v3162 = vmul.f32 %v3154, %v1391
        %v3163 = vadd.f32 %v3155, 1e-05
        %v3164 = vadd.f32 %v3156, 1e-05
        %v3165 = vadd.f32 %v3157, 1e-05
        %v3166 = vadd.f32 %v3158, 1e-05
        %v3167 = vadd.f32 %v3159, 1e-05
        %v3168 = vadd.f32 %v3160, 1e-05
        %v3169 = vadd.f32 %v3161, 1e-05
        %v3170 = vadd.f32 %v3162, 1e-05
        %v3171 = vrsqrt.pop %v3163
        %v3172 = vrsqrt.pop %v3164
        %v3173 = vrsqrt.pop %v3165
        %v3174 = vrsqrt.pop %v3166
        %v3175 = vrsqrt.pop %v3167
        %v3176 = vrsqrt.pop %v3168
        %v3177 = vrsqrt.pop %v3169
        %v3178 = vrsqrt.pop %v3170
        %v3179 = vmul.f32 %v3115, %v3171
        %v3180 = vmul.f32 %v3116, %v3172
        %v3181 = vmul.f32 %v3117, %v3173
        %v3182 = vmul.f32 %v3118, %v3174
        %v3183 = vmul.f32 %v3119, %v3175
        %v3184 = vmul.f32 %v3120, %v3176
        %v3185 = vmul.f32 %v3121, %v3177
        %v3186 = vmul.f32 %v3122, %v3178
        %v3188 = vlaneseq
        %v3189 = vshrl.u32 %v3188, 7
        %v3190 = vsub.s32 0, %v3189
        %v3191 = vrot.slane %v3081, %v3190
        %v3193 = vmul.f32 %v3179, %v3191
        %v3194 = vmul.f32 %v3180, %v3191
        %v3195 = vmul.f32 %v3181, %v3191
        %v3196 = vmul.f32 %v3182, %v3191
        %v3197 = vmul.f32 %v3183, %v3191
        %v3198 = vmul.f32 %v3184, %v3191
        %v3199 = vmul.f32 %v3185, %v3191
        %v3200 = vmul.f32 %v3186, %v3191
        %v3202 = vlaneseq
        %v3203 = vshrl.u32 %v3202, 7
        %v3204 = vsub.s32 0, %v3203
        %v3205 = vrot.slane %v3082, %v3204
        %v3207 = vadd.f32 %v3193, %v3205
        %v3208 = vadd.f32 %v3194, %v3205
        %v3209 = vadd.f32 %v3195, %v3205
        %v3210 = vadd.f32 %v3196, %v3205
        %v3211 = vadd.f32 %v3197, %v3205
        %v3212 = vadd.f32 %v3198, %v3205
        %v3213 = vadd.f32 %v3199, %v3205
        %v3214 = vadd.f32 %v3200, %v3205
        %v3215 = vpack.c.bf16 %v3208, %v3207
        %v3216 = vpack.c.bf16 %v3210, %v3209
        %v3217 = vpack.c.bf16 %v3212, %v3211
        %v3218 = vpack.c.bf16 %v3214, %v3213
        %v3219 = vld [vmem:[%s13] sm:$0xf]
        %v3220 = vld [vmem:[%s13 + $0x4] sm:$0xf]
        %v3221 = vld [vmem:[%s13 + $0x8] sm:$0xf]
        %v3222 = vld [vmem:[%s13 + $0xc] sm:$0xf]
        %v3223 = vld [vmem:[%s14] sm:$0x1]
        %v3225 = vlaneseq
        %v3226 = vshrl.u32 %v3225, 7
        %v3227 = vsub.s32 0, %v3226
        %v3228 = vrot.slane %v3223, %v3227
        %v3234 = vunpack.c.l.b16 %v3219
        %v3235 = vunpack.c.l.b16 %v3220
        %v3236 = vunpack.c.l.b16 %v3221
        %v3237 = vunpack.c.l.b16 %v3222
        %v3238 = vpack.c.b16 %v3235, %v3234
        %v3239 = vpack.c.b16 %v3237, %v3236
        %v3243 = vsel %vm1366, %v3215, 0
        %v3246 = vsel %vm1366, %v3216, 0
        %v3249 = vsel %vm1366, %v3217, 0
        %v3252 = vsel %vm1366, %v3218, 0
        %3254 = vmatprep.subr.bf16.mxu0 0
        %3255 = vmatpush1.bf16.msra.mxu0 0
        %3256 = vmatprep.subr.bf16.mxu0 0
        %3257 = vmatpush1.bf16.msra.mxu0 0
        %3258 = vmatprep.subr.bf16.mxu0 0
        %3259 = vmatpush1.bf16.msra.mxu0 0
        %3260 = vmatprep.subr.bf16.mxu0 0
        %3261 = vmatpush1.bf16.msra.mxu0 0
        %3262 = vmatprep.subr.bf16.mxu0 0
        %3263 = vmatpush1.bf16.msra.mxu0 0
        %3264 = vmatprep.subr.bf16.mxu0 0
        %3265 = vmatpush1.bf16.msra.mxu0 0
        %3266 = vmatprep.subr.bf16.mxu0 0
        %3267 = vmatpush1.bf16.msra.mxu0 %v3239
        %3268 = vmatprep.subr.bf16.mxu0 0
        %3269 = vmatpush1.bf16.msra.mxu0 %v3238
        %3270 = vmatprep.subr.bf16.mxu0 0
        %3271 = vmatpush2.bf16.msra.mxu0 0
        %3272 = vmatprep.subr.bf16.mxu0 0
        %3273 = vmatpush2.bf16.msra.mxu0 0
        %3274 = vmatprep.subr.bf16.mxu0 0
        %3275 = vmatpush2.bf16.msra.mxu0 0
        %3276 = vmatprep.subr.bf16.mxu0 0
        %3277 = vmatpush2.bf16.msra.mxu0 0
        %3278 = vmatprep.subr.bf16.mxu0 0
        %3279 = vmatpush2.bf16.msra.mxu0 0
        %3280 = vmatprep.subr.bf16.mxu0 0
        %3281 = vmatpush2.bf16.msra.mxu0 0
        %3282 = vmatprep.subr.bf16.mxu0 0
        %3283 = vmatpush2.bf16.msra.mxu0 0
        %3284 = vmatprep.subr.bf16.mxu0 0
        %3285 = vmatpush2.bf16.msra.mxu0 0
        %3286 = vmatprep.mubr.bf16.mxu0 0
        %3287 = vmatmul.mubr.bf16.gmra.mxu0 %v3243
        %v3288 = vpop.f32.mrf.mxu0
        %v3289 = vadd.f32 %v3228, %v3288
        %v3290 = vpop.f32.mrf.mxu0
        %v3291 = vpop.f32.mrf.mxu0
        %v3292 = vadd.f32 %v3228, %v3291
        %v3293 = vpop.f32.mrf.mxu0
        %3294 = vmatprep.mubr.bf16.mxu0 0
        %3295 = vmatmul.mubr.bf16.gmra.mxu0 %v3246
        %v3296 = vpop.f32.mrf.mxu0
        %v3297 = vadd.f32 %v3228, %v3296
        %v3298 = vpop.f32.mrf.mxu0
        %v3299 = vpop.f32.mrf.mxu0
        %v3300 = vadd.f32 %v3228, %v3299
        %v3301 = vpop.f32.mrf.mxu0
        %3302 = vmatprep.mubr.bf16.mxu0 0
        %3303 = vmatmul.mubr.bf16.gmra.mxu0 %v3249
        %v3304 = vpop.f32.mrf.mxu0
        %v3305 = vadd.f32 %v3228, %v3304
        %v3306 = vpop.f32.mrf.mxu0
        %v3307 = vpop.f32.mrf.mxu0
        %v3308 = vadd.f32 %v3228, %v3307
        %v3309 = vpop.f32.mrf.mxu0
        %3310 = vmatprep.mubr.bf16.mxu0 0
        %3311 = vmatmul.mubr.bf16.gmra.mxu0 %v3252
        %v3312 = vpop.f32.mrf.mxu0
        %v3313 = vadd.f32 %v3228, %v3312
        %v3314 = vpop.f32.mrf.mxu0
        %v3315 = vpop.f32.mrf.mxu0
        %v3316 = vadd.f32 %v3228, %v3315
        %v3317 = vpop.f32.mrf.mxu0
        %3318 = vdwg.mxu0
        %v3319 = vld [vmem:[%s16] sm:$0x1]
        %v3321 = vlaneseq
        %v3322 = vshrl.u32 %v3321, 7
        %v3323 = vsub.s32 0, %v3322
        %v3324 = vrot.slane %v3319, %v3323
        %v3326 = vadd.f32 %v3324, 0.0
        %v3327 = vrot.slane %v3289, 7
        %v3328 = vrot.slane %v3292, 7
        %v3329 = vrot.slane %v3297, 7
        %v3330 = vrot.slane %v3300, 7
        %v3331 = vrot.slane %v3305, 7
        %v3332 = vrot.slane %v3308, 7
        %v3333 = vrot.slane %v3313, 7
        %v3334 = vrot.slane %v3316, 7
        %v3335 = vsel %vm637, %v3333, %v3334
        %v3336 = vsel %vm637, %v3332, %v3333
        %v3337 = vsel %vm637, %v3331, %v3332
        %v3338 = vsel %vm637, %v3330, %v3331
        %v3339 = vsel %vm637, %v3329, %v3330
        %v3340 = vsel %vm637, %v3328, %v3329
        %v3341 = vsel %vm637, %v3327, %v3328
        %v3342 = vsel %vm637, %v3334, %v3327
        %v3343 = vld [vmem:[%s15] sm:$0x1]
        %v3344 = vlaneseq
        %v3345 = vshrl.u32 %v3344, 7
        %v3346 = vsub.s32 0, %v3345
        %v3347 = vrot.slane %v3343, %v3346
        %v3348 = vmul.f32 %v3335, %v3347
        %v3349 = vmul.f32 %v3342, %v3347
        %v3350 = vmul.f32 %v3341, %v3347
        %v3351 = vmul.f32 %v3340, %v3347
        %v3352 = vmul.f32 %v3339, %v3347
        %v3353 = vmul.f32 %v3338, %v3347
        %v3354 = vmul.f32 %v3337, %v3347
        %v3355 = vmul.f32 %v3336, %v3347
        %v3356 = vmul.f32 %v3348, %v670
        %v3357 = vmul.f32 %v3349, %v675
        %v3358 = vmul.f32 %v3350, %v680
        %v3359 = vmul.f32 %v3351, %v685
        %v3360 = vmul.f32 %v3352, %v690
        %v3361 = vmul.f32 %v3353, %v695
        %v3362 = vmul.f32 %v3354, %v700
        %v3363 = vmul.f32 %v3355, %v705
        %v3364 = vadd.f32 %v3326, %v3356
        %v3365 = vadd.f32 %v3326, %v3357
        %v3366 = vadd.f32 %v3326, %v3358
        %v3367 = vadd.f32 %v3326, %v3359
        %v3368 = vadd.f32 %v3326, %v3360
        %v3369 = vadd.f32 %v3326, %v3361
        %v3370 = vadd.f32 %v3326, %v3362
        %v3371 = vadd.f32 %v3326, %v3363
        %v3372 = vld [vmem:[%s15 + $0x1] sm:$0x1]
        %v3373 = vlaneseq
        %v3374 = vshrl.u32 %v3373, 7
        %v3375 = vsub.s32 0, %v3374
        %v3376 = vrot.slane %v3372, %v3375
        %v3377 = vmul.f32 %v3316, %v3376
        %v3378 = vmul.f32 %v3289, %v3376
        %v3379 = vmul.f32 %v3292, %v3376
        %v3380 = vmul.f32 %v3297, %v3376
        %v3381 = vmul.f32 %v3300, %v3376
        %v3382 = vmul.f32 %v3305, %v3376
        %v3383 = vmul.f32 %v3308, %v3376
        %v3384 = vmul.f32 %v3313, %v3376
        %v3385 = vmul.f32 %v3377, %v748
        %v3386 = vmul.f32 %v3378, %v753
        %v3387 = vmul.f32 %v3379, %v758
        %v3388 = vmul.f32 %v3380, %v763
        %v3389 = vmul.f32 %v3381, %v768
        %v3390 = vmul.f32 %v3382, %v773
        %v3391 = vmul.f32 %v3383, %v778
        %v3392 = vmul.f32 %v3384, %v783
        %v3393 = vadd.f32 %v3364, %v3385
        %v3394 = vadd.f32 %v3365, %v3386
        %v3395 = vadd.f32 %v3366, %v3387
        %v3396 = vadd.f32 %v3367, %v3388
        %v3397 = vadd.f32 %v3368, %v3389
        %v3398 = vadd.f32 %v3369, %v3390
        %v3399 = vadd.f32 %v3370, %v3391
        %v3400 = vadd.f32 %v3371, %v3392
        %v3401 = vrot.slane %v3289, 1
        %v3402 = vrot.slane %v3292, 1
        %v3403 = vrot.slane %v3297, 1
        %v3404 = vrot.slane %v3300, 1
        %v3405 = vrot.slane %v3305, 1
        %v3406 = vrot.slane %v3308, 1
        %v3407 = vrot.slane %v3313, 1
        %v3408 = vrot.slane %v3316, 1
        %v3409 = vsel %vm809, %v3407, %v3408
        %v3410 = vsel %vm809, %v3406, %v3407
        %v3411 = vsel %vm809, %v3405, %v3406
        %v3412 = vsel %vm809, %v3404, %v3405
        %v3413 = vsel %vm809, %v3403, %v3404
        %v3414 = vsel %vm809, %v3402, %v3403
        %v3415 = vsel %vm809, %v3401, %v3402
        %v3416 = vsel %vm809, %v3408, %v3401
        %v3417 = vld [vmem:[%s15 + $0x2] sm:$0x1]
        %v3418 = vlaneseq
        %v3419 = vshrl.u32 %v3418, 7
        %v3420 = vsub.s32 0, %v3419
        %v3421 = vrot.slane %v3417, %v3420
        %v3422 = vmul.f32 %v3416, %v3421
        %v3423 = vmul.f32 %v3415, %v3421
        %v3424 = vmul.f32 %v3414, %v3421
        %v3425 = vmul.f32 %v3413, %v3421
        %v3426 = vmul.f32 %v3412, %v3421
        %v3427 = vmul.f32 %v3411, %v3421
        %v3428 = vmul.f32 %v3410, %v3421
        %v3429 = vmul.f32 %v3409, %v3421
        %v3430 = vmul.f32 %v3422, %v843
        %v3431 = vmul.f32 %v3423, %v848
        %v3432 = vmul.f32 %v3424, %v853
        %v3433 = vmul.f32 %v3425, %v858
        %v3434 = vmul.f32 %v3426, %v863
        %v3435 = vmul.f32 %v3427, %v868
        %v3436 = vmul.f32 %v3428, %v873
        %v3437 = vmul.f32 %v3429, %v878
        %v3438 = vadd.f32 %v3393, %v3430
        %v3439 = vadd.f32 %v3394, %v3431
        %v3440 = vadd.f32 %v3395, %v3432
        %v3441 = vadd.f32 %v3396, %v3433
        %v3442 = vadd.f32 %v3397, %v3434
        %v3443 = vadd.f32 %v3398, %v3435
        %v3444 = vadd.f32 %v3399, %v3436
        %v3445 = vadd.f32 %v3400, %v3437
        %v3446 = vld [vmem:[%s15 + $0x3] sm:$0x1]
        %v3447 = vlaneseq
        %v3448 = vshrl.u32 %v3447, 7
        %v3449 = vsub.s32 0, %v3448
        %v3450 = vrot.slane %v3446, %v3449
        %v3451 = vmul.f32 %v3342, %v3450
        %v3452 = vmul.f32 %v3341, %v3450
        %v3453 = vmul.f32 %v3340, %v3450
        %v3454 = vmul.f32 %v3339, %v3450
        %v3455 = vmul.f32 %v3338, %v3450
        %v3456 = vmul.f32 %v3337, %v3450
        %v3457 = vmul.f32 %v3336, %v3450
        %v3458 = vmul.f32 %v3335, %v3450
        %v3459 = vmul.f32 %v3451, %v921
        %v3460 = vmul.f32 %v3452, %v926
        %v3461 = vmul.f32 %v3453, %v931
        %v3462 = vmul.f32 %v3454, %v936
        %v3463 = vmul.f32 %v3455, %v941
        %v3464 = vmul.f32 %v3456, %v946
        %v3465 = vmul.f32 %v3457, %v951
        %v3466 = vmul.f32 %v3458, %v956
        %v3467 = vadd.f32 %v3438, %v3459
        %v3468 = vadd.f32 %v3439, %v3460
        %v3469 = vadd.f32 %v3440, %v3461
        %v3470 = vadd.f32 %v3441, %v3462
        %v3471 = vadd.f32 %v3442, %v3463
        %v3472 = vadd.f32 %v3443, %v3464
        %v3473 = vadd.f32 %v3444, %v3465
        %v3474 = vadd.f32 %v3445, %v3466
        %v3475 = vld [vmem:[%s15 + $0x4] sm:$0x1]
        %v3476 = vlaneseq
        %v3477 = vshrl.u32 %v3476, 7
        %v3478 = vsub.s32 0, %v3477
        %v3479 = vrot.slane %v3475, %v3478
        %v3480 = vmul.f32 %v3289, %v3479
        %v3481 = vmul.f32 %v3292, %v3479
        %v3482 = vmul.f32 %v3297, %v3479
        %v3483 = vmul.f32 %v3300, %v3479
        %v3484 = vmul.f32 %v3305, %v3479
        %v3485 = vmul.f32 %v3308, %v3479
        %v3486 = vmul.f32 %v3313, %v3479
        %v3487 = vmul.f32 %v3316, %v3479
        %v3488 = vmul.f32 %v3480, %v999
        %v3489 = vmul.f32 %v3481, %v1004
        %v3490 = vmul.f32 %v3482, %v1009
        %v3491 = vmul.f32 %v3483, %v1014
        %v3492 = vmul.f32 %v3484, %v1019
        %v3493 = vmul.f32 %v3485, %v1024
        %v3494 = vmul.f32 %v3486, %v1029
        %v3495 = vmul.f32 %v3487, %v1034
        %v3496 = vadd.f32 %v3467, %v3488
        %v3497 = vadd.f32 %v3468, %v3489
        %v3498 = vadd.f32 %v3469, %v3490
        %v3499 = vadd.f32 %v3470, %v3491
        %v3500 = vadd.f32 %v3471, %v3492
        %v3501 = vadd.f32 %v3472, %v3493
        %v3502 = vadd.f32 %v3473, %v3494
        %v3503 = vadd.f32 %v3474, %v3495
        %v3504 = vld [vmem:[%s15 + $0x5] sm:$0x1]
        %v3505 = vlaneseq
        %v3506 = vshrl.u32 %v3505, 7
        %v3507 = vsub.s32 0, %v3506
        %v3508 = vrot.slane %v3504, %v3507
        %v3509 = vmul.f32 %v3415, %v3508
        %v3510 = vmul.f32 %v3414, %v3508
        %v3511 = vmul.f32 %v3413, %v3508
        %v3512 = vmul.f32 %v3412, %v3508
        %v3513 = vmul.f32 %v3411, %v3508
        %v3514 = vmul.f32 %v3410, %v3508
        %v3515 = vmul.f32 %v3409, %v3508
        %v3516 = vmul.f32 %v3416, %v3508
        %v3517 = vmul.f32 %v3509, %v1077
        %v3518 = vmul.f32 %v3510, %v1082
        %v3519 = vmul.f32 %v3511, %v1087
        %v3520 = vmul.f32 %v3512, %v1092
        %v3521 = vmul.f32 %v3513, %v1097
        %v3522 = vmul.f32 %v3514, %v1102
        %v3523 = vmul.f32 %v3515, %v1107
        %v3524 = vmul.f32 %v3516, %v1112
        %v3525 = vadd.f32 %v3496, %v3517
        %v3526 = vadd.f32 %v3497, %v3518
        %v3527 = vadd.f32 %v3498, %v3519
        %v3528 = vadd.f32 %v3499, %v3520
        %v3529 = vadd.f32 %v3500, %v3521
        %v3530 = vadd.f32 %v3501, %v3522
        %v3531 = vadd.f32 %v3502, %v3523
        %v3532 = vadd.f32 %v3503, %v3524
        %v3533 = vld [vmem:[%s15 + $0x6] sm:$0x1]
        %v3534 = vlaneseq
        %v3535 = vshrl.u32 %v3534, 7
        %v3536 = vsub.s32 0, %v3535
        %v3537 = vrot.slane %v3533, %v3536
        %v3538 = vmul.f32 %v3341, %v3537
        %v3539 = vmul.f32 %v3340, %v3537
        %v3540 = vmul.f32 %v3339, %v3537
        %v3541 = vmul.f32 %v3338, %v3537
        %v3542 = vmul.f32 %v3337, %v3537
        %v3543 = vmul.f32 %v3336, %v3537
        %v3544 = vmul.f32 %v3335, %v3537
        %v3545 = vmul.f32 %v3342, %v3537
        %v3546 = vmul.f32 %v3538, %v1155
        %v3547 = vmul.f32 %v3539, %v1160
        %v3548 = vmul.f32 %v3540, %v1165
        %v3549 = vmul.f32 %v3541, %v1170
        %v3550 = vmul.f32 %v3542, %v1175
        %v3551 = vmul.f32 %v3543, %v1180
        %v3552 = vmul.f32 %v3544, %v1185
        %v3553 = vmul.f32 %v3545, %v1190
        %v3554 = vadd.f32 %v3525, %v3546
        %v3555 = vadd.f32 %v3526, %v3547
        %v3556 = vadd.f32 %v3527, %v3548
        %v3557 = vadd.f32 %v3528, %v3549
        %v3558 = vadd.f32 %v3529, %v3550
        %v3559 = vadd.f32 %v3530, %v3551
        %v3560 = vadd.f32 %v3531, %v3552
        %v3561 = vadd.f32 %v3532, %v3553
        %v3562 = vld [vmem:[%s15 + $0x7] sm:$0x1]
        %v3563 = vlaneseq
        %v3564 = vshrl.u32 %v3563, 7
        %v3565 = vsub.s32 0, %v3564
        %v3566 = vrot.slane %v3562, %v3565
        %v3567 = vmul.f32 %v3292, %v3566
        %v3568 = vmul.f32 %v3297, %v3566
        %v3569 = vmul.f32 %v3300, %v3566
        %v3570 = vmul.f32 %v3305, %v3566
        %v3571 = vmul.f32 %v3308, %v3566
        %v3572 = vmul.f32 %v3313, %v3566
        %v3573 = vmul.f32 %v3316, %v3566
        %v3574 = vmul.f32 %v3289, %v3566
        %v3575 = vmul.f32 %v3567, %v1233
        %v3576 = vmul.f32 %v3568, %v1238
        %v3577 = vmul.f32 %v3569, %v1243
        %v3578 = vmul.f32 %v3570, %v1248
        %v3579 = vmul.f32 %v3571, %v1253
        %v3580 = vmul.f32 %v3572, %v1258
        %v3581 = vmul.f32 %v3573, %v1263
        %v3582 = vmul.f32 %v3574, %v1268
        %v3583 = vadd.f32 %v3554, %v3575
        %v3584 = vadd.f32 %v3555, %v3576
        %v3585 = vadd.f32 %v3556, %v3577
        %v3586 = vadd.f32 %v3557, %v3578
        %v3587 = vadd.f32 %v3558, %v3579
        %v3588 = vadd.f32 %v3559, %v3580
        %v3589 = vadd.f32 %v3560, %v3581
        %v3590 = vadd.f32 %v3561, %v3582
        %v3591 = vld [vmem:[%s15 + $0x8] sm:$0x1]
        %v3592 = vlaneseq
        %v3593 = vshrl.u32 %v3592, 7
        %v3594 = vsub.s32 0, %v3593
        %v3595 = vrot.slane %v3591, %v3594
        %v3596 = vmul.f32 %v3414, %v3595
        %v3597 = vmul.f32 %v3413, %v3595
        %v3598 = vmul.f32 %v3412, %v3595
        %v3599 = vmul.f32 %v3411, %v3595
        %v3600 = vmul.f32 %v3410, %v3595
        %v3601 = vmul.f32 %v3409, %v3595
        %v3602 = vmul.f32 %v3416, %v3595
        %v3603 = vmul.f32 %v3415, %v3595
        %v3604 = vmul.f32 %v3596, %v1311
        %v3605 = vmul.f32 %v3597, %v1316
        %v3606 = vmul.f32 %v3598, %v1321
        %v3607 = vmul.f32 %v3599, %v1326
        %v3608 = vmul.f32 %v3600, %v1331
        %v3609 = vmul.f32 %v3601, %v1336
        %v3610 = vmul.f32 %v3602, %v1341
        %v3611 = vmul.f32 %v3603, %v1346
        %v3612 = vadd.f32 %v3583, %v3604
        %v3613 = vadd.f32 %v3584, %v3605
        %v3614 = vadd.f32 %v3585, %v3606
        %v3615 = vadd.f32 %v3586, %v3607
        %v3616 = vadd.f32 %v3587, %v3608
        %v3617 = vadd.f32 %v3588, %v3609
        %v3618 = vadd.f32 %v3589, %v3610
        %v3619 = vadd.f32 %v3590, %v3611
        %v3620 = vmul.f32 %v3612, 0.5
        %v3621 = vmul.f32 %v3613, 0.5
        %v3622 = vmul.f32 %v3614, 0.5
        %v3623 = vmul.f32 %v3615, 0.5
        %v3624 = vmul.f32 %v3616, 0.5
        %v3625 = vmul.f32 %v3617, 0.5
        %v3626 = vmul.f32 %v3618, 0.5
        %v3627 = vmul.f32 %v3619, 0.5
        %v3628 = vmul.f32 %v3612, 0.70710677
        %v3629 = vmul.f32 %v3613, 0.70710677
        %v3630 = vmul.f32 %v3614, 0.70710677
        %v3631 = vmul.f32 %v3615, 0.70710677
        %v3632 = vmul.f32 %v3616, 0.70710677
        %v3633 = vmul.f32 %v3617, 0.70710677
        %v3634 = vmul.f32 %v3618, 0.70710677
        %v3635 = vmul.f32 %v3619, 0.70710677
        %vm3636 = vcmp.ge.f32.partialorder %v3628, 0.0
        %vm3637 = vcmp.ge.f32.partialorder %v3629, 0.0
        %vm3638 = vcmp.ge.f32.partialorder %v3630, 0.0
        %vm3639 = vcmp.ge.f32.partialorder %v3631, 0.0
        %vm3640 = vcmp.ge.f32.partialorder %v3632, 0.0
        %vm3641 = vcmp.ge.f32.partialorder %v3633, 0.0
        %vm3642 = vcmp.ge.f32.partialorder %v3634, 0.0
        %vm3643 = vcmp.ge.f32.partialorder %v3635, 0.0
        %v3644 = vsel %vm3636, 1.0, -1.0
        %v3645 = vsel %vm3637, 1.0, -1.0
        %v3646 = vsel %vm3638, 1.0, -1.0
        %v3647 = vsel %vm3639, 1.0, -1.0
        %v3648 = vsel %vm3640, 1.0, -1.0
        %v3649 = vsel %vm3641, 1.0, -1.0
        %v3650 = vsel %vm3642, 1.0, -1.0
        %v3651 = vsel %vm3643, 1.0, -1.0
        %v3652 = vand.u32 2147483647, %v3628
        %v3653 = vand.u32 2147483647, %v3629
        %v3654 = vand.u32 2147483647, %v3630
        %v3655 = vand.u32 2147483647, %v3631
        %v3656 = vand.u32 2147483647, %v3632
        %v3657 = vand.u32 2147483647, %v3633
        %v3658 = vand.u32 2147483647, %v3634
        %v3659 = vand.u32 2147483647, %v3635
        %v3660 = vmul.f32 %v3652, 0.3275911
        %v3661 = vmul.f32 %v3653, 0.3275911
        %v3662 = vmul.f32 %v3654, 0.3275911
        %v3663 = vmul.f32 %v3655, 0.3275911
        %v3664 = vmul.f32 %v3656, 0.3275911
        %v3665 = vmul.f32 %v3657, 0.3275911
        %v3666 = vmul.f32 %v3658, 0.3275911
        %v3667 = vmul.f32 %v3659, 0.3275911
        %v3668 = vadd.f32 %v3660, 1.0
        %v3669 = vadd.f32 %v3661, 1.0
        %v3670 = vadd.f32 %v3662, 1.0
        %v3671 = vadd.f32 %v3663, 1.0
        %v3672 = vadd.f32 %v3664, 1.0
        %v3673 = vadd.f32 %v3665, 1.0
        %v3674 = vadd.f32 %v3666, 1.0
        %v3675 = vadd.f32 %v3667, 1.0
        %v3676 = vrcp.pop %v3668
        %v3677 = vmul.f32 1.0, %v3676
        %v3678 = vrcp.pop %v3669
        %v3679 = vmul.f32 1.0, %v3678
        %v3680 = vrcp.pop %v3670
        %v3681 = vmul.f32 1.0, %v3680
        %v3682 = vrcp.pop %v3671
        %v3683 = vmul.f32 1.0, %v3682
        %v3684 = vrcp.pop %v3672
        %v3685 = vmul.f32 1.0, %v3684
        %v3686 = vrcp.pop %v3673
        %v3687 = vmul.f32 1.0, %v3686
        %v3688 = vrcp.pop %v3674
        %v3689 = vmul.f32 1.0, %v3688
        %v3690 = vrcp.pop %v3675
        %v3691 = vmul.f32 1.0, %v3690
        %v3692 = vmul.f32 %v3677, 1.0614054
        %v3693 = vmul.f32 %v3679, 1.0614054
        %v3694 = vmul.f32 %v3681, 1.0614054
        %v3695 = vmul.f32 %v3683, 1.0614054
        %v3696 = vmul.f32 %v3685, 1.0614054
        %v3697 = vmul.f32 %v3687, 1.0614054
        %v3698 = vmul.f32 %v3689, 1.0614054
        %v3699 = vmul.f32 %v3691, 1.0614054
        %v3700 = vadd.f32 %v3692, -1.4531521
        %v3701 = vadd.f32 %v3693, -1.4531521
        %v3702 = vadd.f32 %v3694, -1.4531521
        %v3703 = vadd.f32 %v3695, -1.4531521
        %v3704 = vadd.f32 %v3696, -1.4531521
        %v3705 = vadd.f32 %v3697, -1.4531521
        %v3706 = vadd.f32 %v3698, -1.4531521
        %v3707 = vadd.f32 %v3699, -1.4531521
        %v3708 = vmul.f32 %v3700, %v3677
        %v3709 = vmul.f32 %v3701, %v3679
        %v3710 = vmul.f32 %v3702, %v3681
        %v3711 = vmul.f32 %v3703, %v3683
        %v3712 = vmul.f32 %v3704, %v3685
        %v3713 = vmul.f32 %v3705, %v3687
        %v3714 = vmul.f32 %v3706, %v3689
        %v3715 = vmul.f32 %v3707, %v3691
        %v3716 = vadd.f32 %v3708, 1.4214138
        %v3717 = vadd.f32 %v3709, 1.4214138
        %v3718 = vadd.f32 %v3710, 1.4214138
        %v3719 = vadd.f32 %v3711, 1.4214138
        %v3720 = vadd.f32 %v3712, 1.4214138
        %v3721 = vadd.f32 %v3713, 1.4214138
        %v3722 = vadd.f32 %v3714, 1.4214138
        %v3723 = vadd.f32 %v3715, 1.4214138
        %v3724 = vmul.f32 %v3716, %v3677
        %v3725 = vmul.f32 %v3717, %v3679
        %v3726 = vmul.f32 %v3718, %v3681
        %v3727 = vmul.f32 %v3719, %v3683
        %v3728 = vmul.f32 %v3720, %v3685
        %v3729 = vmul.f32 %v3721, %v3687
        %v3730 = vmul.f32 %v3722, %v3689
        %v3731 = vmul.f32 %v3723, %v3691
        %v3732 = vadd.f32 %v3724, -0.28449672
        %v3733 = vadd.f32 %v3725, -0.28449672
        %v3734 = vadd.f32 %v3726, -0.28449672
        %v3735 = vadd.f32 %v3727, -0.28449672
        %v3736 = vadd.f32 %v3728, -0.28449672
        %v3737 = vadd.f32 %v3729, -0.28449672
        %v3738 = vadd.f32 %v3730, -0.28449672
        %v3739 = vadd.f32 %v3731, -0.28449672
        %v3740 = vmul.f32 %v3732, %v3677
        %v3741 = vmul.f32 %v3733, %v3679
        %v3742 = vmul.f32 %v3734, %v3681
        %v3743 = vmul.f32 %v3735, %v3683
        %v3744 = vmul.f32 %v3736, %v3685
        %v3745 = vmul.f32 %v3737, %v3687
        %v3746 = vmul.f32 %v3738, %v3689
        %v3747 = vmul.f32 %v3739, %v3691
        %v3748 = vadd.f32 %v3740, 0.2548296
        %v3749 = vadd.f32 %v3741, 0.2548296
        %v3750 = vadd.f32 %v3742, 0.2548296
        %v3751 = vadd.f32 %v3743, 0.2548296
        %v3752 = vadd.f32 %v3744, 0.2548296
        %v3753 = vadd.f32 %v3745, 0.2548296
        %v3754 = vadd.f32 %v3746, 0.2548296
        %v3755 = vadd.f32 %v3747, 0.2548296
        %v3756 = vmul.f32 %v3748, %v3677
        %v3757 = vmul.f32 %v3749, %v3679
        %v3758 = vmul.f32 %v3750, %v3681
        %v3759 = vmul.f32 %v3751, %v3683
        %v3760 = vmul.f32 %v3752, %v3685
        %v3761 = vmul.f32 %v3753, %v3687
        %v3762 = vmul.f32 %v3754, %v3689
        %v3763 = vmul.f32 %v3755, %v3691
        %v3764 = vsub.f32 0.0, %v3652
        %v3765 = vsub.f32 0.0, %v3653
        %v3766 = vsub.f32 0.0, %v3654
        %v3767 = vsub.f32 0.0, %v3655
        %v3768 = vsub.f32 0.0, %v3656
        %v3769 = vsub.f32 0.0, %v3657
        %v3770 = vsub.f32 0.0, %v3658
        %v3771 = vsub.f32 0.0, %v3659
        %v3772 = vmul.f32 %v3764, %v3652
        %v3773 = vmul.f32 %v3765, %v3653
        %v3774 = vmul.f32 %v3766, %v3654
        %v3775 = vmul.f32 %v3767, %v3655
        %v3776 = vmul.f32 %v3768, %v3656
        %v3777 = vmul.f32 %v3769, %v3657
        %v3778 = vmul.f32 %v3770, %v3658
        %v3779 = vmul.f32 %v3771, %v3659
        %v3780 = vmul.f32 %v3772, 1.442695
        %v3781 = vpow.pop %v3780
        %v3782 = vmul.f32 %v3773, 1.442695
        %v3783 = vpow.pop %v3782
        %v3784 = vmul.f32 %v3774, 1.442695
        %v3785 = vpow.pop %v3784
        %v3786 = vmul.f32 %v3775, 1.442695
        %v3787 = vpow.pop %v3786
        %v3788 = vmul.f32 %v3776, 1.442695
        %v3789 = vpow.pop %v3788
        %v3790 = vmul.f32 %v3777, 1.442695
        %v3791 = vpow.pop %v3790
        %v3792 = vmul.f32 %v3778, 1.442695
        %v3793 = vpow.pop %v3792
        %v3794 = vmul.f32 %v3779, 1.442695
        %v3795 = vpow.pop %v3794
        %v3796 = vmul.f32 %v3756, %v3781
        %v3797 = vmul.f32 %v3757, %v3783
        %v3798 = vmul.f32 %v3758, %v3785
        %v3799 = vmul.f32 %v3759, %v3787
        %v3800 = vmul.f32 %v3760, %v3789
        %v3801 = vmul.f32 %v3761, %v3791
        %v3802 = vmul.f32 %v3762, %v3793
        %v3803 = vmul.f32 %v3763, %v3795
        %v3804 = vsub.f32 1.0, %v3796
        %v3805 = vsub.f32 1.0, %v3797
        %v3806 = vsub.f32 1.0, %v3798
        %v3807 = vsub.f32 1.0, %v3799
        %v3808 = vsub.f32 1.0, %v3800
        %v3809 = vsub.f32 1.0, %v3801
        %v3810 = vsub.f32 1.0, %v3802
        %v3811 = vsub.f32 1.0, %v3803
        %v3812 = vmul.f32 %v3644, %v3804
        %v3813 = vmul.f32 %v3645, %v3805
        %v3814 = vmul.f32 %v3646, %v3806
        %v3815 = vmul.f32 %v3647, %v3807
        %v3816 = vmul.f32 %v3648, %v3808
        %v3817 = vmul.f32 %v3649, %v3809
        %v3818 = vmul.f32 %v3650, %v3810
        %v3819 = vmul.f32 %v3651, %v3811
        %v3820 = vadd.f32 %v3812, 1.0
        %v3821 = vadd.f32 %v3813, 1.0
        %v3822 = vadd.f32 %v3814, 1.0
        %v3823 = vadd.f32 %v3815, 1.0
        %v3824 = vadd.f32 %v3816, 1.0
        %v3825 = vadd.f32 %v3817, 1.0
        %v3826 = vadd.f32 %v3818, 1.0
        %v3827 = vadd.f32 %v3819, 1.0
        %v3828 = vmul.f32 %v3620, %v3820
        %v3829 = vmul.f32 %v3621, %v3821
        %v3830 = vmul.f32 %v3622, %v3822
        %v3831 = vmul.f32 %v3623, %v3823
        %v3832 = vmul.f32 %v3624, %v3824
        %v3833 = vmul.f32 %v3625, %v3825
        %v3834 = vmul.f32 %v3626, %v3826
        %v3835 = vmul.f32 %v3627, %v3827
        %v3836 = vpack.c.bf16 %v3829, %v3828
        %v3837 = vpack.c.bf16 %v3831, %v3830
        %v3838 = vpack.c.bf16 %v3833, %v3832
        %v3839 = vpack.c.bf16 %v3835, %v3834
        %v3840 = vld [vmem:[%s17] sm:$0xf]
        %v3841 = vld [vmem:[%s17 + $0x4] sm:$0xf]
        %v3842 = vld [vmem:[%s17 + $0x8] sm:$0xf]
        %v3843 = vld [vmem:[%s17 + $0xc] sm:$0xf]
        %v3844 = vld [vmem:[%s17 + $0x10] sm:$0xf]
        %v3845 = vld [vmem:[%s17 + $0x14] sm:$0xf]
        %v3846 = vld [vmem:[%s17 + $0x18] sm:$0xf]
        %v3847 = vld [vmem:[%s17 + $0x1c] sm:$0xf]
        %v3848 = vld [vmem:[%s17 + $0x20] sm:$0xf]
        %v3849 = vld [vmem:[%s17 + $0x24] sm:$0xf]
        %v3850 = vld [vmem:[%s17 + $0x28] sm:$0xf]
        %v3851 = vld [vmem:[%s17 + $0x2c] sm:$0xf]
        %v3852 = vld [vmem:[%s17 + $0x30] sm:$0xf]
        %v3853 = vld [vmem:[%s17 + $0x34] sm:$0xf]
        %v3854 = vld [vmem:[%s17 + $0x38] sm:$0xf]
        %v3855 = vld [vmem:[%s17 + $0x3c] sm:$0xf]
        %v3856 = vld [vmem:[%s18] sm:$0x1]
        %v3858 = vlaneseq
        %v3859 = vshrl.u32 %v3858, 7
        %v3860 = vsub.s32 0, %v3859
        %v3861 = vrot.slane %v3856, %v3860
        %v3879 = vunpack.c.l.b16 %v3840
        %v3880 = vunpack.c.l.b16 %v3841
        %v3881 = vunpack.c.l.b16 %v3842
        %v3882 = vunpack.c.l.b16 %v3843
        %v3883 = vunpack.c.l.b16 %v3844
        %v3884 = vunpack.c.l.b16 %v3845
        %v3885 = vunpack.c.l.b16 %v3846
        %v3886 = vunpack.c.l.b16 %v3847
        %v3887 = vunpack.c.l.b16 %v3848
        %v3888 = vunpack.c.l.b16 %v3849
        %v3889 = vunpack.c.l.b16 %v3850
        %v3890 = vunpack.c.l.b16 %v3851
        %v3891 = vunpack.c.l.b16 %v3852
        %v3892 = vunpack.c.l.b16 %v3853
        %v3893 = vunpack.c.l.b16 %v3854
        %v3894 = vunpack.c.l.b16 %v3855
        %v3895 = vpack.c.b16 %v3880, %v3879
        %v3896 = vpack.c.b16 %v3882, %v3881
        %v3897 = vpack.c.b16 %v3884, %v3883
        %v3898 = vpack.c.b16 %v3886, %v3885
        %v3899 = vpack.c.b16 %v3888, %v3887
        %v3900 = vpack.c.b16 %v3890, %v3889
        %v3901 = vpack.c.b16 %v3892, %v3891
        %v3902 = vpack.c.b16 %v3894, %v3893
        %3911 = vmatprep.subr.bf16.mxu0 0
        %3912 = vmatpush1.bf16.msra.mxu0 %v3902
        %3913 = vmatprep.subr.bf16.mxu0 0
        %3914 = vmatpush1.bf16.msra.mxu0 %v3901
        %3915 = vmatprep.subr.bf16.mxu0 0
        %3916 = vmatpush1.bf16.msra.mxu0 %v3900
        %3917 = vmatprep.subr.bf16.mxu0 0
        %3918 = vmatpush1.bf16.msra.mxu0 %v3899
        %3919 = vmatprep.subr.bf16.mxu0 0
        %3920 = vmatpush1.bf16.msra.mxu0 %v3898
        %3921 = vmatprep.subr.bf16.mxu0 0
        %3922 = vmatpush1.bf16.msra.mxu0 %v3897
        %3923 = vmatprep.subr.bf16.mxu0 0
        %3924 = vmatpush1.bf16.msra.mxu0 %v3896
        %3925 = vmatprep.subr.bf16.mxu0 0
        %3926 = vmatpush1.bf16.msra.mxu0 %v3895
        %3927 = vmatprep.subr.bf16.mxu0 0
        %3928 = vmatpush2.bf16.msra.mxu0 0
        %3929 = vmatprep.subr.bf16.mxu0 0
        %3930 = vmatpush2.bf16.msra.mxu0 0
        %3931 = vmatprep.subr.bf16.mxu0 0
        %3932 = vmatpush2.bf16.msra.mxu0 0
        %3933 = vmatprep.subr.bf16.mxu0 0
        %3934 = vmatpush2.bf16.msra.mxu0 0
        %3935 = vmatprep.subr.bf16.mxu0 0
        %3936 = vmatpush2.bf16.msra.mxu0 0
        %3937 = vmatprep.subr.bf16.mxu0 0
        %3938 = vmatpush2.bf16.msra.mxu0 0
        %3939 = vmatprep.subr.bf16.mxu0 0
        %3940 = vmatpush2.bf16.msra.mxu0 0
        %3941 = vmatprep.subr.bf16.mxu0 0
        %3942 = vmatpush2.bf16.msra.mxu0 0
        %3943 = vmatprep.mubr.bf16.mxu0 0
        %3944 = vmatmul.mubr.bf16.gmra.mxu0 %v3836
        %v3945 = vpop.f32.mrf.mxu0
        %v3946 = vadd.f32 %v3861, %v3945
        %v3947 = vpop.f32.mrf.mxu0
        %v3948 = vpop.f32.mrf.mxu0
        %v3949 = vadd.f32 %v3861, %v3948
        %v3950 = vpop.f32.mrf.mxu0
        %3951 = vmatprep.mubr.bf16.mxu0 0
        %3952 = vmatmul.mubr.bf16.gmra.mxu0 %v3837
        %v3953 = vpop.f32.mrf.mxu0
        %v3954 = vadd.f32 %v3861, %v3953
        %v3955 = vpop.f32.mrf.mxu0
        %v3956 = vpop.f32.mrf.mxu0
        %v3957 = vadd.f32 %v3861, %v3956
        %v3958 = vpop.f32.mrf.mxu0
        %3959 = vmatprep.mubr.bf16.mxu0 0
        %3960 = vmatmul.mubr.bf16.gmra.mxu0 %v3838
        %v3961 = vpop.f32.mrf.mxu0
        %v3962 = vadd.f32 %v3861, %v3961
        %v3963 = vpop.f32.mrf.mxu0
        %v3964 = vpop.f32.mrf.mxu0
        %v3965 = vadd.f32 %v3861, %v3964
        %v3966 = vpop.f32.mrf.mxu0
        %3967 = vmatprep.mubr.bf16.mxu0 0
        %3968 = vmatmul.mubr.bf16.gmra.mxu0 %v3839
        %v3969 = vpop.f32.mrf.mxu0
        %v3970 = vadd.f32 %v3861, %v3969
        %v3971 = vpop.f32.mrf.mxu0
        %v3972 = vpop.f32.mrf.mxu0
        %v3973 = vadd.f32 %v3861, %v3972
        %v3974 = vpop.f32.mrf.mxu0
        %3975 = vdwg.mxu0
        %v3976 = vadd.f32 %v3073, %v3946
        %v3977 = vadd.f32 %v3074, %v3949
        %v3978 = vadd.f32 %v3075, %v3954
        %v3979 = vadd.f32 %v3076, %v3957
        %v3980 = vadd.f32 %v3077, %v3962
        %v3981 = vadd.f32 %v3078, %v3965
        %v3982 = vadd.f32 %v3079, %v3970
        %v3983 = vadd.f32 %v3080, %v3973
        %3984 = vst.msk [vmem:[%s610] sm:$0xff] %vm1366, %v3976
        %3985 = vst.msk [vmem:[%s610 + $0x8] sm:$0xff] %vm1366, %v3977
        %3986 = vst.msk [vmem:[%s610 + $0x10] sm:$0xff] %vm1366, %v3978
        %3987 = vst.msk [vmem:[%s610 + $0x18] sm:$0xff] %vm1366, %v3979
        %3988 = vst.msk [vmem:[%s610 + $0x20] sm:$0xff] %vm1366, %v3980
        %3989 = vst.msk [vmem:[%s610 + $0x28] sm:$0xff] %vm1366, %v3981
        %3990 = vst.msk [vmem:[%s610 + $0x30] sm:$0xff] %vm1366, %v3982
        %3991 = vst.msk [vmem:[%s610 + $0x38] sm:$0xff] %vm1366, %v3983
        %s3992 = sand.u32 %s446, 1
        %s3993 = scalar_lea.sflag [#allocation4], %s3992
        %s3994 = sand.u32 %s446, 1
        %s3995 = smul.addr %s3994, 64
        %s3996 = scalar_lea.vmem [#allocation5], %s3995
        // Predicated region
        $region101: #{_lambda_.1} parent=95 // pred_check
          %p3997 = pneg %p456
        $region102: #{_lambda_.1} parent=95 // pred_check_branch
          %3999 = sbr.rel (%p3997) target = $region104
        $region103: #{_lambda_.1} parent=95 // pred_region
          %s4001 = ssub.s32 1024, 1024
          %4002 = vsyncadd %s3993, %s4001
          %s4003 = smul.addr %s34, 8
          %s4004 = smul.addr %s4003, 128
          %s4005 = scalar_lea.hbm %s19, %s4004
          %s4006 = sshll.u32 %s3996, 4
          %s4007 = int_to_ptr.vmem [resolvable:$true] %s4006
          %4012 = dma.vmem_to_hbm [thread:$0]  %s4007, 1024, %s4005, %s3993, 128, 128, 8
        $region104: #{_lambda_.1} parent=95 // pred_fallthru
          _
      $region96: #{_lambda_.1} parent=5 // pred_fallthru
        _
      %p4013 = scmp.le.s32.totalorder 2, %s29
      // Predicated region
      $region105: #{_lambda_.1} parent=5 // pred_check
        %p4014 = pneg %p4013
      $region106: #{_lambda_.1} parent=5 // pred_check_branch
        %4016 = sbr.rel (%p4014) target = $region108
      $region107: #{_lambda_.1} parent=5 // pred_region
        %s4017 = ssub.s32 %s29, 2
        // Predicated region
        $region109: #{_lambda_.1} parent=107 // pred_check
          %p4018 = pneg %p462
        $region110: #{_lambda_.1} parent=107 // pred_check_branch
          %4020 = sbr.rel (%p4018) target = $region112
        $region111: #{_lambda_.1} parent=107 // pred_region
          %s4021 = sand.u32 %s447, 1
          %s4022 = scalar_lea.sflag [#allocation4], %s4021
          %s4023 = sand.u32 %s447, 1
          %s4024 = smul.addr %s4023, 64
          %s4025 = scalar_lea.vmem [#allocation5], %s4024
          %4026 = dma.done %s4022, 1024
        $region112: #{_lambda_.1} parent=107 // pred_fallthru
          _
      $region108: #{_lambda_.1} parent=5 // pred_fallthru
        _
    $region6: #{_lambda_.1} parent=1 // loop_footer
      %s33 = sadd.s32 1, %s29
    $region7: #{_lambda_.1} parent=1 // loop_footer_branch
      %28 = sbr.rel target = $region3
    $region8: #{_lambda_.1} parent=1 // loop_exit
      _
    %4027 = vsyncpa [#allocation3], 1
    %s4028 = scalar_lea.sflag [#allocation3], 1
    %4029 = vsyncpa %s4028, 1
    %4030 = vsyncpa [#allocation4], 1
    %s4031 = scalar_lea.sflag [#allocation4], 1
    %4032 = vsyncpa %s4031, 1

</llo_original>
